<compile_context>
chip_gen: v7x
topology: tpu7x:2x2x1
jax: 0.10.0
libtpu: 0.0.40
codegen_flags: <defaults>
</compile_context>

<pallas_src>
import functools

import jax
import jax.numpy as jnp
from jax.experimental import pallas as pl
from jax.experimental.pallas import tpu as pltpu


# ----------------------------------------------------------------------------
# kernels
# ----------------------------------------------------------------------------
def backbone_kernel(x_ref, w_ref, o_ref):
  """GAP + Linear + ReLU on one batch tile.

  x_ref: [Bt, HW, C] bf16 (channels on lanes), w_ref: [C, D] bf16 (resident),
  o_ref: [Bt, D] f32.
  """
  inv_hw = 1.0 / float(x_ref.shape[1])
  x = x_ref[...].astype(jnp.float32)
  pooled = jnp.sum(x, axis=1) * inv_hw                      # [Bt, C] sublane reduce
  feat = jnp.dot(pooled.astype(jnp.bfloat16), w_ref[...],
                 preferred_element_type=jnp.float32)        # [Bt, D] f32 acc
  o_ref[...] = jnp.maximum(feat, 0.0)                       # ReLU


def loss_kernel(r_ref, wh_ref, bh_ref, labels_ref, loss_ref, acc_ref, *,
                bsz, dim, temperature, n_classes):
  """Fused symmetric InfoNCE (on r[:, :dim]) + online linear-head CE/accuracy.

  r_ref: [2B, D] f32 (rows 0:B = r1, rows B:2B = r2)
  wh_ref: [D, K] bf16, bh_ref: [1, K] f32, labels_ref: [B, 1] int32
  loss_ref / acc_ref: [1, 1] f32
  """
  r = r_ref[...]                                            # [2B, D]
  r1 = r[:bsz]
  r2 = r[bsz:]

  # ---- symmetric InfoNCE on the leading `dim` features (directclr slice) ---
  z1 = r1[:, :dim]
  z2 = r2[:, :dim]
  n1 = z1 * jax.lax.rsqrt(jnp.sum(z1 * z1, axis=1, keepdims=True) + 1e-12)
  n2 = z2 * jax.lax.rsqrt(jnp.sum(z2 * z2, axis=1, keepdims=True) + 1e-12)
  inv_t = 1.0 / temperature
  # Contract the feature axis directly (no n2.T before the MXU).
  logits = jax.lax.dot_general(
      n1, n2, (((1,), (1,)), ((), ())),
      preferred_element_type=jnp.float32) * inv_t           # [B, B]
  # Diagonal via a cheap elementwise product + small reduce (no iota/select).
  diag = jnp.sum(n1 * n2, axis=1, keepdims=True) * inv_t    # [B, 1]

  m_r = jnp.max(logits, axis=1, keepdims=True)
  lse_r = jnp.log(jnp.sum(jnp.exp(logits - m_r), axis=1, keepdims=True)) + m_r
  m_c = jnp.max(logits, axis=0, keepdims=True)
  lse_c = jnp.log(jnp.sum(jnp.exp(logits - m_c), axis=0, keepdims=True)) + m_c
  # infoNCE(z1,z2)/2 + infoNCE(z2,z1)/2; mean is linear, shared diagonal term.
  contrastive = (0.5 * jnp.mean(lse_r) + 0.5 * jnp.mean(lse_c)
                 - jnp.mean(diag))

  # ---- online linear classification head on r1 (detached; pure forward) ---
  hl = jnp.dot(r1.astype(jnp.bfloat16), wh_ref[...],
               preferred_element_type=jnp.float32) + bh_ref[...]   # [B, K]
  labels = labels_ref[...]                                         # [B, 1]
  col = jax.lax.broadcasted_iota(jnp.int32, hl.shape, 1)
  picked = jnp.sum(jnp.where(col == labels, hl, 0.0), axis=1, keepdims=True)
  m_h = jnp.max(hl, axis=1, keepdims=True)
  lse_h = jnp.log(jnp.sum(jnp.exp(hl - m_h), axis=1, keepdims=True)) + m_h
  cls_loss = jnp.mean(lse_h - picked)
  # argmax with first-max tie break (matches torch.argmax)
  pred = jnp.min(jnp.where(hl >= m_h, col, n_classes), axis=1, keepdims=True)
  acc = jnp.mean((pred == labels).astype(jnp.float32))

  loss_ref[...] = jnp.full((1, 1), contrastive + cls_loss, jnp.float32)
  acc_ref[...] = jnp.full((1, 1), acc, jnp.float32)


# ----------------------------------------------------------------------------
# wrappers
# ----------------------------------------------------------------------------
def _pick_block_rows(n, target=512):
  """Largest multiple-of-8 divisor of n not exceeding target (or n itself)."""
  if n <= target:
    return n
  for cand in range(target, 7, -1):
    if cand % 8 == 0 and n % cand == 0:
      return cand
  return n


def backbone_features(x, w_feat, *, block_rows=None):
  """x: [N, HW, C] bf16, w_feat: [C, D] bf16 -> [N, D] f32, tiled over N."""
  n, hw, c = x.shape
  d = w_feat.shape[1]
  if block_rows is None:
    block_rows = _pick_block_rows(n)
  assert n % block_rows == 0 and (block_rows % 8 == 0 or block_rows == n)
  grid = (n // block_rows,)
  return pl.pallas_call(
      backbone_kernel,
      grid=grid,
      in_specs=[
          pl.BlockSpec((block_rows, hw, c), lambda i: (i, 0, 0)),
          pl.BlockSpec((c, d), lambda i: (0, 0)),   # weight pinned in VMEM
      ],
      out_specs=pl.BlockSpec((block_rows, d), lambda i: (i, 0)),
      out_shape=jax.ShapeDtypeStruct((n, d), jnp.float32),
      compiler_params=pltpu.CompilerParams(
          dimension_semantics=("parallel",),        # megacore shard on v7x
          vmem_limit_bytes=48 * 1024 * 1024),       # > default scoped limit
  )(x, w_feat)


def fused_loss_and_head(r_all, w_head_t, b_head_2d, labels_2d, *,
                        dim, temperature):
  """r_all: [2B, D] f32; returns (total_loss, accuracy) scalars."""
  n, d = r_all.shape
  bsz = n // 2
  k = w_head_t.shape[1]
  kern = functools.partial(loss_kernel, bsz=bsz, dim=dim,
                           temperature=temperature, n_classes=k)
  loss, acc = pl.pallas_call(
      kern,
      grid=(1,),
      in_specs=[
          pl.BlockSpec((n, d), lambda i: (0, 0)),
          pl.BlockSpec((d, k), lambda i: (0, 0)),
          pl.BlockSpec((1, k), lambda i: (0, 0)),
          pl.BlockSpec((bsz, 1), lambda i: (0, 0)),
      ],
      out_specs=[pl.BlockSpec((1, 1), lambda i: (0, 0)),
                 pl.BlockSpec((1, 1), lambda i: (0, 0))],
      out_shape=(jax.ShapeDtypeStruct((1, 1), jnp.float32),
                 jax.ShapeDtypeStruct((1, 1), jnp.float32)),
      compiler_params=pltpu.CompilerParams(
          dimension_semantics=("arbitrary",)),
  )(r_all, w_head_t, b_head_2d, labels_2d)
  return loss[0, 0], acc[0, 0]


@functools.partial(jax.jit,
                   static_argnames=("dim", "temperature", "block_rows"))
def direct_clr_forward(y1, y2, labels, w_feat, w_head, b_head,
                       *, dim, temperature=0.1, block_rows=None):
  """directCLR forward, args.mode == 'directclr'. Returns (loss, acc)."""
  b, c, h, w = y1.shape
  hw = h * w
  # Stack both augmented views -> one backbone call; put channels on the lane
  # axis ([2B, HW, C]) so GAP is a sublane reduce and vregs/DMA are lane-dense.
  x = jnp.concatenate([y1, y2], axis=0).reshape(2 * b, c, hw)
  x = jnp.transpose(x, (0, 2, 1)).astype(jnp.bfloat16)

  r = backbone_features(x, w_feat.astype(jnp.bfloat16),
                        block_rows=block_rows)              # [2B, D] f32

  labels_2d = labels.reshape(b, 1).astype(jnp.int32)
  loss, acc = fused_loss_and_head(
      r,
      w_head.T.astype(jnp.bfloat16),
      b_head.reshape(1, -1).astype(jnp.float32),
      labels_2d,
      dim=dim, temperature=temperature)
  return loss, acc


# ----------------------------------------------------------------------------
# main
# ----------------------------------------------------------------------------
if __name__ == "__main__":
  # Small, module-consistent shapes: B=64 images of 4x16x16, feature dim 128
  # (stand-in for 2048), directclr slice dim 64, 16 classes (stand-in for 1000).
  # block_rows=32 -> backbone grid of 4 tiles over the 2B=128 stacked batch.
  B, C, H, W = 64, 4, 16, 16
  D, DIM, K = 128, 64, 16

  key = jax.random.PRNGKey(0)
  k1, k2, k3, k4, k5 = jax.random.split(key, 5)

  y1 = jax.random.normal(k1, (B, C, H, W), jnp.float32)
  y2 = jax.random.normal(k2, (B, C, H, W), jnp.float32)
  labels = jax.random.randint(k3, (B,), 0, K, jnp.int32)

  # deterministic parameter init
  w_feat = jax.random.normal(k4, (C, D), jnp.float32) * 0.1    # backbone linear
  w_head = jax.random.normal(k5, (K, D), jnp.float32) * 0.05   # online_head.weight
  b_head = jnp.zeros((K,), jnp.float32)                        # online_head.bias

  loss, acc = direct_clr_forward(
      y1, y2, labels, w_feat, w_head, b_head,
      dim=DIM, temperature=0.1, block_rows=32)
  jax.block_until_ready((loss, acc))
  print("KERNEL_OK")
</pallas_src>

<mosaic_0001>
module attributes {stable_mosaic.version = 11 : i64} {
  func.func @backbone_kernel(%arg0: i32, %arg1: memref<32x256x4xbf16, #tpu.memory_space<vmem>>, %arg2: memref<4x128xbf16, #tpu.memory_space<vmem>>, %arg3: memref<32x128xf32, #tpu.memory_space<vmem>>) attributes {dimension_semantics = [#tpu.dimension_semantics<parallel>], iteration_bounds = array<i64: 4>, scalar_prefetch = 0 : i64, scratch_operands = 0 : i64, tpu.core_type = #tpu.core_type<tc>, window_params = [{transform_indices = @transform_0, window_bounds = array<i64: 32, 256, 4>}, {pipeline_mode = #tpu.pipeline_mode<synchronous>, transform_indices = @transform_1, window_bounds = array<i64: 4, 128>}, {transform_indices = @transform_2, window_bounds = array<i64: 32, 128>}]} {
    %c0 = arith.constant 0 : index
    %c0_0 = arith.constant 0 : index
    %c0_1 = arith.constant 0 : index
    %0 = vector.load %arg1[%c0, %c0_0, %c0_1] : memref<32x256x4xbf16, #tpu.memory_space<vmem>>, vector<32x256x4xbf16>
    %1 = arith.extf %0 : vector<32x256x4xbf16> to vector<32x256x4xf32>
    %cst = arith.constant dense<0.000000e+00> : vector<32x4xf32>
    %2 = vector.multi_reduction <add>, %1, %cst [1] : vector<32x256x4xf32> to vector<32x4xf32>
    %cst_2 = arith.constant 3.906250e-03 : f32
    %3 = vector.broadcast %cst_2 : f32 to vector<32x4xf32>
    %4 = arith.mulf %2, %3 : vector<32x4xf32>
    %5 = arith.truncf %4 : vector<32x4xf32> to vector<32x4xbf16>
    %c0_3 = arith.constant 0 : index
    %c0_4 = arith.constant 0 : index
    %6 = vector.load %arg2[%c0_3, %c0_4] : memref<4x128xbf16, #tpu.memory_space<vmem>>, vector<4x128xbf16>
    %cst_5 = arith.constant dense<0.000000e+00> : vector<32x128xf32>
    %7 = tpu.matmul %5, %6, %cst_5 {dimension_numbers = #tpu.dot_dimension_numbers<[1], [0], [0], [1], [0, 0, 1, 1], [], []>} : vector<32x4xbf16>, vector<4x128xbf16>, vector<32x128xf32> -> vector<32x128xf32>
    %cst_6 = arith.constant 0.000000e+00 : f32
    %8 = vector.broadcast %cst_6 : f32 to vector<32x128xf32>
    %9 = arith.maximumf %7, %8 : vector<32x128xf32>
    %c0_7 = arith.constant 0 : index
    %c0_8 = arith.constant 0 : index
    %10 = vector.load %arg3[%c0_7, %c0_8] : memref<32x128xf32, #tpu.memory_space<vmem>>, vector<32x128xf32>
    tpu.vector_store %arg3[%c0_7, %c0_8], %9 {strides = array<i32>} : memref<32x128xf32, #tpu.memory_space<vmem>>, vector<32x128xf32>,
    return
  }
  func.func @transform_0(%arg0: i32) -> (i32, i32, i32) {
    %c0_i32 = arith.constant 0 : i32
    %c0_i32_0 = arith.constant 0 : i32
    %c0_i32_1 = arith.constant 0 : i32
    return %arg0, %c0_i32, %c0_i32_0 : i32, i32, i32
  }
  func.func @transform_1(%arg0: i32) -> (i32, i32) {
    %c0_i32 = arith.constant 0 : i32
    %c0_i32_0 = arith.constant 0 : i32
    %c0_i32_1 = arith.constant 0 : i32
    return %c0_i32, %c0_i32_0 : i32, i32
  }
  func.func @transform_2(%arg0: i32) -> (i32, i32) {
    %c0_i32 = arith.constant 0 : i32
    %c0_i32_0 = arith.constant 0 : i32
    return %arg0, %c0_i32 : i32, i32
  }
}

module attributes {stable_mosaic.version = 11 : i64} {
  func.func @loss_kernel(%arg0: i32, %arg1: memref<128x128xf32, #tpu.memory_space<vmem>>, %arg2: memref<128x16xbf16, #tpu.memory_space<vmem>>, %arg3: memref<1x16xf32, #tpu.memory_space<vmem>>, %arg4: memref<64x1xi32, #tpu.memory_space<vmem>>, %arg5: memref<1x1xf32, #tpu.memory_space<vmem>>, %arg6: memref<1x1xf32, #tpu.memory_space<vmem>>) attributes {dimension_semantics = [#tpu.dimension_semantics<arbitrary>], iteration_bounds = array<i64: 1>, scalar_prefetch = 0 : i64, scratch_operands = 0 : i64, tpu.core_type = #tpu.core_type<tc>, window_params = [{pipeline_mode = #tpu.pipeline_mode<synchronous>, transform_indices = @transform_0, window_bounds = array<i64: 128, 128>}, {pipeline_mode = #tpu.pipeline_mode<synchronous>, transform_indices = @transform_1, window_bounds = array<i64: 128, 16>}, {pipeline_mode = #tpu.pipeline_mode<synchronous>, transform_indices = @transform_2, window_bounds = array<i64: 1, 16>}, {pipeline_mode = #tpu.pipeline_mode<synchronous>, transform_indices = @transform_3, window_bounds = array<i64: 64, 1>}, {pipeline_mode = #tpu.pipeline_mode<synchronous>, transform_indices = @transform_4, window_bounds = array<i64: 1, 1>}, {pipeline_mode = #tpu.pipeline_mode<synchronous>, transform_indices = @transform_5, window_bounds = array<i64: 1, 1>}]} {
    %c0 = arith.constant 0 : index
    %c0_0 = arith.constant 0 : index
    %0 = vector.load %arg1[%c0, %c0_0] : memref<128x128xf32, #tpu.memory_space<vmem>>, vector<128x128xf32>
    %1 = vector.extract_strided_slice %0 {offsets = [0, 0], sizes = [64, 128], strides = [1, 1]} : vector<128x128xf32> to vector<64x128xf32>
    %2 = vector.extract_strided_slice %0 {offsets = [64, 0], sizes = [64, 128], strides = [1, 1]} : vector<128x128xf32> to vector<64x128xf32>
    %3 = vector.extract_strided_slice %1 {offsets = [0, 0], sizes = [64, 64], strides = [1, 1]} : vector<64x128xf32> to vector<64x64xf32>
    %4 = vector.extract_strided_slice %2 {offsets = [0, 0], sizes = [64, 64], strides = [1, 1]} : vector<64x128xf32> to vector<64x64xf32>
    %5 = arith.mulf %3, %3 : vector<64x64xf32>
    %cst = arith.constant dense<0.000000e+00> : vector<64xf32>
    %6 = vector.multi_reduction <add>, %5, %cst [1] : vector<64x64xf32> to vector<64xf32>
    %7 = vector.shape_cast %6 : vector<64xf32> to vector<64x1xf32>
    %cst_1 = arith.constant 9.99999996E-13 : f32
    %8 = vector.broadcast %cst_1 : f32 to vector<64x1xf32>
    %9 = arith.addf %7, %8 : vector<64x1xf32>
    %10 = math.rsqrt %9 : vector<64x1xf32>
    %11 = vector.broadcast %10 : vector<64x1xf32> to vector<64x64xf32>
    %12 = arith.mulf %3, %11 : vector<64x64xf32>
    %13 = arith.mulf %4, %4 : vector<64x64xf32>
    %cst_2 = arith.constant dense<0.000000e+00> : vector<64xf32>
    %14 = vector.multi_reduction <add>, %13, %cst_2 [1] : vector<64x64xf32> to vector<64xf32>
    %15 = vector.shape_cast %14 : vector<64xf32> to vector<64x1xf32>
    %cst_3 = arith.constant 9.99999996E-13 : f32
    %16 = vector.broadcast %cst_3 : f32 to vector<64x1xf32>
    %17 = arith.addf %15, %16 : vector<64x1xf32>
    %18 = math.rsqrt %17 : vector<64x1xf32>
    %19 = vector.broadcast %18 : vector<64x1xf32> to vector<64x64xf32>
    %20 = arith.mulf %4, %19 : vector<64x64xf32>
    %cst_4 = arith.constant dense<0.000000e+00> : vector<64x64xf32>
    %21 = tpu.matmul %12, %20, %cst_4 {dimension_numbers = #tpu.dot_dimension_numbers<[1], [1], [0], [0], [0, 0, 1, 0], [], []>} : vector<64x64xf32>, vector<64x64xf32>, vector<64x64xf32> -> vector<64x64xf32>
    %cst_5 = arith.constant 1.000000e+01 : f32
    %22 = vector.broadcast %cst_5 : f32 to vector<64x64xf32>
    %23 = arith.mulf %21, %22 : vector<64x64xf32>
    %24 = arith.mulf %12, %20 : vector<64x64xf32>
    %cst_6 = arith.constant dense<0.000000e+00> : vector<64xf32>
    %25 = vector.multi_reduction <add>, %24, %cst_6 [1] : vector<64x64xf32> to vector<64xf32>
    %26 = vector.shape_cast %25 : vector<64xf32> to vector<64x1xf32>
    %cst_7 = arith.constant 1.000000e+01 : f32
    %27 = vector.broadcast %cst_7 : f32 to vector<64x1xf32>
    %28 = arith.mulf %26, %27 : vector<64x1xf32>
    %cst_8 = arith.constant dense<0xFF800000> : vector<64xf32>
    %29 = vector.multi_reduction <maximumf>, %23, %cst_8 [1] : vector<64x64xf32> to vector<64xf32>
    %30 = vector.shape_cast %29 : vector<64xf32> to vector<64x1xf32>
    %31 = vector.broadcast %30 : vector<64x1xf32> to vector<64x64xf32>
    %32 = arith.subf %23, %31 : vector<64x64xf32>
    %33 = math.exp %32 : vector<64x64xf32>
    %cst_9 = arith.constant dense<0.000000e+00> : vector<64xf32>
    %34 = vector.multi_reduction <add>, %33, %cst_9 [1] : vector<64x64xf32> to vector<64xf32>
    %35 = vector.shape_cast %34 : vector<64xf32> to vector<64x1xf32>
    %36 = math.log %35 : vector<64x1xf32>
    %37 = arith.addf %36, %30 : vector<64x1xf32>
    %cst_10 = arith.constant dense<0xFF800000> : vector<64xf32>
    %38 = vector.multi_reduction <maximumf>, %23, %cst_10 [0] : vector<64x64xf32> to vector<64xf32>
    %39 = vector.shape_cast %38 : vector<64xf32> to vector<1x64xf32>
    %40 = vector.broadcast %39 : vector<1x64xf32> to vector<64x64xf32>
    %41 = arith.subf %23, %40 : vector<64x64xf32>
    %42 = math.exp %41 : vector<64x64xf32>
    %cst_11 = arith.constant dense<0.000000e+00> : vector<64xf32>
    %43 = vector.multi_reduction <add>, %42, %cst_11 [0] : vector<64x64xf32> to vector<64xf32>
    %44 = vector.shape_cast %43 : vector<64xf32> to vector<1x64xf32>
    %45 = math.log %44 : vector<1x64xf32>
    %46 = arith.addf %45, %39 : vector<1x64xf32>
    %47 = vector.shape_cast %37 : vector<64x1xf32> to vector<1x64x1xf32>
    %cst_12 = arith.constant dense<0.000000e+00> : vector<1xf32>
    %48 = vector.multi_reduction <add>, %47, %cst_12 [1, 2] : vector<1x64x1xf32> to vector<1xf32>
    %49 = vector.shape_cast %48 : vector<1xf32> to vector<1x1x1xf32>
    %50 = vector.extract %49[0, 0, 0] : f32 from vector<1x1x1xf32>
    %cst_13 = arith.constant 6.400000e+01 : f32
    %51 = arith.divf %50, %cst_13 : f32
    %cst_14 = arith.constant 5.000000e-01 : f32
    %52 = arith.mulf %cst_14, %51 : f32
    %53 = vector.shape_cast %46 : vector<1x64xf32> to vector<1x1x64xf32>
    %cst_15 = arith.constant dense<0.000000e+00> : vector<1xf32>
    %54 = vector.multi_reduction <add>, %53, %cst_15 [1, 2] : vector<1x1x64xf32> to vector<1xf32>
    %55 = vector.shape_cast %54 : vector<1xf32> to vector<1x1x1xf32>
    %56 = vector.extract %55[0, 0, 0] : f32 from vector<1x1x1xf32>
    %cst_16 = arith.constant 6.400000e+01 : f32
    %57 = arith.divf %56, %cst_16 : f32
    %cst_17 = arith.constant 5.000000e-01 : f32
    %58 = arith.mulf %cst_17, %57 : f32
    %59 = arith.addf %52, %58 : f32
    %60 = vector.shape_cast %28 : vector<64x1xf32> to vector<1x64x1xf32>
    %cst_18 = arith.constant dense<0.000000e+00> : vector<1xf32>
    %61 = vector.multi_reduction <add>, %60, %cst_18 [1, 2] : vector<1x64x1xf32> to vector<1xf32>
    %62 = vector.shape_cast %61 : vector<1xf32> to vector<1x1x1xf32>
    %63 = vector.extract %62[0, 0, 0] : f32 from vector<1x1x1xf32>
    %cst_19 = arith.constant 6.400000e+01 : f32
    %64 = arith.divf %63, %cst_19 : f32
    %65 = arith.subf %59, %64 : f32
    %66 = arith.truncf %1 : vector<64x128xf32> to vector<64x128xbf16>
    %c0_20 = arith.constant 0 : index
    %c0_21 = arith.constant 0 : index
    %67 = vector.load %arg2[%c0_20, %c0_21] : memref<128x16xbf16, #tpu.memory_space<vmem>>, vector<128x16xbf16>
    %cst_22 = arith.constant dense<0.000000e+00> : vector<64x16xf32>
    %68 = tpu.matmul %66, %67, %cst_22 {dimension_numbers = #tpu.dot_dimension_numbers<[1], [0], [0], [1], [0, 0, 1, 1], [], []>} : vector<64x128xbf16>, vector<128x16xbf16>, vector<64x16xf32> -> vector<64x16xf32>
    %c0_23 = arith.constant 0 : index
    %c0_24 = arith.constant 0 : index
    %69 = vector.load %arg3[%c0_23, %c0_24] : memref<1x16xf32, #tpu.memory_space<vmem>>, vector<1x16xf32>
    %70 = vector.broadcast %69 : vector<1x16xf32> to vector<64x16xf32>
    %71 = arith.addf %68, %70 : vector<64x16xf32>
    %c0_25 = arith.constant 0 : index
    %c0_26 = arith.constant 0 : index
    %72 = vector.load %arg4[%c0_25, %c0_26] : memref<64x1xi32, #tpu.memory_space<vmem>>, vector<64x1xi32>
    %73 = tpu.iota {dimensions = array<i32: 1>} : vector<64x16xi32>
    %74 = vector.broadcast %72 : vector<64x1xi32> to vector<64x16xi32>
    %75 = arith.cmpi eq, %73, %74 : vector<64x16xi32>
    %cst_27 = arith.constant 0.000000e+00 : f32
    %76 = vector.broadcast %cst_27 : f32 to vector<64x16xf32>
    %77 = arith.select %75, %71, %76 : vector<64x16xi1>, vector<64x16xf32>
    %cst_28 = arith.constant dense<0.000000e+00> : vector<64xf32>
    %78 = vector.multi_reduction <add>, %77, %cst_28 [1] : vector<64x16xf32> to vector<64xf32>
    %79 = vector.shape_cast %78 : vector<64xf32> to vector<64x1xf32>
    %cst_29 = arith.constant dense<0xFF800000> : vector<64xf32>
    %80 = vector.multi_reduction <maximumf>, %71, %cst_29 [1] : vector<64x16xf32> to vector<64xf32>
    %81 = vector.shape_cast %80 : vector<64xf32> to vector<64x1xf32>
    %82 = vector.broadcast %81 : vector<64x1xf32> to vector<64x16xf32>
    %83 = arith.subf %71, %82 : vector<64x16xf32>
    %84 = math.exp %83 : vector<64x16xf32>
    %cst_30 = arith.constant dense<0.000000e+00> : vector<64xf32>
    %85 = vector.multi_reduction <add>, %84, %cst_30 [1] : vector<64x16xf32> to vector<64xf32>
    %86 = vector.shape_cast %85 : vector<64xf32> to vector<64x1xf32>
    %87 = math.log %86 : vector<64x1xf32>
    %88 = arith.addf %87, %81 : vector<64x1xf32>
    %89 = arith.subf %88, %79 : vector<64x1xf32>
    %90 = vector.shape_cast %89 : vector<64x1xf32> to vector<1x64x1xf32>
    %cst_31 = arith.constant dense<0.000000e+00> : vector<1xf32>
    %91 = vector.multi_reduction <add>, %90, %cst_31 [1, 2] : vector<1x64x1xf32> to vector<1xf32>
    %92 = vector.shape_cast %91 : vector<1xf32> to vector<1x1x1xf32>
    %93 = vector.extract %92[0, 0, 0] : f32 from vector<1x1x1xf32>
    %cst_32 = arith.constant 6.400000e+01 : f32
    %94 = arith.divf %93, %cst_32 : f32
    %95 = vector.broadcast %81 : vector<64x1xf32> to vector<64x16xf32>
    %96 = arith.cmpf oge, %71, %95 : vector<64x16xf32>
    %c16_i32 = arith.constant 16 : i32
    %97 = vector.broadcast %c16_i32 : i32 to vector<64x16xi32>
    %98 = arith.select %96, %73, %97 : vector<64x16xi1>, vector<64x16xi32>
    %cst_33 = arith.constant dense<2147483647> : vector<64xi32>
    %99 = vector.multi_reduction <minsi>, %98, %cst_33 [1] : vector<64x16xi32> to vector<64xi32>
    %100 = vector.shape_cast %99 : vector<64xi32> to vector<64x1xi32>
    %101 = arith.cmpi eq, %100, %72 : vector<64x1xi32>
    %102 = arith.extui %101 : vector<64x1xi1> to vector<64x1xi32>
    %103 = arith.sitofp %102 : vector<64x1xi32> to vector<64x1xf32>
    %104 = vector.shape_cast %103 : vector<64x1xf32> to vector<1x64x1xf32>
    %cst_34 = arith.constant dense<0.000000e+00> : vector<1xf32>
    %105 = vector.multi_reduction <add>, %104, %cst_34 [1, 2] : vector<1x64x1xf32> to vector<1xf32>
    %106 = vector.shape_cast %105 : vector<1xf32> to vector<1x1x1xf32>
    %107 = vector.extract %106[0, 0, 0] : f32 from vector<1x1x1xf32>
    %cst_35 = arith.constant 6.400000e+01 : f32
    %108 = arith.divf %107, %cst_35 : f32
    %109 = arith.addf %65, %94 : f32
    %110 = vector.broadcast %109 : f32 to vector<1x1xf32>
    %c0_36 = arith.constant 0 : index
    %c0_37 = arith.constant 0 : index
    %111 = vector.load %arg5[%c0_36, %c0_37] : memref<1x1xf32, #tpu.memory_space<vmem>>, vector<1x1xf32>
    tpu.vector_store %arg5[%c0_36, %c0_37], %110 {strides = array<i32>} : memref<1x1xf32, #tpu.memory_space<vmem>>, vector<1x1xf32>,
    %112 = vector.broadcast %108 : f32 to vector<1x1xf32>
    %c0_38 = arith.constant 0 : index
    %c0_39 = arith.constant 0 : index
    %113 = vector.load %arg6[%c0_38, %c0_39] : memref<1x1xf32, #tpu.memory_space<vmem>>, vector<1x1xf32>
    tpu.vector_store %arg6[%c0_38, %c0_39], %112 {strides = array<i32>} : memref<1x1xf32, #tpu.memory_space<vmem>>, vector<1x1xf32>,
    return
  }
  func.func @transform_0(%arg0: i32) -> (i32, i32) {
    %c0_i32 = arith.constant 0 : i32
    %c0_i32_0 = arith.constant 0 : i32
    %c0_i32_1 = arith.constant 0 : i32
    return %c0_i32, %c0_i32_0 : i32, i32
  }
  func.func @transform_1(%arg0: i32) -> (i32, i32) {
    %c0_i32 = arith.constant 0 : i32
    %c0_i32_0 = arith.constant 0 : i32
    %c0_i32_1 = arith.constant 0 : i32
    return %c0_i32, %c0_i32_0 : i32, i32
  }
  func.func @transform_2(%arg0: i32) -> (i32, i32) {
    %c0_i32 = arith.constant 0 : i32
    %c0_i32_0 = arith.constant 0 : i32
    %c0_i32_1 = arith.constant 0 : i32
    return %c0_i32, %c0_i32_0 : i32, i32
  }
  func.func @transform_3(%arg0: i32) -> (i32, i32) {
    %c0_i32 = arith.constant 0 : i32
    %c0_i32_0 = arith.constant 0 : i32
    %c0_i32_1 = arith.constant 0 : i32
    return %c0_i32, %c0_i32_0 : i32, i32
  }
  func.func @transform_4(%arg0: i32) -> (i32, i32) {
    %c0_i32 = arith.constant 0 : i32
    %c0_i32_0 = arith.constant 0 : i32
    %c0_i32_1 = arith.constant 0 : i32
    return %c0_i32, %c0_i32_0 : i32, i32
  }
  func.func @transform_5(%arg0: i32) -> (i32, i32) {
    %c0_i32 = arith.constant 0 : i32
    %c0_i32_0 = arith.constant 0 : i32
    %c0_i32_1 = arith.constant 0 : i32
    return %c0_i32, %c0_i32_0 : i32, i32
  }
}

</mosaic_0001>

<llo_original>
// kernel: direct_clr_forward.3
$region0: #{direct_clr_forward.3}
  #allocation0 [shape = 'u32[]', space=smem, size = 0x4, offset = 0x4, fixed_abs, tag = 'smem constant byte address 0x4 - core index']
  #allocation1 [shape = 'u32[144,128]{1,0:T(1,128)}', space=vmem, size = 0x12000, scoped, tag = 'internal scratch']
  %s0 = inlined_call_operand.vmem [shape: f32[128,128], index: 0, kind: input, shape index: {}]
  %s1 = inlined_call_operand.vmem [shape: bf16[128,16], index: 1, kind: input, shape index: {}]
  %s2 = inlined_call_operand.vmem [shape: f32[1,16], index: 2, kind: input, shape index: {}]
  %s3 = inlined_call_operand.vmem [shape: s32[64,1], index: 3, kind: input, shape index: {}]
  %s4 = inlined_call_operand.hbm [shape: f32[1,1], index: 4, kind: output, shape index: {0}]
  %s5 = inlined_call_operand.hbm [shape: f32[1,1], index: 5, kind: output, shape index: {1}]
  %6 = xla_tuple %s4, %s5
  %s7 = sld [smem:[#allocation0]]
  $region34: #{direct_clr_forward.3} parent=0
    _
  %s9 = ssub.s32 1, %s7
  %s10 = scalar_select 0, %s9, %s7
  $region1: #{direct_clr_forward.3} parent=0
    #allocation2 [shape = 'u8[512]{0}', space=vmem, size = 0x400, scoped, tag = 'output window, operand 0, single buffered']
    #allocation3 [shape = 's32[1]{0}', space=sflag, size = 0x4, scoped, tag = 'scoped memory for direct_clr_forward.3']
    #allocation4 [shape = 'u8[512]{0}', space=vmem, size = 0x400, scoped, tag = 'output window, operand 1, single buffered']
    #allocation5 [shape = 's32[1]{0}', space=sflag, size = 0x4, scoped, tag = 'scoped memory for direct_clr_forward.3']
    %11 = vsyncpa [#allocation3], 0
    %12 = vsyncpa [#allocation5], 0
    // Predicated region
    $region2: #{direct_clr_forward.3} parent=1 // pred_check
      _
    $region3: #{direct_clr_forward.3} parent=1 // pred_check_branch
      %14 = sbr.rel (0) target = $region5
    $region4: #{direct_clr_forward.3} parent=1 // pred_region
      _
    $region5: #{direct_clr_forward.3} parent=1 // pred_fallthru
      _
    // Predicated region
    $region6: #{direct_clr_forward.3} parent=1 // pred_check
      _
    $region7: #{direct_clr_forward.3} parent=1 // pred_check_branch
      %16 = sbr.rel (0) target = $region9
    $region8: #{direct_clr_forward.3} parent=1 // pred_region
      _
    $region9: #{direct_clr_forward.3} parent=1 // pred_fallthru
      _
    // Predicated region
    $region10: #{direct_clr_forward.3} parent=1 // pred_check
      _
    $region11: #{direct_clr_forward.3} parent=1 // pred_check_branch
      %18 = sbr.rel (0) target = $region13
    $region12: #{direct_clr_forward.3} parent=1 // pred_region
      _
    $region13: #{direct_clr_forward.3} parent=1 // pred_fallthru
      _
    // Predicated region
    $region14: #{direct_clr_forward.3} parent=1 // pred_check
      _
    $region15: #{direct_clr_forward.3} parent=1 // pred_check_branch
      %20 = sbr.rel (0) target = $region17
    $region16: #{direct_clr_forward.3} parent=1 // pred_region
      _
    $region17: #{direct_clr_forward.3} parent=1 // pred_fallthru
      _
    %v22 = vld [vmem:[%s0] sm:$0xff]
    %v23 = vld [vmem:[%s0 + $0x8] sm:$0xff]
    %v24 = vld [vmem:[%s0 + $0x10] sm:$0xff]
    %v25 = vld [vmem:[%s0 + $0x18] sm:$0xff]
    %v26 = vld [vmem:[%s0 + $0x20] sm:$0xff]
    %v27 = vld [vmem:[%s0 + $0x28] sm:$0xff]
    %v28 = vld [vmem:[%s0 + $0x30] sm:$0xff]
    %v29 = vld [vmem:[%s0 + $0x38] sm:$0xff]
    %v30 = vld [vmem:[%s0 + $0x40] sm:$0xff]
    %v31 = vld [vmem:[%s0 + $0x48] sm:$0xff]
    %v32 = vld [vmem:[%s0 + $0x50] sm:$0xff]
    %v33 = vld [vmem:[%s0 + $0x58] sm:$0xff]
    %v34 = vld [vmem:[%s0 + $0x60] sm:$0xff]
    %v35 = vld [vmem:[%s0 + $0x68] sm:$0xff]
    %v36 = vld [vmem:[%s0 + $0x70] sm:$0xff]
    %v37 = vld [vmem:[%s0 + $0x78] sm:$0xff]
    %v38 = vmul.f32 %v22, %v22
    %v39 = vmul.f32 %v23, %v23
    %v40 = vmul.f32 %v24, %v24
    %v41 = vmul.f32 %v25, %v25
    %v42 = vmul.f32 %v26, %v26
    %v43 = vmul.f32 %v27, %v27
    %v44 = vmul.f32 %v28, %v28
    %v45 = vmul.f32 %v29, %v29
    %vm46 = vcmask 523264
    %v47 = vsel %vm46, %v38, 0.0
    %48 = vadd.xlane.f32.xlu0 %v47
    %v49 = vpop.xlane.xlu0 %48
    %v50 = vsel %vm46, %v39, 0.0
    %51 = vadd.xlane.f32.xlu0 %v50
    %v52 = vpop.xlane.xlu0 %51
    %v53 = vsel %vm46, %v40, 0.0
    %54 = vadd.xlane.f32.xlu0 %v53
    %v55 = vpop.xlane.xlu0 %54
    %v56 = vsel %vm46, %v41, 0.0
    %57 = vadd.xlane.f32.xlu0 %v56
    %v58 = vpop.xlane.xlu0 %57
    %v59 = vsel %vm46, %v42, 0.0
    %60 = vadd.xlane.f32.xlu0 %v59
    %v61 = vpop.xlane.xlu0 %60
    %v62 = vsel %vm46, %v43, 0.0
    %63 = vadd.xlane.f32.xlu0 %v62
    %v64 = vpop.xlane.xlu0 %63
    %v65 = vsel %vm46, %v44, 0.0
    %66 = vadd.xlane.f32.xlu0 %v65
    %v67 = vpop.xlane.xlu0 %66
    %v68 = vsel %vm46, %v45, 0.0
    %69 = vadd.xlane.f32.xlu0 %v68
    %v70 = vpop.xlane.xlu0 %69
    %v71 = vadd.f32 %v49, 1e-12
    %v72 = vadd.f32 %v52, 1e-12
    %v73 = vadd.f32 %v55, 1e-12
    %v74 = vadd.f32 %v58, 1e-12
    %v75 = vadd.f32 %v61, 1e-12
    %v76 = vadd.f32 %v64, 1e-12
    %v77 = vadd.f32 %v67, 1e-12
    %v78 = vadd.f32 %v70, 1e-12
    %v79 = vrsqrt.pop %v71
    %v80 = vrsqrt.pop %v72
    %v81 = vrsqrt.pop %v73
    %v82 = vrsqrt.pop %v74
    %v83 = vrsqrt.pop %v75
    %v84 = vrsqrt.pop %v76
    %v85 = vrsqrt.pop %v77
    %v86 = vrsqrt.pop %v78
    %v87 = vmul.f32 %v22, %v79
    %v88 = vmul.f32 %v23, %v80
    %v89 = vmul.f32 %v24, %v81
    %v90 = vmul.f32 %v25, %v82
    %v91 = vmul.f32 %v26, %v83
    %v92 = vmul.f32 %v27, %v84
    %v93 = vmul.f32 %v28, %v85
    %v94 = vmul.f32 %v29, %v86
    %v95 = vmul.f32 %v30, %v30
    %v96 = vmul.f32 %v31, %v31
    %v97 = vmul.f32 %v32, %v32
    %v98 = vmul.f32 %v33, %v33
    %v99 = vmul.f32 %v34, %v34
    %v100 = vmul.f32 %v35, %v35
    %v101 = vmul.f32 %v36, %v36
    %v102 = vmul.f32 %v37, %v37
    %v103 = vsel %vm46, %v95, 0.0
    %104 = vadd.xlane.f32.xlu0 %v103
    %v105 = vpop.xlane.xlu0 %104
    %v106 = vsel %vm46, %v96, 0.0
    %107 = vadd.xlane.f32.xlu0 %v106
    %v108 = vpop.xlane.xlu0 %107
    %v109 = vsel %vm46, %v97, 0.0
    %110 = vadd.xlane.f32.xlu0 %v109
    %v111 = vpop.xlane.xlu0 %110
    %v112 = vsel %vm46, %v98, 0.0
    %113 = vadd.xlane.f32.xlu0 %v112
    %v114 = vpop.xlane.xlu0 %113
    %v115 = vsel %vm46, %v99, 0.0
    %116 = vadd.xlane.f32.xlu0 %v115
    %v117 = vpop.xlane.xlu0 %116
    %v118 = vsel %vm46, %v100, 0.0
    %119 = vadd.xlane.f32.xlu0 %v118
    %v120 = vpop.xlane.xlu0 %119
    %v121 = vsel %vm46, %v101, 0.0
    %122 = vadd.xlane.f32.xlu0 %v121
    %v123 = vpop.xlane.xlu0 %122
    %v124 = vsel %vm46, %v102, 0.0
    %125 = vadd.xlane.f32.xlu0 %v124
    %v126 = vpop.xlane.xlu0 %125
    %v127 = vadd.f32 %v105, 1e-12
    %v128 = vadd.f32 %v108, 1e-12
    %v129 = vadd.f32 %v111, 1e-12
    %v130 = vadd.f32 %v114, 1e-12
    %v131 = vadd.f32 %v117, 1e-12
    %v132 = vadd.f32 %v120, 1e-12
    %v133 = vadd.f32 %v123, 1e-12
    %v134 = vadd.f32 %v126, 1e-12
    %v135 = vrsqrt.pop %v127
    %v136 = vrsqrt.pop %v128
    %v137 = vrsqrt.pop %v129
    %v138 = vrsqrt.pop %v130
    %v139 = vrsqrt.pop %v131
    %v140 = vrsqrt.pop %v132
    %v141 = vrsqrt.pop %v133
    %v142 = vrsqrt.pop %v134
    %v143 = vmul.f32 %v30, %v135
    %v144 = vmul.f32 %v31, %v136
    %v145 = vmul.f32 %v32, %v137
    %v146 = vmul.f32 %v33, %v138
    %v147 = vmul.f32 %v34, %v139
    %v148 = vmul.f32 %v35, %v140
    %v149 = vmul.f32 %v36, %v141
    %v150 = vmul.f32 %v37, %v142
    %v152 = vsel %vm46, %v87, 0
    %v155 = vsel %vm46, %v88, 0
    %v158 = vsel %vm46, %v89, 0
    %v161 = vsel %vm46, %v90, 0
    %v164 = vsel %vm46, %v91, 0
    %v167 = vsel %vm46, %v92, 0
    %v170 = vsel %vm46, %v93, 0
    %v173 = vsel %vm46, %v94, 0
    %v176 = vsel %vm46, %v143, 0
    %v179 = vsel %vm46, %v144, 0
    %v182 = vsel %vm46, %v145, 0
    %v185 = vsel %vm46, %v146, 0
    %v188 = vsel %vm46, %v147, 0
    %v191 = vsel %vm46, %v148, 0
    %v194 = vsel %vm46, %v149, 0
    %v197 = vsel %vm46, %v150, 0
    %199 = vmatprep.subr.mxu0 0.0
    %200 = vmatpush1.xpose.msra.mxu0 %v176
    %201 = vmatprep.subr.mxu0 0.0
    %202 = vmatpush1.xpose.msra.mxu0 %v179
    %203 = vmatprep.subr.mxu0 0.0
    %204 = vmatpush1.xpose.msra.mxu0 %v182
    %205 = vmatprep.subr.mxu0 0.0
    %206 = vmatpush1.xpose.msra.mxu0 %v185
    %207 = vmatprep.subr.mxu0 0.0
    %208 = vmatpush1.xpose.msra.mxu0 %v188
    %209 = vmatprep.subr.mxu0 0.0
    %210 = vmatpush1.xpose.msra.mxu0 %v191
    %211 = vmatprep.subr.mxu0 0.0
    %212 = vmatpush1.xpose.msra.mxu0 %v194
    %213 = vmatprep.subr.mxu0 0.0
    %214 = vmatpush1.xpose.msra.mxu0 %v197
    %215 = vmatprep.subr.mxu0 0.0
    %216 = vmatpush1.xpose.msra.mxu0 0.0
    %217 = vmatprep.subr.mxu0 0.0
    %218 = vmatpush1.xpose.msra.mxu0 0.0
    %219 = vmatprep.subr.mxu0 0.0
    %220 = vmatpush1.xpose.msra.mxu0 0.0
    %221 = vmatprep.subr.mxu0 0.0
    %222 = vmatpush1.xpose.msra.mxu0 0.0
    %223 = vmatprep.subr.mxu0 0.0
    %224 = vmatpush1.xpose.msra.mxu0 0.0
    %225 = vmatprep.subr.mxu0 0.0
    %226 = vmatpush1.xpose.msra.mxu0 0.0
    %227 = vmatprep.subr.mxu0 0.0
    %228 = vmatpush1.xpose.msra.mxu0 0.0
    %229 = vmatprep.subr.mxu0 0.0
    %230 = vmatpush1.xpose.msra.mxu0 0.0
    %231 = vmatprep.subr.mxu0 0.0
    %232 = vmatpush1.xpose.msra.mxu0 0.0
    %233 = vmatprep.subr.mxu0 0.0
    %234 = vmatpush1.xpose.msra.mxu0 0.0
    %235 = vmatprep.subr.mxu0 0.0
    %236 = vmatpush1.xpose.msra.mxu0 0.0
    %237 = vmatprep.subr.mxu0 0.0
    %238 = vmatpush1.xpose.msra.mxu0 0.0
    %239 = vmatprep.subr.mxu0 0.0
    %240 = vmatpush1.xpose.msra.mxu0 0.0
    %241 = vmatprep.subr.mxu0 0.0
    %242 = vmatpush1.xpose.msra.mxu0 0.0
    %243 = vmatprep.subr.mxu0 0.0
    %244 = vmatpush1.xpose.msra.mxu0 0.0
    %245 = vmatprep.subr.mxu0 0.0
    %246 = vmatpush1.xpose.msra.mxu0 0.0
    %247 = vmatprep.subr.mxu0 0.0
    %248 = vmatpush1.xpose.msra.mxu0 0.0
    %249 = vmatprep.subr.mxu0 0.0
    %250 = vmatpush1.xpose.msra.mxu0 0.0
    %251 = vmatprep.subr.mxu0 0.0
    %252 = vmatpush1.xpose.msra.mxu0 0.0
    %253 = vmatprep.subr.mxu0 0.0
    %254 = vmatpush1.xpose.msra.mxu0 0.0
    %255 = vmatprep.subr.mxu0 0.0
    %256 = vmatpush1.xpose.msra.mxu0 0.0
    %257 = vmatprep.subr.mxu0 0.0
    %258 = vmatpush1.xpose.msra.mxu0 0.0
    %259 = vmatprep.subr.mxu0 0.0
    %260 = vmatpush1.xpose.msra.mxu0 0.0
    %261 = vmatprep.subr.mxu0 0.0
    %262 = vmatpush1.xpose.msra.mxu0 0.0
    %263 = vmatprep.mubr.f32.mxu0 0.0
    %264 = vmatmul.mubr.f32.gmra.mrb[0].mxu0 %v152
    %v265 = vpop.f32.mrb[0].mxu0
    %v266 = vadd.f32 0.0, %v265
    %v267 = vpop.f32.mrb[0].mxu0
    %268 = vmatprep.mubr.f32.mxu0 0.0
    %269 = vmatmul.mubr.f32.gmra.mrb[0].mxu0 %v155
    %v270 = vpop.f32.mrb[0].mxu0
    %v271 = vadd.f32 0.0, %v270
    %v272 = vpop.f32.mrb[0].mxu0
    %273 = vmatprep.mubr.f32.mxu0 0.0
    %274 = vmatmul.mubr.f32.gmra.mrb[0].mxu0 %v158
    %v275 = vpop.f32.mrb[0].mxu0
    %v276 = vadd.f32 0.0, %v275
    %v277 = vpop.f32.mrb[0].mxu0
    %278 = vmatprep.mubr.f32.mxu0 0.0
    %279 = vmatmul.mubr.f32.gmra.mrb[0].mxu0 %v161
    %v280 = vpop.f32.mrb[0].mxu0
    %v281 = vadd.f32 0.0, %v280
    %v282 = vpop.f32.mrb[0].mxu0
    %283 = vmatprep.mubr.f32.mxu0 0.0
    %284 = vmatmul.mubr.f32.gmra.mrb[0].mxu0 %v164
    %v285 = vpop.f32.mrb[0].mxu0
    %v286 = vadd.f32 0.0, %v285
    %v287 = vpop.f32.mrb[0].mxu0
    %288 = vmatprep.mubr.f32.mxu0 0.0
    %289 = vmatmul.mubr.f32.gmra.mrb[0].mxu0 %v167
    %v290 = vpop.f32.mrb[0].mxu0
    %v291 = vadd.f32 0.0, %v290
    %v292 = vpop.f32.mrb[0].mxu0
    %293 = vmatprep.mubr.f32.mxu0 0.0
    %294 = vmatmul.mubr.f32.gmra.mrb[0].mxu0 %v170
    %v295 = vpop.f32.mrb[0].mxu0
    %v296 = vadd.f32 0.0, %v295
    %v297 = vpop.f32.mrb[0].mxu0
    %298 = vmatprep.mubr.f32.mxu0 0.0
    %299 = vmatmul.mubr.f32.gmra.mrb[0].mxu0 %v173
    %v300 = vpop.f32.mrb[0].mxu0
    %v301 = vadd.f32 0.0, %v300
    %v302 = vpop.f32.mrb[0].mxu0
    %303 = vdwg.mxu0
    %v304 = vmul.f32 %v266, 10.0
    %v305 = vmul.f32 %v271, 10.0
    %v306 = vmul.f32 %v276, 10.0
    %v307 = vmul.f32 %v281, 10.0
    %v308 = vmul.f32 %v286, 10.0
    %v309 = vmul.f32 %v291, 10.0
    %v310 = vmul.f32 %v296, 10.0
    %v311 = vmul.f32 %v301, 10.0
    %v312 = vmul.f32 %v87, %v143
    %v313 = vmul.f32 %v88, %v144
    %v314 = vmul.f32 %v89, %v145
    %v315 = vmul.f32 %v90, %v146
    %v316 = vmul.f32 %v91, %v147
    %v317 = vmul.f32 %v92, %v148
    %v318 = vmul.f32 %v93, %v149
    %v319 = vmul.f32 %v94, %v150
    %v320 = vsel %vm46, %v312, 0.0
    %321 = vadd.xlane.f32.xlu0 %v320
    %v322 = vpop.xlane.xlu0 %321
    %v323 = vsel %vm46, %v313, 0.0
    %324 = vadd.xlane.f32.xlu0 %v323
    %v325 = vpop.xlane.xlu0 %324
    %v326 = vsel %vm46, %v314, 0.0
    %327 = vadd.xlane.f32.xlu0 %v326
    %v328 = vpop.xlane.xlu0 %327
    %v329 = vsel %vm46, %v315, 0.0
    %330 = vadd.xlane.f32.xlu0 %v329
    %v331 = vpop.xlane.xlu0 %330
    %v332 = vsel %vm46, %v316, 0.0
    %333 = vadd.xlane.f32.xlu0 %v332
    %v334 = vpop.xlane.xlu0 %333
    %v335 = vsel %vm46, %v317, 0.0
    %336 = vadd.xlane.f32.xlu0 %v335
    %v337 = vpop.xlane.xlu0 %336
    %v338 = vsel %vm46, %v318, 0.0
    %339 = vadd.xlane.f32.xlu0 %v338
    %v340 = vpop.xlane.xlu0 %339
    %v341 = vsel %vm46, %v319, 0.0
    %342 = vadd.xlane.f32.xlu0 %v341
    %v343 = vpop.xlane.xlu0 %342
    %v344 = vmul.f32 %v322, 10.0
    %v345 = vmul.f32 %v325, 10.0
    %v346 = vmul.f32 %v328, 10.0
    %v347 = vmul.f32 %v331, 10.0
    %v348 = vmul.f32 %v334, 10.0
    %v349 = vmul.f32 %v337, 10.0
    %v350 = vmul.f32 %v340, 10.0
    %v351 = vmul.f32 %v343, 10.0
    %v352 = vsel %vm46, %v304, -inf
    %353 = vmax.xlane.f32.xlu0 %v352
    %v354 = vpop.xlane.xlu0 %353
    %v355 = vsel %vm46, %v305, -inf
    %356 = vmax.xlane.f32.xlu0 %v355
    %v357 = vpop.xlane.xlu0 %356
    %v358 = vsel %vm46, %v306, -inf
    %359 = vmax.xlane.f32.xlu0 %v358
    %v360 = vpop.xlane.xlu0 %359
    %v361 = vsel %vm46, %v307, -inf
    %362 = vmax.xlane.f32.xlu0 %v361
    %v363 = vpop.xlane.xlu0 %362
    %v364 = vsel %vm46, %v308, -inf
    %365 = vmax.xlane.f32.xlu0 %v364
    %v366 = vpop.xlane.xlu0 %365
    %v367 = vsel %vm46, %v309, -inf
    %368 = vmax.xlane.f32.xlu0 %v367
    %v369 = vpop.xlane.xlu0 %368
    %v370 = vsel %vm46, %v310, -inf
    %371 = vmax.xlane.f32.xlu0 %v370
    %v372 = vpop.xlane.xlu0 %371
    %v373 = vsel %vm46, %v311, -inf
    %374 = vmax.xlane.f32.xlu0 %v373
    %v375 = vpop.xlane.xlu0 %374
    %v376 = vsub.f32 %v304, %v354
    %v377 = vsub.f32 %v305, %v357
    %v378 = vsub.f32 %v306, %v360
    %v379 = vsub.f32 %v307, %v363
    %v380 = vsub.f32 %v308, %v366
    %v381 = vsub.f32 %v309, %v369
    %v382 = vsub.f32 %v310, %v372
    %v383 = vsub.f32 %v311, %v375
    %v384 = vmul.f32 %v376, 1.442695
    %v385 = vpow.pop %v384
    %v386 = vmul.f32 %v377, 1.442695
    %v387 = vpow.pop %v386
    %v388 = vmul.f32 %v378, 1.442695
    %v389 = vpow.pop %v388
    %v390 = vmul.f32 %v379, 1.442695
    %v391 = vpow.pop %v390
    %v392 = vmul.f32 %v380, 1.442695
    %v393 = vpow.pop %v392
    %v394 = vmul.f32 %v381, 1.442695
    %v395 = vpow.pop %v394
    %v396 = vmul.f32 %v382, 1.442695
    %v397 = vpow.pop %v396
    %v398 = vmul.f32 %v383, 1.442695
    %v399 = vpow.pop %v398
    %v400 = vsel %vm46, %v385, 0.0
    %401 = vadd.xlane.f32.xlu0 %v400
    %v402 = vpop.xlane.xlu0 %401
    %v403 = vsel %vm46, %v387, 0.0
    %404 = vadd.xlane.f32.xlu0 %v403
    %v405 = vpop.xlane.xlu0 %404
    %v406 = vsel %vm46, %v389, 0.0
    %407 = vadd.xlane.f32.xlu0 %v406
    %v408 = vpop.xlane.xlu0 %407
    %v409 = vsel %vm46, %v391, 0.0
    %410 = vadd.xlane.f32.xlu0 %v409
    %v411 = vpop.xlane.xlu0 %410
    %v412 = vsel %vm46, %v393, 0.0
    %413 = vadd.xlane.f32.xlu0 %v412
    %v414 = vpop.xlane.xlu0 %413
    %v415 = vsel %vm46, %v395, 0.0
    %416 = vadd.xlane.f32.xlu0 %v415
    %v417 = vpop.xlane.xlu0 %416
    %v418 = vsel %vm46, %v397, 0.0
    %419 = vadd.xlane.f32.xlu0 %v418
    %v420 = vpop.xlane.xlu0 %419
    %v421 = vsel %vm46, %v399, 0.0
    %422 = vadd.xlane.f32.xlu0 %v421
    %v423 = vpop.xlane.xlu0 %422
    %v424 = vlog2.pop %v402
    %v425 = vmul.f32 %v424, 0.6931472
    %v426 = vlog2.pop %v405
    %v427 = vmul.f32 %v426, 0.6931472
    %v428 = vlog2.pop %v408
    %v429 = vmul.f32 %v428, 0.6931472
    %v430 = vlog2.pop %v411
    %v431 = vmul.f32 %v430, 0.6931472
    %v432 = vlog2.pop %v414
    %v433 = vmul.f32 %v432, 0.6931472
    %v434 = vlog2.pop %v417
    %v435 = vmul.f32 %v434, 0.6931472
    %v436 = vlog2.pop %v420
    %v437 = vmul.f32 %v436, 0.6931472
    %v438 = vlog2.pop %v423
    %v439 = vmul.f32 %v438, 0.6931472
    %v440 = vadd.f32 %v425, %v354
    %v441 = vadd.f32 %v427, %v357
    %v442 = vadd.f32 %v429, %v360
    %v443 = vadd.f32 %v431, %v363
    %v444 = vadd.f32 %v433, %v366
    %v445 = vadd.f32 %v435, %v369
    %v446 = vadd.f32 %v437, %v372
    %v447 = vadd.f32 %v439, %v375
    %v448 = vmax.f32 %v352, %v364
    %v449 = vmax.f32 %v355, %v367
    %v450 = vmax.f32 %v358, %v370
    %v451 = vmax.f32 %v361, %v373
    %v452 = vmax.f32 %v448, %v449
    %v453 = vmax.f32 %v450, %v451
    %v454 = vmax.f32 %v452, %v453
    %v455 = vrot.slane %v454, 4
    %v456 = vmax.f32 %v454, %v455
    %v457 = vrot.slane %v456, 2
    %v458 = vmax.f32 %v456, %v457
    %v459 = vrot.slane %v458, 1
    %v460 = vmax.f32 %v458, %v459
    %v461 = vsub.f32 %v304, %v460
    %v462 = vsub.f32 %v305, %v460
    %v463 = vsub.f32 %v306, %v460
    %v464 = vsub.f32 %v307, %v460
    %v465 = vsub.f32 %v308, %v460
    %v466 = vsub.f32 %v309, %v460
    %v467 = vsub.f32 %v310, %v460
    %v468 = vsub.f32 %v311, %v460
    %v469 = vmul.f32 %v461, 1.442695
    %v470 = vpow.pop %v469
    %v471 = vmul.f32 %v462, 1.442695
    %v472 = vpow.pop %v471
    %v473 = vmul.f32 %v463, 1.442695
    %v474 = vpow.pop %v473
    %v475 = vmul.f32 %v464, 1.442695
    %v476 = vpow.pop %v475
    %v477 = vmul.f32 %v465, 1.442695
    %v478 = vpow.pop %v477
    %v479 = vmul.f32 %v466, 1.442695
    %v480 = vpow.pop %v479
    %v481 = vmul.f32 %v467, 1.442695
    %v482 = vpow.pop %v481
    %v483 = vmul.f32 %v468, 1.442695
    %v484 = vpow.pop %v483
    %v485 = vsel %vm46, %v470, 0.0
    %v486 = vsel %vm46, %v472, 0.0
    %v487 = vadd.f32 %v485, %v486
    %v488 = vsel %vm46, %v474, 0.0
    %v489 = vadd.f32 %v487, %v488
    %v490 = vsel %vm46, %v476, 0.0
    %v491 = vadd.f32 %v489, %v490
    %v492 = vsel %vm46, %v478, 0.0
    %v493 = vadd.f32 %v491, %v492
    %v494 = vsel %vm46, %v480, 0.0
    %v495 = vadd.f32 %v493, %v494
    %v496 = vsel %vm46, %v482, 0.0
    %v497 = vadd.f32 %v495, %v496
    %v498 = vsel %vm46, %v484, 0.0
    %v499 = vadd.f32 %v497, %v498
    %v500 = vrot.slane %v499, 4
    %v501 = vadd.f32 %v499, %v500
    %v502 = vrot.slane %v501, 2
    %v503 = vadd.f32 %v501, %v502
    %v504 = vrot.slane %v503, 1
    %v505 = vadd.f32 %v503, %v504
    %v506 = vlog2.pop %v505
    %v507 = vmul.f32 %v506, 0.6931472
    %v508 = vadd.f32 %v507, %v460
    %vm509 = vcmask 7168
    %v510 = vsel %vm509, %v440, 0.0
    %v511 = vsel %vm509, %v441, 0.0
    %v512 = vadd.f32 %v510, %v511
    %v513 = vsel %vm509, %v442, 0.0
    %v514 = vadd.f32 %v512, %v513
    %v515 = vsel %vm509, %v443, 0.0
    %v516 = vadd.f32 %v514, %v515
    %v517 = vsel %vm509, %v444, 0.0
    %v518 = vadd.f32 %v516, %v517
    %v519 = vsel %vm509, %v445, 0.0
    %v520 = vadd.f32 %v518, %v519
    %v521 = vsel %vm509, %v446, 0.0
    %v522 = vadd.f32 %v520, %v521
    %v523 = vsel %vm509, %v447, 0.0
    %v524 = vadd.f32 %v522, %v523
    %525 = vadd.xlane.f32.xlu0 %v524
    %v526 = vpop.xlane.xlu0 %525
    %v527 = vrot.slane %v526, 4
    %v528 = vadd.f32 %v526, %v527
    %v529 = vrot.slane %v528, 2
    %v530 = vadd.f32 %v528, %v529
    %v531 = vrot.slane %v530, 1
    %v532 = vadd.f32 %v530, %v531
    %s533 = vtos %v532
    %v534 = vrcp.pop 64.0
    %s535 = vtos %v534
    %s536 = smul.f32 %s533, %s535
    %s537 = smul.f32 %s536, 0.5
    %vm538 = vcmask 516096
    %v539 = vsel %vm538, %v508, 0.0
    %540 = vadd.xlane.f32.xlu0 %v539
    %v541 = vpop.xlane.xlu0 %540
    %v542 = vrot.slane %v541, 4
    %v543 = vadd.f32 %v541, %v542
    %v544 = vrot.slane %v543, 2
    %v545 = vadd.f32 %v543, %v544
    %v546 = vrot.slane %v545, 1
    %v547 = vadd.f32 %v545, %v546
    %s548 = vtos %v547
    %v549 = vrcp.pop 64.0
    %s550 = vtos %v549
    %s551 = smul.f32 %s548, %s550
    %s552 = smul.f32 %s551, 0.5
    %s553 = sadd.f32 %s537, %s552
    %v554 = vsel %vm509, %v344, 0.0
    %v555 = vsel %vm509, %v345, 0.0
    %v556 = vadd.f32 %v554, %v555
    %v557 = vsel %vm509, %v346, 0.0
    %v558 = vadd.f32 %v556, %v557
    %v559 = vsel %vm509, %v347, 0.0
    %v560 = vadd.f32 %v558, %v559
    %v561 = vsel %vm509, %v348, 0.0
    %v562 = vadd.f32 %v560, %v561
    %v563 = vsel %vm509, %v349, 0.0
    %v564 = vadd.f32 %v562, %v563
    %v565 = vsel %vm509, %v350, 0.0
    %v566 = vadd.f32 %v564, %v565
    %v567 = vsel %vm509, %v351, 0.0
    %v568 = vadd.f32 %v566, %v567
    %569 = vadd.xlane.f32.xlu0 %v568
    %v570 = vpop.xlane.xlu0 %569
    %v571 = vrot.slane %v570, 4
    %v572 = vadd.f32 %v570, %v571
    %v573 = vrot.slane %v572, 2
    %v574 = vadd.f32 %v572, %v573
    %v575 = vrot.slane %v574, 1
    %v576 = vadd.f32 %v574, %v575
    %s577 = vtos %v576
    %v578 = vrcp.pop 64.0
    %s579 = vtos %v578
    %s580 = smul.f32 %s577, %s579
    %s581 = ssub.f32 %s553, %s580
    %v582 = vpack.c.bf16 %v23, %v22
    %v583 = vpack.c.bf16 %v25, %v24
    %v584 = vpack.c.bf16 %v27, %v26
    %v585 = vpack.c.bf16 %v29, %v28
    %v586 = vld [vmem:[%s1] sm:$0xf]
    %v587 = vld [vmem:[%s1 + $0x4] sm:$0xf]
    %v588 = vld [vmem:[%s1 + $0x8] sm:$0xf]
    %v589 = vld [vmem:[%s1 + $0xc] sm:$0xf]
    %v590 = vld [vmem:[%s1 + $0x10] sm:$0xf]
    %v591 = vld [vmem:[%s1 + $0x14] sm:$0xf]
    %v592 = vld [vmem:[%s1 + $0x18] sm:$0xf]
    %v593 = vld [vmem:[%s1 + $0x1c] sm:$0xf]
    %v594 = vld [vmem:[%s1 + $0x20] sm:$0xf]
    %v595 = vld [vmem:[%s1 + $0x24] sm:$0xf]
    %v596 = vld [vmem:[%s1 + $0x28] sm:$0xf]
    %v597 = vld [vmem:[%s1 + $0x2c] sm:$0xf]
    %v598 = vld [vmem:[%s1 + $0x30] sm:$0xf]
    %v599 = vld [vmem:[%s1 + $0x34] sm:$0xf]
    %v600 = vld [vmem:[%s1 + $0x38] sm:$0xf]
    %v601 = vld [vmem:[%s1 + $0x3c] sm:$0xf]
    %v602 = vld [vmem:[%s2] sm:$0x1]
    %v604 = vlaneseq
    %v605 = vshrl.u32 %v604, 7
    %v606 = vsub.s32 0, %v605
    %v607 = vrot.slane %v602, %v606
    %v625 = vunpack.c.l.b16 %v586
    %v626 = vunpack.c.l.b16 %v587
    %v627 = vunpack.c.l.b16 %v588
    %v628 = vunpack.c.l.b16 %v589
    %v629 = vunpack.c.l.b16 %v590
    %v630 = vunpack.c.l.b16 %v591
    %v631 = vunpack.c.l.b16 %v592
    %v632 = vunpack.c.l.b16 %v593
    %v633 = vunpack.c.l.b16 %v594
    %v634 = vunpack.c.l.b16 %v595
    %v635 = vunpack.c.l.b16 %v596
    %v636 = vunpack.c.l.b16 %v597
    %v637 = vunpack.c.l.b16 %v598
    %v638 = vunpack.c.l.b16 %v599
    %v639 = vunpack.c.l.b16 %v600
    %v640 = vunpack.c.l.b16 %v601
    %v641 = vpack.c.b16 %v626, %v625
    %v642 = vpack.c.b16 %v628, %v627
    %v643 = vpack.c.b16 %v630, %v629
    %v644 = vpack.c.b16 %v632, %v631
    %v645 = vpack.c.b16 %v634, %v633
    %v646 = vpack.c.b16 %v636, %v635
    %v647 = vpack.c.b16 %v638, %v637
    %v648 = vpack.c.b16 %v640, %v639
    %657 = vmatprep.subr.bf16.mxu0 0
    %658 = vmatpush1.bf16.msra.mxu0 %v641
    %659 = vmatprep.subr.bf16.mxu0 0
    %660 = vmatpush1.bf16.msra.mxu0 %v642
    %661 = vmatprep.subr.bf16.mxu0 0
    %662 = vmatpush1.bf16.msra.mxu0 %v643
    %663 = vmatprep.subr.bf16.mxu0 0
    %664 = vmatpush1.bf16.msra.mxu0 %v644
    %665 = vmatprep.subr.bf16.mxu0 0
    %666 = vmatpush1.bf16.msra.mxu0 %v645
    %667 = vmatprep.subr.bf16.mxu0 0
    %668 = vmatpush1.bf16.msra.mxu0 %v646
    %669 = vmatprep.subr.bf16.mxu0 0
    %670 = vmatpush1.bf16.msra.mxu0 %v647
    %671 = vmatprep.subr.bf16.mxu0 0
    %672 = vmatpush1.bf16.msra.mxu0 %v648
    %673 = vmatprep.subr.bf16.mxu0 0
    %674 = vmatpush1.bf16.msra.mxu0 0
    %675 = vmatprep.subr.bf16.mxu0 0
    %676 = vmatpush1.bf16.msra.mxu0 0
    %677 = vmatprep.subr.bf16.mxu0 0
    %678 = vmatpush1.bf16.msra.mxu0 0
    %679 = vmatprep.subr.bf16.mxu0 0
    %680 = vmatpush1.bf16.msra.mxu0 0
    %681 = vmatprep.subr.bf16.mxu0 0
    %682 = vmatpush1.bf16.msra.mxu0 0
    %683 = vmatprep.subr.bf16.mxu0 0
    %684 = vmatpush1.bf16.msra.mxu0 0
    %685 = vmatprep.subr.bf16.mxu0 0
    %686 = vmatpush1.bf16.msra.mxu0 0
    %687 = vmatprep.subr.bf16.mxu0 0
    %688 = vmatpush1.bf16.msra.mxu0 0
    %689 = vmatprep.mubr.bf16.mxu0 0
    %690 = vmatmul.mubr.bf16.gmra.mrb[0].mxu0 %v582
    %v691 = vpop.f32.mrb[0].mxu0
    %v692 = vadd.f32 %v607, %v691
    %v693 = vpop.f32.mrb[0].mxu0
    %v694 = vpop.f32.mrb[0].mxu0
    %v695 = vadd.f32 %v607, %v694
    %v696 = vpop.f32.mrb[0].mxu0
    %697 = vmatprep.mubr.bf16.mxu0 0
    %698 = vmatmul.mubr.bf16.gmra.mrb[0].mxu0 %v583
    %v699 = vpop.f32.mrb[0].mxu0
    %v700 = vadd.f32 %v607, %v699
    %v701 = vpop.f32.mrb[0].mxu0
    %v702 = vpop.f32.mrb[0].mxu0
    %v703 = vadd.f32 %v607, %v702
    %v704 = vpop.f32.mrb[0].mxu0
    %705 = vmatprep.mubr.bf16.mxu0 0
    %706 = vmatmul.mubr.bf16.gmra.mrb[0].mxu0 %v584
    %v707 = vpop.f32.mrb[0].mxu0
    %v708 = vadd.f32 %v607, %v707
    %v709 = vpop.f32.mrb[0].mxu0
    %v710 = vpop.f32.mrb[0].mxu0
    %v711 = vadd.f32 %v607, %v710
    %v712 = vpop.f32.mrb[0].mxu0
    %713 = vmatprep.mubr.bf16.mxu0 0
    %714 = vmatmul.mubr.bf16.gmra.mrb[0].mxu0 %v585
    %v715 = vpop.f32.mrb[0].mxu0
    %v716 = vadd.f32 %v607, %v715
    %v717 = vpop.f32.mrb[0].mxu0
    %v718 = vpop.f32.mrb[0].mxu0
    %v719 = vadd.f32 %v607, %v718
    %v720 = vpop.f32.mrb[0].mxu0
    %721 = vdwg.mxu0
    %v722 = vld [vmem:[%s3] sm:$0xff]
    %v723 = vld [vmem:[%s3 + $0x8] sm:$0xff]
    %v724 = vld [vmem:[%s3 + $0x10] sm:$0xff]
    %v725 = vld [vmem:[%s3 + $0x18] sm:$0xff]
    %v726 = vld [vmem:[%s3 + $0x20] sm:$0xff]
    %v727 = vld [vmem:[%s3 + $0x28] sm:$0xff]
    %v728 = vld [vmem:[%s3 + $0x30] sm:$0xff]
    %v729 = vld [vmem:[%s3 + $0x38] sm:$0xff]
    %v730 = vlaneseq
    %v731 = vand.u32 %v730, 127
    %732 = vset.pattern.permute.xlu0 0
    %733 = vperm.xlu0 %732, %v722
    %v734 = vpop.permute.xlu0 %733
    %735 = vset.pattern.permute.xlu0 0
    %736 = vperm.xlu0 %735, %v723
    %v737 = vpop.permute.xlu0 %736
    %738 = vset.pattern.permute.xlu0 0
    %739 = vperm.xlu0 %738, %v724
    %v740 = vpop.permute.xlu0 %739
    %741 = vset.pattern.permute.xlu0 0
    %742 = vperm.xlu0 %741, %v725
    %v743 = vpop.permute.xlu0 %742
    %744 = vset.pattern.permute.xlu0 0
    %745 = vperm.xlu0 %744, %v726
    %v746 = vpop.permute.xlu0 %745
    %747 = vset.pattern.permute.xlu0 0
    %748 = vperm.xlu0 %747, %v727
    %v749 = vpop.permute.xlu0 %748
    %750 = vset.pattern.permute.xlu0 0
    %751 = vperm.xlu0 %750, %v728
    %v752 = vpop.permute.xlu0 %751
    %753 = vset.pattern.permute.xlu0 0
    %754 = vperm.xlu0 %753, %v729
    %v755 = vpop.permute.xlu0 %754
    %vm756 = vcmp.eq.s32.totalorder %v731, %v734
    %vm757 = vcmp.eq.s32.totalorder %v731, %v737
    %vm758 = vcmp.eq.s32.totalorder %v731, %v740
    %vm759 = vcmp.eq.s32.totalorder %v731, %v743
    %vm760 = vcmp.eq.s32.totalorder %v731, %v746
    %vm761 = vcmp.eq.s32.totalorder %v731, %v749
    %vm762 = vcmp.eq.s32.totalorder %v731, %v752
    %vm763 = vcmp.eq.s32.totalorder %v731, %v755
    %v764 = vsel %vm756, %v692, 0.0
    %v765 = vsel %vm757, %v695, 0.0
    %v766 = vsel %vm758, %v700, 0.0
    %v767 = vsel %vm759, %v703, 0.0
    %v768 = vsel %vm760, %v708, 0.0
    %v769 = vsel %vm761, %v711, 0.0
    %v770 = vsel %vm762, %v716, 0.0
    %v771 = vsel %vm763, %v719, 0.0
    %vm772 = vcmask 130048
    %v773 = vsel %vm772, %v764, 0.0
    %774 = vadd.xlane.f32.xlu0 %v773
    %v775 = vpop.xlane.xlu0 %774
    %v776 = vsel %vm772, %v765, 0.0
    %777 = vadd.xlane.f32.xlu0 %v776
    %v778 = vpop.xlane.xlu0 %777
    %v779 = vsel %vm772, %v766, 0.0
    %780 = vadd.xlane.f32.xlu0 %v779
    %v781 = vpop.xlane.xlu0 %780
    %v782 = vsel %vm772, %v767, 0.0
    %783 = vadd.xlane.f32.xlu0 %v782
    %v784 = vpop.xlane.xlu0 %783
    %v785 = vsel %vm772, %v768, 0.0
    %786 = vadd.xlane.f32.xlu0 %v785
    %v787 = vpop.xlane.xlu0 %786
    %v788 = vsel %vm772, %v769, 0.0
    %789 = vadd.xlane.f32.xlu0 %v788
    %v790 = vpop.xlane.xlu0 %789
    %v791 = vsel %vm772, %v770, 0.0
    %792 = vadd.xlane.f32.xlu0 %v791
    %v793 = vpop.xlane.xlu0 %792
    %v794 = vsel %vm772, %v771, 0.0
    %795 = vadd.xlane.f32.xlu0 %v794
    %v796 = vpop.xlane.xlu0 %795
    %v797 = vsel %vm772, %v692, -inf
    %798 = vmax.xlane.f32.xlu0 %v797
    %v799 = vpop.xlane.xlu0 %798
    %v800 = vsel %vm772, %v695, -inf
    %801 = vmax.xlane.f32.xlu0 %v800
    %v802 = vpop.xlane.xlu0 %801
    %v803 = vsel %vm772, %v700, -inf
    %804 = vmax.xlane.f32.xlu0 %v803
    %v805 = vpop.xlane.xlu0 %804
    %v806 = vsel %vm772, %v703, -inf
    %807 = vmax.xlane.f32.xlu0 %v806
    %v808 = vpop.xlane.xlu0 %807
    %v809 = vsel %vm772, %v708, -inf
    %810 = vmax.xlane.f32.xlu0 %v809
    %v811 = vpop.xlane.xlu0 %810
    %v812 = vsel %vm772, %v711, -inf
    %813 = vmax.xlane.f32.xlu0 %v812
    %v814 = vpop.xlane.xlu0 %813
    %v815 = vsel %vm772, %v716, -inf
    %816 = vmax.xlane.f32.xlu0 %v815
    %v817 = vpop.xlane.xlu0 %816
    %v818 = vsel %vm772, %v719, -inf
    %819 = vmax.xlane.f32.xlu0 %v818
    %v820 = vpop.xlane.xlu0 %819
    %v821 = vsub.f32 %v692, %v799
    %v822 = vsub.f32 %v695, %v802
    %v823 = vsub.f32 %v700, %v805
    %v824 = vsub.f32 %v703, %v808
    %v825 = vsub.f32 %v708, %v811
    %v826 = vsub.f32 %v711, %v814
    %v827 = vsub.f32 %v716, %v817
    %v828 = vsub.f32 %v719, %v820
    %v829 = vmul.f32 %v821, 1.442695
    %v830 = vpow.pop %v829
    %v831 = vmul.f32 %v822, 1.442695
    %v832 = vpow.pop %v831
    %v833 = vmul.f32 %v823, 1.442695
    %v834 = vpow.pop %v833
    %v835 = vmul.f32 %v824, 1.442695
    %v836 = vpow.pop %v835
    %v837 = vmul.f32 %v825, 1.442695
    %v838 = vpow.pop %v837
    %v839 = vmul.f32 %v826, 1.442695
    %v840 = vpow.pop %v839
    %v841 = vmul.f32 %v827, 1.442695
    %v842 = vpow.pop %v841
    %v843 = vmul.f32 %v828, 1.442695
    %v844 = vpow.pop %v843
    %v845 = vsel %vm772, %v830, 0.0
    %846 = vadd.xlane.f32.xlu0 %v845
    %v847 = vpop.xlane.xlu0 %846
    %v848 = vsel %vm772, %v832, 0.0
    %849 = vadd.xlane.f32.xlu0 %v848
    %v850 = vpop.xlane.xlu0 %849
    %v851 = vsel %vm772, %v834, 0.0
    %852 = vadd.xlane.f32.xlu0 %v851
    %v853 = vpop.xlane.xlu0 %852
    %v854 = vsel %vm772, %v836, 0.0
    %855 = vadd.xlane.f32.xlu0 %v854
    %v856 = vpop.xlane.xlu0 %855
    %v857 = vsel %vm772, %v838, 0.0
    %858 = vadd.xlane.f32.xlu0 %v857
    %v859 = vpop.xlane.xlu0 %858
    %v860 = vsel %vm772, %v840, 0.0
    %861 = vadd.xlane.f32.xlu0 %v860
    %v862 = vpop.xlane.xlu0 %861
    %v863 = vsel %vm772, %v842, 0.0
    %864 = vadd.xlane.f32.xlu0 %v863
    %v865 = vpop.xlane.xlu0 %864
    %v866 = vsel %vm772, %v844, 0.0
    %867 = vadd.xlane.f32.xlu0 %v866
    %v868 = vpop.xlane.xlu0 %867
    %v869 = vlog2.pop %v847
    %v870 = vmul.f32 %v869, 0.6931472
    %v871 = vlog2.pop %v850
    %v872 = vmul.f32 %v871, 0.6931472
    %v873 = vlog2.pop %v853
    %v874 = vmul.f32 %v873, 0.6931472
    %v875 = vlog2.pop %v856
    %v876 = vmul.f32 %v875, 0.6931472
    %v877 = vlog2.pop %v859
    %v878 = vmul.f32 %v877, 0.6931472
    %v879 = vlog2.pop %v862
    %v880 = vmul.f32 %v879, 0.6931472
    %v881 = vlog2.pop %v865
    %v882 = vmul.f32 %v881, 0.6931472
    %v883 = vlog2.pop %v868
    %v884 = vmul.f32 %v883, 0.6931472
    %v885 = vadd.f32 %v870, %v799
    %v886 = vadd.f32 %v872, %v802
    %v887 = vadd.f32 %v874, %v805
    %v888 = vadd.f32 %v876, %v808
    %v889 = vadd.f32 %v878, %v811
    %v890 = vadd.f32 %v880, %v814
    %v891 = vadd.f32 %v882, %v817
    %v892 = vadd.f32 %v884, %v820
    %v893 = vsub.f32 %v885, %v775
    %v894 = vsub.f32 %v886, %v778
    %v895 = vsub.f32 %v887, %v781
    %v896 = vsub.f32 %v888, %v784
    %v897 = vsub.f32 %v889, %v787
    %v898 = vsub.f32 %v890, %v790
    %v899 = vsub.f32 %v891, %v793
    %v900 = vsub.f32 %v892, %v796
    %v901 = vsel %vm509, %v893, 0.0
    %v902 = vsel %vm509, %v894, 0.0
    %v903 = vadd.f32 %v901, %v902
    %v904 = vsel %vm509, %v895, 0.0
    %v905 = vadd.f32 %v903, %v904
    %v906 = vsel %vm509, %v896, 0.0
    %v907 = vadd.f32 %v905, %v906
    %v908 = vsel %vm509, %v897, 0.0
    %v909 = vadd.f32 %v907, %v908
    %v910 = vsel %vm509, %v898, 0.0
    %v911 = vadd.f32 %v909, %v910
    %v912 = vsel %vm509, %v899, 0.0
    %v913 = vadd.f32 %v911, %v912
    %v914 = vsel %vm509, %v900, 0.0
    %v915 = vadd.f32 %v913, %v914
    %916 = vadd.xlane.f32.xlu0 %v915
    %v917 = vpop.xlane.xlu0 %916
    %v918 = vrot.slane %v917, 4
    %v919 = vadd.f32 %v917, %v918
    %v920 = vrot.slane %v919, 2
    %v921 = vadd.f32 %v919, %v920
    %v922 = vrot.slane %v921, 1
    %v923 = vadd.f32 %v921, %v922
    %s924 = vtos %v923
    %v925 = vrcp.pop 64.0
    %s926 = vtos %v925
    %s927 = smul.f32 %s924, %s926
    %vm928 = vcmp.ge.f32.partialorder %v692, %v799
    %vm929 = vcmp.ge.f32.partialorder %v695, %v802
    %vm930 = vcmp.ge.f32.partialorder %v700, %v805
    %vm931 = vcmp.ge.f32.partialorder %v703, %v808
    %vm932 = vcmp.ge.f32.partialorder %v708, %v811
    %vm933 = vcmp.ge.f32.partialorder %v711, %v814
    %vm934 = vcmp.ge.f32.partialorder %v716, %v817
    %vm935 = vcmp.ge.f32.partialorder %v719, %v820
    %v936 = vsel %vm928, %v731, 16
    %v937 = vsel %vm929, %v731, 16
    %v938 = vsel %vm930, %v731, 16
    %v939 = vsel %vm931, %v731, 16
    %v940 = vsel %vm932, %v731, 16
    %v941 = vsel %vm933, %v731, 16
    %v942 = vsel %vm934, %v731, 16
    %v943 = vsel %vm935, %v731, 16
    %v944 = vsel %vm772, %v936, 2147483647
    %v945 = vand.u32 %v944, 65535
    %v946 = vshra.s32 %v944, 16
    %v947 = vcvt.s32.f32 %v945
    %v948 = vcvt.s32.f32 %v946
    %949 = vmin.xlane.f32.xlu0 %v948
    %v950 = vpop.xlane.xlu0 %949
    %vm951 = vcmp.eq.f32.partialorder %v948, %v950
    %v952 = vsel %vm951, %v947, inf
    %953 = vmin.xlane.f32.xlu0 %v952
    %v954 = vpop.xlane.xlu0 %953
    %v955 = vcvt.f32.s32 %v954
    %v956 = vcvt.f32.s32 %v950
    %v957 = vshll.u32 %v956, 16
    %v958 = vadd.s32 %v957, %v955
    %v959 = vsel %vm772, %v937, 2147483647
    %v960 = vand.u32 %v959, 65535
    %v961 = vshra.s32 %v959, 16
    %v962 = vcvt.s32.f32 %v960
    %v963 = vcvt.s32.f32 %v961
    %964 = vmin.xlane.f32.xlu0 %v963
    %v965 = vpop.xlane.xlu0 %964
    %vm966 = vcmp.eq.f32.partialorder %v963, %v965
    %v967 = vsel %vm966, %v962, inf
    %968 = vmin.xlane.f32.xlu0 %v967
    %v969 = vpop.xlane.xlu0 %968
    %v970 = vcvt.f32.s32 %v969
    %v971 = vcvt.f32.s32 %v965
    %v972 = vshll.u32 %v971, 16
    %v973 = vadd.s32 %v972, %v970
    %v974 = vsel %vm772, %v938, 2147483647
    %v975 = vand.u32 %v974, 65535
    %v976 = vshra.s32 %v974, 16
    %v977 = vcvt.s32.f32 %v975
    %v978 = vcvt.s32.f32 %v976
    %979 = vmin.xlane.f32.xlu0 %v978
    %v980 = vpop.xlane.xlu0 %979
    %vm981 = vcmp.eq.f32.partialorder %v978, %v980
    %v982 = vsel %vm981, %v977, inf
    %983 = vmin.xlane.f32.xlu0 %v982
    %v984 = vpop.xlane.xlu0 %983
    %v985 = vcvt.f32.s32 %v984
    %v986 = vcvt.f32.s32 %v980
    %v987 = vshll.u32 %v986, 16
    %v988 = vadd.s32 %v987, %v985
    %v989 = vsel %vm772, %v939, 2147483647
    %v990 = vand.u32 %v989, 65535
    %v991 = vshra.s32 %v989, 16
    %v992 = vcvt.s32.f32 %v990
    %v993 = vcvt.s32.f32 %v991
    %994 = vmin.xlane.f32.xlu0 %v993
    %v995 = vpop.xlane.xlu0 %994
    %vm996 = vcmp.eq.f32.partialorder %v993, %v995
    %v997 = vsel %vm996, %v992, inf
    %998 = vmin.xlane.f32.xlu0 %v997
    %v999 = vpop.xlane.xlu0 %998
    %v1000 = vcvt.f32.s32 %v999
    %v1001 = vcvt.f32.s32 %v995
    %v1002 = vshll.u32 %v1001, 16
    %v1003 = vadd.s32 %v1002, %v1000
    %v1004 = vsel %vm772, %v940, 2147483647
    %v1005 = vand.u32 %v1004, 65535
    %v1006 = vshra.s32 %v1004, 16
    %v1007 = vcvt.s32.f32 %v1005
    %v1008 = vcvt.s32.f32 %v1006
    %1009 = vmin.xlane.f32.xlu0 %v1008
    %v1010 = vpop.xlane.xlu0 %1009
    %vm1011 = vcmp.eq.f32.partialorder %v1008, %v1010
    %v1012 = vsel %vm1011, %v1007, inf
    %1013 = vmin.xlane.f32.xlu0 %v1012
    %v1014 = vpop.xlane.xlu0 %1013
    %v1015 = vcvt.f32.s32 %v1014
    %v1016 = vcvt.f32.s32 %v1010
    %v1017 = vshll.u32 %v1016, 16
    %v1018 = vadd.s32 %v1017, %v1015
    %v1019 = vsel %vm772, %v941, 2147483647
    %v1020 = vand.u32 %v1019, 65535
    %v1021 = vshra.s32 %v1019, 16
    %v1022 = vcvt.s32.f32 %v1020
    %v1023 = vcvt.s32.f32 %v1021
    %1024 = vmin.xlane.f32.xlu0 %v1023
    %v1025 = vpop.xlane.xlu0 %1024
    %vm1026 = vcmp.eq.f32.partialorder %v1023, %v1025
    %v1027 = vsel %vm1026, %v1022, inf
    %1028 = vmin.xlane.f32.xlu0 %v1027
    %v1029 = vpop.xlane.xlu0 %1028
    %v1030 = vcvt.f32.s32 %v1029
    %v1031 = vcvt.f32.s32 %v1025
    %v1032 = vshll.u32 %v1031, 16
    %v1033 = vadd.s32 %v1032, %v1030
    %v1034 = vsel %vm772, %v942, 2147483647
    %v1035 = vand.u32 %v1034, 65535
    %v1036 = vshra.s32 %v1034, 16
    %v1037 = vcvt.s32.f32 %v1035
    %v1038 = vcvt.s32.f32 %v1036
    %1039 = vmin.xlane.f32.xlu0 %v1038
    %v1040 = vpop.xlane.xlu0 %1039
    %vm1041 = vcmp.eq.f32.partialorder %v1038, %v1040
    %v1042 = vsel %vm1041, %v1037, inf
    %1043 = vmin.xlane.f32.xlu0 %v1042
    %v1044 = vpop.xlane.xlu0 %1043
    %v1045 = vcvt.f32.s32 %v1044
    %v1046 = vcvt.f32.s32 %v1040
    %v1047 = vshll.u32 %v1046, 16
    %v1048 = vadd.s32 %v1047, %v1045
    %v1049 = vsel %vm772, %v943, 2147483647
    %v1050 = vand.u32 %v1049, 65535
    %v1051 = vshra.s32 %v1049, 16
    %v1052 = vcvt.s32.f32 %v1050
    %v1053 = vcvt.s32.f32 %v1051
    %1054 = vmin.xlane.f32.xlu0 %v1053
    %v1055 = vpop.xlane.xlu0 %1054
    %vm1056 = vcmp.eq.f32.partialorder %v1053, %v1055
    %v1057 = vsel %vm1056, %v1052, inf
    %1058 = vmin.xlane.f32.xlu0 %v1057
    %v1059 = vpop.xlane.xlu0 %1058
    %v1060 = vcvt.f32.s32 %v1059
    %v1061 = vcvt.f32.s32 %v1055
    %v1062 = vshll.u32 %v1061, 16
    %v1063 = vadd.s32 %v1062, %v1060
    %vm1064 = vcmp.eq.s32.totalorder %v958, %v722
    %vm1065 = vcmp.eq.s32.totalorder %v973, %v723
    %vm1066 = vcmp.eq.s32.totalorder %v988, %v724
    %vm1067 = vcmp.eq.s32.totalorder %v1003, %v725
    %vm1068 = vcmp.eq.s32.totalorder %v1018, %v726
    %vm1069 = vcmp.eq.s32.totalorder %v1033, %v727
    %vm1070 = vcmp.eq.s32.totalorder %v1048, %v728
    %vm1071 = vcmp.eq.s32.totalorder %v1063, %v729
    %v1072 = vsel %vm1064, 1, 0
    %v1073 = vsel %vm1065, 1, 0
    %v1074 = vsel %vm1066, 1, 0
    %v1075 = vsel %vm1067, 1, 0
    %v1076 = vsel %vm1068, 1, 0
    %v1077 = vsel %vm1069, 1, 0
    %v1078 = vsel %vm1070, 1, 0
    %v1079 = vsel %vm1071, 1, 0
    %v1080 = vcvt.s32.f32 %v1072
    %v1081 = vcvt.s32.f32 %v1073
    %v1082 = vcvt.s32.f32 %v1074
    %v1083 = vcvt.s32.f32 %v1075
    %v1084 = vcvt.s32.f32 %v1076
    %v1085 = vcvt.s32.f32 %v1077
    %v1086 = vcvt.s32.f32 %v1078
    %v1087 = vcvt.s32.f32 %v1079
    %v1088 = vsel %vm509, %v1080, 0.0
    %v1089 = vsel %vm509, %v1081, 0.0
    %v1090 = vadd.f32 %v1088, %v1089
    %v1091 = vsel %vm509, %v1082, 0.0
    %v1092 = vadd.f32 %v1090, %v1091
    %v1093 = vsel %vm509, %v1083, 0.0
    %v1094 = vadd.f32 %v1092, %v1093
    %v1095 = vsel %vm509, %v1084, 0.0
    %v1096 = vadd.f32 %v1094, %v1095
    %v1097 = vsel %vm509, %v1085, 0.0
    %v1098 = vadd.f32 %v1096, %v1097
    %v1099 = vsel %vm509, %v1086, 0.0
    %v1100 = vadd.f32 %v1098, %v1099
    %v1101 = vsel %vm509, %v1087, 0.0
    %v1102 = vadd.f32 %v1100, %v1101
    %1103 = vadd.xlane.f32.xlu0 %v1102
    %v1104 = vpop.xlane.xlu0 %1103
    %v1105 = vrot.slane %v1104, 4
    %v1106 = vadd.f32 %v1104, %v1105
    %v1107 = vrot.slane %v1106, 2
    %v1108 = vadd.f32 %v1106, %v1107
    %v1109 = vrot.slane %v1108, 1
    %v1110 = vadd.f32 %v1108, %v1109
    %s1111 = vtos %v1110
    %v1112 = vrcp.pop 64.0
    %s1113 = vtos %v1112
    %s1114 = smul.f32 %s1111, %s1113
    %s1115 = sadd.f32 %s581, %s927
    %v1116 = vstv %s1115
    %vm1117 = vcmask 0
    %1118 = vst.msk [vmem:[#allocation2] sm:$0x1] %vm1117, %v1116
    %v1119 = vstv %s1114
    %1120 = vst.msk [vmem:[#allocation4] sm:$0x1] %vm1117, %v1119
    // Predicated region
    $region18: #{direct_clr_forward.3} parent=1 // pred_check
      _
    $region19: #{direct_clr_forward.3} parent=1 // pred_check_branch
      %1122 = sbr.rel (0) target = $region21
    $region20: #{direct_clr_forward.3} parent=1 // pred_region
      %s1124 = ssub.s32 16, 16
      %1125 = vsyncadd [#allocation3], %s1124
      %s1127 = sshll.u32 [#allocation2], 4
      %s1128 = int_to_ptr.vmem [resolvable:$true] %s1127
      %1130 = dma.vmem_to_hbm [thread:$0]  %s1128, 16, %s4, [#allocation3]
    $region21: #{direct_clr_forward.3} parent=1 // pred_fallthru
      _
    // Predicated region
    $region22: #{direct_clr_forward.3} parent=1 // pred_check
      _
    $region23: #{direct_clr_forward.3} parent=1 // pred_check_branch
      %1132 = sbr.rel (0) target = $region25
    $region24: #{direct_clr_forward.3} parent=1 // pred_region
      %s1134 = ssub.s32 16, 16
      %1135 = vsyncadd [#allocation5], %s1134
      %s1137 = sshll.u32 [#allocation4], 4
      %s1138 = int_to_ptr.vmem [resolvable:$true] %s1137
      %1140 = dma.vmem_to_hbm [thread:$0]  %s1138, 16, %s5, [#allocation5]
    $region25: #{direct_clr_forward.3} parent=1 // pred_fallthru
      _
    // Predicated region
    $region26: #{direct_clr_forward.3} parent=1 // pred_check
      _
    $region27: #{direct_clr_forward.3} parent=1 // pred_check_branch
      %1142 = sbr.rel (0) target = $region29
    $region28: #{direct_clr_forward.3} parent=1 // pred_region
      %1143 = dma.done [#allocation3], 16
    $region29: #{direct_clr_forward.3} parent=1 // pred_fallthru
      _
    // Predicated region
    $region30: #{direct_clr_forward.3} parent=1 // pred_check
      _
    $region31: #{direct_clr_forward.3} parent=1 // pred_check_branch
      %1145 = sbr.rel (0) target = $region33
    $region32: #{direct_clr_forward.3} parent=1 // pred_region
      %1146 = dma.done [#allocation5], 16
    $region33: #{direct_clr_forward.3} parent=1 // pred_fallthru
      _
    %1147 = vsyncpa [#allocation3], 1
    %1148 = vsyncpa [#allocation5], 1

// kernel: direct_clr_forward.2
$region0: #{direct_clr_forward.2}
  #allocation0 [shape = 'u32[]', space=smem, size = 0x4, offset = 0x4, fixed_abs, tag = 'smem constant byte address 0x4 - core index']
  #allocation1 [shape = 'u32[144,128]{1,0:T(1,128)}', space=vmem, size = 0x12000, scoped, tag = 'internal scratch']
  %s0 = inlined_call_operand.vmem [shape: bf16[128,256,4], index: 0, kind: input, shape index: {}]
  %s1 = inlined_call_operand.vmem [shape: bf16[4,128], index: 1, kind: input, shape index: {}]
  %s2 = inlined_call_operand.vmem [shape: f32[128,128], index: 2, kind: output, shape index: {}]
  %s3 = sld [smem:[#allocation0]]
  $region41: #{direct_clr_forward.2} parent=0
    _
  %s5 = ssub.s32 1, %s3
  %s6 = scalar_select 0, %s5, %s3
  loop: start=0, step=1, limit=6
  $region2: #{direct_clr_forward.2} parent=0 // loop_pre_header
    _
  $region3: #{direct_clr_forward.2} parent=0 // loop_header
    %s8 = sphi 0, %s12
    %p9 = scmp.ge.s32.totalorder %s8, 6
    %s18 = sphi 0, %s20
    %s21 = sphi 0, %s18
    %s22 = sphi 0, %s21
    %s38 = sphi 0, %s22
    %s42 = sphi 0, %s42
    %s44 = sphi 0, %s42
    %s45 = sphi 0, %s44
    %s59 = sphi 0, %s45
    %s65 = sphi 0, %s67
    %s68 = sphi 0, %s65
    %s69 = sphi 0, %s68
    %s85 = sphi 0, %s69
  $region4: #{direct_clr_forward.2} parent=0 // loop_header_branch
    %11 = sbr.rel (%p9) target = $region8
  $region5: #{direct_clr_forward.2} parent=0 // loop_body
    %s13 = ssub.s32 %s8, 1
    %s14 = ssub.s32 %s8, 2
    %s15 = sadd.s32 %s8, 1
    %s16 = ssub.s32 %s8, %s15
    %p17 = scmp.eq.s32.totalorder %s16, 0
    %s19 = sadd.s32 %s18, 1
    %s20 = scalar_select %p17, %s18, %s19
    %p23 = pneg %p17
    %p24 = scmp.eq.s32.totalorder %s8, 3
    %p25 = por %p23, %p24
    %p26 = scmp.ne.s32.totalorder %s18, %s21
    %p27 = scmp.eq.s32.totalorder %s8, 0
    %p28 = por %p26, %p27
    %p29 = scmp.ne.s32.totalorder %s18, %s21
    %p30 = scmp.eq.s32.totalorder %s13, 3
    %p31 = por %p29, %p30
    %p32 = scmp.ne.s32.totalorder %s21, %s22
    %p33 = scmp.eq.s32.totalorder %s13, 0
    %p34 = por %p32, %p33
    %p35 = scmp.ne.s32.totalorder %s21, %s22
    %p36 = scmp.eq.s32.totalorder %s14, 3
    %p37 = por %p35, %p36
    %p39 = scmp.ne.s32.totalorder %s22, %s38
    %p40 = scmp.eq.s32.totalorder %s14, 0
    %p41 = por %p39, %p40
    %s43 = sadd.s32 %s42, 1
    %p46 = scmp.eq.s32.totalorder %s8, 3
    %p47 = scmp.ne.s32.totalorder %s42, %s44
    %p48 = scmp.eq.s32.totalorder %s8, 0
    %p49 = por %p47, %p48
    %p50 = scmp.ne.s32.totalorder %s42, %s44
    %p51 = scmp.eq.s32.totalorder %s13, 3
    %p52 = por %p50, %p51
    %p53 = scmp.ne.s32.totalorder %s44, %s45
    %p54 = scmp.eq.s32.totalorder %s13, 0
    %p55 = por %p53, %p54
    %p56 = scmp.ne.s32.totalorder %s44, %s45
    %p57 = scmp.eq.s32.totalorder %s14, 3
    %p58 = por %p56, %p57
    %p60 = scmp.ne.s32.totalorder %s45, %s59
    %p61 = scmp.eq.s32.totalorder %s14, 0
    %p62 = por %p60, %p61
    %s63 = ssub.s32 %s8, %s15
    %p64 = scmp.eq.s32.totalorder %s63, 0
    %s66 = sadd.s32 %s65, 1
    %s67 = scalar_select %p64, %s65, %s66
    %p70 = pneg %p64
    %p71 = scmp.eq.s32.totalorder %s8, 3
    %p72 = por %p70, %p71
    %p73 = scmp.ne.s32.totalorder %s65, %s68
    %p74 = scmp.eq.s32.totalorder %s8, 0
    %p75 = por %p73, %p74
    %p76 = scmp.ne.s32.totalorder %s65, %s68
    %p77 = scmp.eq.s32.totalorder %s13, 3
    %p78 = por %p76, %p77
    %p79 = scmp.ne.s32.totalorder %s68, %s69
    %p80 = scmp.eq.s32.totalorder %s13, 0
    %p81 = por %p79, %p80
    %p82 = scmp.ne.s32.totalorder %s68, %s69
    %p83 = scmp.eq.s32.totalorder %s14, 3
    %p84 = por %p82, %p83
    %p86 = scmp.ne.s32.totalorder %s69, %s85
    %p87 = scmp.eq.s32.totalorder %s14, 0
    %p88 = por %p86, %p87
    %p89 = scmp.le.s32.totalorder 1, %s8
    %p90 = scmp.lt.s32.totalorder %s8, 5
    %p91 = pnand %p89, %p90
    %p92 = pneg %p91
    // Predicated region
    $region9: #{direct_clr_forward.2} parent=5 // pred_check
      _
    $region10: #{direct_clr_forward.2} parent=5 // pred_check_branch
      %94 = sbr.rel (%p91) target = $region12
    $region11: #{direct_clr_forward.2} parent=5 // pred_region
      %s95 = ssub.s32 %s8, 1
      // Predicated region
      $region13: #{direct_clr_forward.2} parent=11 // pred_check
        %p96 = pneg %p55
      $region14: #{direct_clr_forward.2} parent=11 // pred_check_branch
        %98 = sbr.rel (%p96) target = $region16
      $region15: #{direct_clr_forward.2} parent=11 // pred_region
        _
      $region16: #{direct_clr_forward.2} parent=11 // pred_fallthru
        _
    $region12: #{direct_clr_forward.2} parent=5 // pred_fallthru
      _
    %p99 = scmp.lt.s32.totalorder %s8, 4
    // Predicated region
    $region17: #{direct_clr_forward.2} parent=5 // pred_check
      %p100 = pneg %p99
    $region18: #{direct_clr_forward.2} parent=5 // pred_check_branch
      %102 = sbr.rel (%p100) target = $region20
    $region19: #{direct_clr_forward.2} parent=5 // pred_region
      // Predicated region
      $region21: #{direct_clr_forward.2} parent=19 // pred_check
        %p103 = pneg %p28
      $region22: #{direct_clr_forward.2} parent=19 // pred_check_branch
        %105 = sbr.rel (%p103) target = $region24
      $region23: #{direct_clr_forward.2} parent=19 // pred_region
        %s106 = smul.u32 32, %s8
        %p107 = scmp.lt.s32.totalorder %s106, 127
        %s108 = scalar_select %p107, %s106, 127
        %s109 = smul.addr %s108, 32
        %s110 = smul.addr %s109, 4
        %s111 = scalar_lea.vmem %s0, %s110
        %s112 = smul.u32 32, %s8
      $region24: #{direct_clr_forward.2} parent=19 // pred_fallthru
        _
    $region20: #{direct_clr_forward.2} parent=5 // pred_fallthru
      _
    %p113 = scmp.le.s32.totalorder 1, %s8
    %p114 = scmp.lt.s32.totalorder %s8, 5
    %p115 = pnand %p113, %p114
    %p116 = pneg %p115
    // Predicated region
    $region25: #{direct_clr_forward.2} parent=5 // pred_check
      _
    $region26: #{direct_clr_forward.2} parent=5 // pred_check_branch
      %118 = sbr.rel (%p115) target = $region28
    $region27: #{direct_clr_forward.2} parent=5 // pred_region
      %s119 = ssub.s32 %s8, 1
      %s120 = smul.u32 32, %s13
      %p121 = scmp.lt.s32.totalorder %s120, 127
      %s122 = scalar_select %p121, %s120, 127
      %s123 = smul.addr %s122, 32
      %s124 = smul.addr %s123, 4
      %s125 = scalar_lea.vmem %s0, %s124
      %p126 = pneg %p34
      %p127 = pneg %p31
      %p128 = pneg %p55
      %p129 = pneg %p52
      %p130 = pneg %p81
      %p131 = pneg %p78
      %s132 = smul.u32 4, %s13
      %p133 = scmp.lt.s32.totalorder %s132, 15
      %s134 = scalar_select %p133, %s132, 15
      %s135 = smul.addr %s134, 8
      %s136 = scalar_lea.vmem %s2, %s135
      %s137 = smul.u32 32, %s13
      %p138 = scmp.lt.s32.totalorder %s137, 127
      %s139 = scalar_select %p138, %s137, 127
      %s140 = smul.addr %s139, 32
      %s141 = smul.addr %s140, 4
      %s142 = scalar_lea.vmem %s0, %s141
      %s143 = smul.u32 32, %s13
      %s144 = smul.u32 4, %s13
      %p145 = scmp.lt.s32.totalorder %s144, 15
      %s146 = scalar_select %p145, %s144, 15
      %s147 = smul.addr %s146, 8
      %s148 = scalar_lea.vmem %s2, %s147
      %s149 = smul.u32 4, %s13
      %v151 = vld [vmem:[%s142] sm:$0xf]
      %v152 = vld [vmem:[%s142 + $0x4] sm:$0xf]
      %v153 = vld [vmem:[%s142 + $0x8] sm:$0xf]
      %v154 = vld [vmem:[%s142 + $0xc] sm:$0xf]
      %v155 = vld [vmem:[%s142 + $0x10] sm:$0xf]
      %v156 = vld [vmem:[%s142 + $0x14] sm:$0xf]
      %v157 = vld [vmem:[%s142 + $0x18] sm:$0xf]
      %v158 = vld [vmem:[%s142 + $0x1c] sm:$0xf]
      %v159 = vld [vmem:[%s142 + $0x20] sm:$0xf]
      %v160 = vld [vmem:[%s142 + $0x24] sm:$0xf]
      %v161 = vld [vmem:[%s142 + $0x28] sm:$0xf]
      %v162 = vld [vmem:[%s142 + $0x2c] sm:$0xf]
      %v163 = vld [vmem:[%s142 + $0x30] sm:$0xf]
      %v164 = vld [vmem:[%s142 + $0x34] sm:$0xf]
      %v165 = vld [vmem:[%s142 + $0x38] sm:$0xf]
      %v166 = vld [vmem:[%s142 + $0x3c] sm:$0xf]
      %v167 = vld [vmem:[%s142 + $0x40] sm:$0xf]
      %v168 = vld [vmem:[%s142 + $0x44] sm:$0xf]
      %v169 = vld [vmem:[%s142 + $0x48] sm:$0xf]
      %v170 = vld [vmem:[%s142 + $0x4c] sm:$0xf]
      %v171 = vld [vmem:[%s142 + $0x50] sm:$0xf]
      %v172 = vld [vmem:[%s142 + $0x54] sm:$0xf]
      %v173 = vld [vmem:[%s142 + $0x58] sm:$0xf]
      %v174 = vld [vmem:[%s142 + $0x5c] sm:$0xf]
      %v175 = vld [vmem:[%s142 + $0x60] sm:$0xf]
      %v176 = vld [vmem:[%s142 + $0x64] sm:$0xf]
      %v177 = vld [vmem:[%s142 + $0x68] sm:$0xf]
      %v178 = vld [vmem:[%s142 + $0x6c] sm:$0xf]
      %v179 = vld [vmem:[%s142 + $0x70] sm:$0xf]
      %v180 = vld [vmem:[%s142 + $0x74] sm:$0xf]
      %v181 = vld [vmem:[%s142 + $0x78] sm:$0xf]
      %v182 = vld [vmem:[%s142 + $0x7c] sm:$0xf]
      %v183 = vld [vmem:[%s142 + $0x80] sm:$0xf]
      %v184 = vld [vmem:[%s142 + $0x84] sm:$0xf]
      %v185 = vld [vmem:[%s142 + $0x88] sm:$0xf]
      %v186 = vld [vmem:[%s142 + $0x8c] sm:$0xf]
      %v187 = vld [vmem:[%s142 + $0x90] sm:$0xf]
      %v188 = vld [vmem:[%s142 + $0x94] sm:$0xf]
      %v189 = vld [vmem:[%s142 + $0x98] sm:$0xf]
      %v190 = vld [vmem:[%s142 + $0x9c] sm:$0xf]
      %v191 = vld [vmem:[%s142 + $0xa0] sm:$0xf]
      %v192 = vld [vmem:[%s142 + $0xa4] sm:$0xf]
      %v193 = vld [vmem:[%s142 + $0xa8] sm:$0xf]
      %v194 = vld [vmem:[%s142 + $0xac] sm:$0xf]
      %v195 = vld [vmem:[%s142 + $0xb0] sm:$0xf]
      %v196 = vld [vmem:[%s142 + $0xb4] sm:$0xf]
      %v197 = vld [vmem:[%s142 + $0xb8] sm:$0xf]
      %v198 = vld [vmem:[%s142 + $0xbc] sm:$0xf]
      %v199 = vld [vmem:[%s142 + $0xc0] sm:$0xf]
      %v200 = vld [vmem:[%s142 + $0xc4] sm:$0xf]
      %v201 = vld [vmem:[%s142 + $0xc8] sm:$0xf]
      %v202 = vld [vmem:[%s142 + $0xcc] sm:$0xf]
      %v203 = vld [vmem:[%s142 + $0xd0] sm:$0xf]
      %v204 = vld [vmem:[%s142 + $0xd4] sm:$0xf]
      %v205 = vld [vmem:[%s142 + $0xd8] sm:$0xf]
      %v206 = vld [vmem:[%s142 + $0xdc] sm:$0xf]
      %v207 = vld [vmem:[%s142 + $0xe0] sm:$0xf]
      %v208 = vld [vmem:[%s142 + $0xe4] sm:$0xf]
      %v209 = vld [vmem:[%s142 + $0xe8] sm:$0xf]
      %v210 = vld [vmem:[%s142 + $0xec] sm:$0xf]
      %v211 = vld [vmem:[%s142 + $0xf0] sm:$0xf]
      %v212 = vld [vmem:[%s142 + $0xf4] sm:$0xf]
      %v213 = vld [vmem:[%s142 + $0xf8] sm:$0xf]
      %v214 = vld [vmem:[%s142 + $0xfc] sm:$0xf]
      %v215 = vld [vmem:[%s142 + $0x100] sm:$0xf]
      %v216 = vld [vmem:[%s142 + $0x104] sm:$0xf]
      %v217 = vld [vmem:[%s142 + $0x108] sm:$0xf]
      %v218 = vld [vmem:[%s142 + $0x10c] sm:$0xf]
      %v219 = vld [vmem:[%s142 + $0x110] sm:$0xf]
      %v220 = vld [vmem:[%s142 + $0x114] sm:$0xf]
      %v221 = vld [vmem:[%s142 + $0x118] sm:$0xf]
      %v222 = vld [vmem:[%s142 + $0x11c] sm:$0xf]
      %v223 = vld [vmem:[%s142 + $0x120] sm:$0xf]
      %v224 = vld [vmem:[%s142 + $0x124] sm:$0xf]
      %v225 = vld [vmem:[%s142 + $0x128] sm:$0xf]
      %v226 = vld [vmem:[%s142 + $0x12c] sm:$0xf]
      %v227 = vld [vmem:[%s142 + $0x130] sm:$0xf]
      %v228 = vld [vmem:[%s142 + $0x134] sm:$0xf]
      %v229 = vld [vmem:[%s142 + $0x138] sm:$0xf]
      %v230 = vld [vmem:[%s142 + $0x13c] sm:$0xf]
      %v231 = vld [vmem:[%s142 + $0x140] sm:$0xf]
      %v232 = vld [vmem:[%s142 + $0x144] sm:$0xf]
      %v233 = vld [vmem:[%s142 + $0x148] sm:$0xf]
      %v234 = vld [vmem:[%s142 + $0x14c] sm:$0xf]
      %v235 = vld [vmem:[%s142 + $0x150] sm:$0xf]
      %v236 = vld [vmem:[%s142 + $0x154] sm:$0xf]
      %v237 = vld [vmem:[%s142 + $0x158] sm:$0xf]
      %v238 = vld [vmem:[%s142 + $0x15c] sm:$0xf]
      %v239 = vld [vmem:[%s142 + $0x160] sm:$0xf]
      %v240 = vld [vmem:[%s142 + $0x164] sm:$0xf]
      %v241 = vld [vmem:[%s142 + $0x168] sm:$0xf]
      %v242 = vld [vmem:[%s142 + $0x16c] sm:$0xf]
      %v243 = vld [vmem:[%s142 + $0x170] sm:$0xf]
      %v244 = vld [vmem:[%s142 + $0x174] sm:$0xf]
      %v245 = vld [vmem:[%s142 + $0x178] sm:$0xf]
      %v246 = vld [vmem:[%s142 + $0x17c] sm:$0xf]
      %v247 = vld [vmem:[%s142 + $0x180] sm:$0xf]
      %v248 = vld [vmem:[%s142 + $0x184] sm:$0xf]
      %v249 = vld [vmem:[%s142 + $0x188] sm:$0xf]
      %v250 = vld [vmem:[%s142 + $0x18c] sm:$0xf]
      %v251 = vld [vmem:[%s142 + $0x190] sm:$0xf]
      %v252 = vld [vmem:[%s142 + $0x194] sm:$0xf]
      %v253 = vld [vmem:[%s142 + $0x198] sm:$0xf]
      %v254 = vld [vmem:[%s142 + $0x19c] sm:$0xf]
      %v255 = vld [vmem:[%s142 + $0x1a0] sm:$0xf]
      %v256 = vld [vmem:[%s142 + $0x1a4] sm:$0xf]
      %v257 = vld [vmem:[%s142 + $0x1a8] sm:$0xf]
      %v258 = vld [vmem:[%s142 + $0x1ac] sm:$0xf]
      %v259 = vld [vmem:[%s142 + $0x1b0] sm:$0xf]
      %v260 = vld [vmem:[%s142 + $0x1b4] sm:$0xf]
      %v261 = vld [vmem:[%s142 + $0x1b8] sm:$0xf]
      %v262 = vld [vmem:[%s142 + $0x1bc] sm:$0xf]
      %v263 = vld [vmem:[%s142 + $0x1c0] sm:$0xf]
      %v264 = vld [vmem:[%s142 + $0x1c4] sm:$0xf]
      %v265 = vld [vmem:[%s142 + $0x1c8] sm:$0xf]
      %v266 = vld [vmem:[%s142 + $0x1cc] sm:$0xf]
      %v267 = vld [vmem:[%s142 + $0x1d0] sm:$0xf]
      %v268 = vld [vmem:[%s142 + $0x1d4] sm:$0xf]
      %v269 = vld [vmem:[%s142 + $0x1d8] sm:$0xf]
      %v270 = vld [vmem:[%s142 + $0x1dc] sm:$0xf]
      %v271 = vld [vmem:[%s142 + $0x1e0] sm:$0xf]
      %v272 = vld [vmem:[%s142 + $0x1e4] sm:$0xf]
      %v273 = vld [vmem:[%s142 + $0x1e8] sm:$0xf]
      %v274 = vld [vmem:[%s142 + $0x1ec] sm:$0xf]
      %v275 = vld [vmem:[%s142 + $0x1f0] sm:$0xf]
      %v276 = vld [vmem:[%s142 + $0x1f4] sm:$0xf]
      %v277 = vld [vmem:[%s142 + $0x1f8] sm:$0xf]
      %v278 = vld [vmem:[%s142 + $0x1fc] sm:$0xf]
      %v279 = vld [vmem:[%s142 + $0x200] sm:$0xf]
      %v280 = vld [vmem:[%s142 + $0x204] sm:$0xf]
      %v281 = vld [vmem:[%s142 + $0x208] sm:$0xf]
      %v282 = vld [vmem:[%s142 + $0x20c] sm:$0xf]
      %v283 = vld [vmem:[%s142 + $0x210] sm:$0xf]
      %v284 = vld [vmem:[%s142 + $0x214] sm:$0xf]
      %v285 = vld [vmem:[%s142 + $0x218] sm:$0xf]
      %v286 = vld [vmem:[%s142 + $0x21c] sm:$0xf]
      %v287 = vld [vmem:[%s142 + $0x220] sm:$0xf]
      %v288 = vld [vmem:[%s142 + $0x224] sm:$0xf]
      %v289 = vld [vmem:[%s142 + $0x228] sm:$0xf]
      %v290 = vld [vmem:[%s142 + $0x22c] sm:$0xf]
      %v291 = vld [vmem:[%s142 + $0x230] sm:$0xf]
      %v292 = vld [vmem:[%s142 + $0x234] sm:$0xf]
      %v293 = vld [vmem:[%s142 + $0x238] sm:$0xf]
      %v294 = vld [vmem:[%s142 + $0x23c] sm:$0xf]
      %v295 = vld [vmem:[%s142 + $0x240] sm:$0xf]
      %v296 = vld [vmem:[%s142 + $0x244] sm:$0xf]
      %v297 = vld [vmem:[%s142 + $0x248] sm:$0xf]
      %v298 = vld [vmem:[%s142 + $0x24c] sm:$0xf]
      %v299 = vld [vmem:[%s142 + $0x250] sm:$0xf]
      %v300 = vld [vmem:[%s142 + $0x254] sm:$0xf]
      %v301 = vld [vmem:[%s142 + $0x258] sm:$0xf]
      %v302 = vld [vmem:[%s142 + $0x25c] sm:$0xf]
      %v303 = vld [vmem:[%s142 + $0x260] sm:$0xf]
      %v304 = vld [vmem:[%s142 + $0x264] sm:$0xf]
      %v305 = vld [vmem:[%s142 + $0x268] sm:$0xf]
      %v306 = vld [vmem:[%s142 + $0x26c] sm:$0xf]
      %v307 = vld [vmem:[%s142 + $0x270] sm:$0xf]
      %v308 = vld [vmem:[%s142 + $0x274] sm:$0xf]
      %v309 = vld [vmem:[%s142 + $0x278] sm:$0xf]
      %v310 = vld [vmem:[%s142 + $0x27c] sm:$0xf]
      %v311 = vld [vmem:[%s142 + $0x280] sm:$0xf]
      %v312 = vld [vmem:[%s142 + $0x284] sm:$0xf]
      %v313 = vld [vmem:[%s142 + $0x288] sm:$0xf]
      %v314 = vld [vmem:[%s142 + $0x28c] sm:$0xf]
      %v315 = vld [vmem:[%s142 + $0x290] sm:$0xf]
      %v316 = vld [vmem:[%s142 + $0x294] sm:$0xf]
      %v317 = vld [vmem:[%s142 + $0x298] sm:$0xf]
      %v318 = vld [vmem:[%s142 + $0x29c] sm:$0xf]
      %v319 = vld [vmem:[%s142 + $0x2a0] sm:$0xf]
      %v320 = vld [vmem:[%s142 + $0x2a4] sm:$0xf]
      %v321 = vld [vmem:[%s142 + $0x2a8] sm:$0xf]
      %v322 = vld [vmem:[%s142 + $0x2ac] sm:$0xf]
      %v323 = vld [vmem:[%s142 + $0x2b0] sm:$0xf]
      %v324 = vld [vmem:[%s142 + $0x2b4] sm:$0xf]
      %v325 = vld [vmem:[%s142 + $0x2b8] sm:$0xf]
      %v326 = vld [vmem:[%s142 + $0x2bc] sm:$0xf]
      %v327 = vld [vmem:[%s142 + $0x2c0] sm:$0xf]
      %v328 = vld [vmem:[%s142 + $0x2c4] sm:$0xf]
      %v329 = vld [vmem:[%s142 + $0x2c8] sm:$0xf]
      %v330 = vld [vmem:[%s142 + $0x2cc] sm:$0xf]
      %v331 = vld [vmem:[%s142 + $0x2d0] sm:$0xf]
      %v332 = vld [vmem:[%s142 + $0x2d4] sm:$0xf]
      %v333 = vld [vmem:[%s142 + $0x2d8] sm:$0xf]
      %v334 = vld [vmem:[%s142 + $0x2dc] sm:$0xf]
      %v335 = vld [vmem:[%s142 + $0x2e0] sm:$0xf]
      %v336 = vld [vmem:[%s142 + $0x2e4] sm:$0xf]
      %v337 = vld [vmem:[%s142 + $0x2e8] sm:$0xf]
      %v338 = vld [vmem:[%s142 + $0x2ec] sm:$0xf]
      %v339 = vld [vmem:[%s142 + $0x2f0] sm:$0xf]
      %v340 = vld [vmem:[%s142 + $0x2f4] sm:$0xf]
      %v341 = vld [vmem:[%s142 + $0x2f8] sm:$0xf]
      %v342 = vld [vmem:[%s142 + $0x2fc] sm:$0xf]
      %v343 = vld [vmem:[%s142 + $0x300] sm:$0xf]
      %v344 = vld [vmem:[%s142 + $0x304] sm:$0xf]
      %v345 = vld [vmem:[%s142 + $0x308] sm:$0xf]
      %v346 = vld [vmem:[%s142 + $0x30c] sm:$0xf]
      %v347 = vld [vmem:[%s142 + $0x310] sm:$0xf]
      %v348 = vld [vmem:[%s142 + $0x314] sm:$0xf]
      %v349 = vld [vmem:[%s142 + $0x318] sm:$0xf]
      %v350 = vld [vmem:[%s142 + $0x31c] sm:$0xf]
      %v351 = vld [vmem:[%s142 + $0x320] sm:$0xf]
      %v352 = vld [vmem:[%s142 + $0x324] sm:$0xf]
      %v353 = vld [vmem:[%s142 + $0x328] sm:$0xf]
      %v354 = vld [vmem:[%s142 + $0x32c] sm:$0xf]
      %v355 = vld [vmem:[%s142 + $0x330] sm:$0xf]
      %v356 = vld [vmem:[%s142 + $0x334] sm:$0xf]
      %v357 = vld [vmem:[%s142 + $0x338] sm:$0xf]
      %v358 = vld [vmem:[%s142 + $0x33c] sm:$0xf]
      %v359 = vld [vmem:[%s142 + $0x340] sm:$0xf]
      %v360 = vld [vmem:[%s142 + $0x344] sm:$0xf]
      %v361 = vld [vmem:[%s142 + $0x348] sm:$0xf]
      %v362 = vld [vmem:[%s142 + $0x34c] sm:$0xf]
      %v363 = vld [vmem:[%s142 + $0x350] sm:$0xf]
      %v364 = vld [vmem:[%s142 + $0x354] sm:$0xf]
      %v365 = vld [vmem:[%s142 + $0x358] sm:$0xf]
      %v366 = vld [vmem:[%s142 + $0x35c] sm:$0xf]
      %v367 = vld [vmem:[%s142 + $0x360] sm:$0xf]
      %v368 = vld [vmem:[%s142 + $0x364] sm:$0xf]
      %v369 = vld [vmem:[%s142 + $0x368] sm:$0xf]
      %v370 = vld [vmem:[%s142 + $0x36c] sm:$0xf]
      %v371 = vld [vmem:[%s142 + $0x370] sm:$0xf]
      %v372 = vld [vmem:[%s142 + $0x374] sm:$0xf]
      %v373 = vld [vmem:[%s142 + $0x378] sm:$0xf]
      %v374 = vld [vmem:[%s142 + $0x37c] sm:$0xf]
      %v375 = vld [vmem:[%s142 + $0x380] sm:$0xf]
      %v376 = vld [vmem:[%s142 + $0x384] sm:$0xf]
      %v377 = vld [vmem:[%s142 + $0x388] sm:$0xf]
      %v378 = vld [vmem:[%s142 + $0x38c] sm:$0xf]
      %v379 = vld [vmem:[%s142 + $0x390] sm:$0xf]
      %v380 = vld [vmem:[%s142 + $0x394] sm:$0xf]
      %v381 = vld [vmem:[%s142 + $0x398] sm:$0xf]
      %v382 = vld [vmem:[%s142 + $0x39c] sm:$0xf]
      %v383 = vld [vmem:[%s142 + $0x3a0] sm:$0xf]
      %v384 = vld [vmem:[%s142 + $0x3a4] sm:$0xf]
      %v385 = vld [vmem:[%s142 + $0x3a8] sm:$0xf]
      %v386 = vld [vmem:[%s142 + $0x3ac] sm:$0xf]
      %v387 = vld [vmem:[%s142 + $0x3b0] sm:$0xf]
      %v388 = vld [vmem:[%s142 + $0x3b4] sm:$0xf]
      %v389 = vld [vmem:[%s142 + $0x3b8] sm:$0xf]
      %v390 = vld [vmem:[%s142 + $0x3bc] sm:$0xf]
      %v391 = vld [vmem:[%s142 + $0x3c0] sm:$0xf]
      %v392 = vld [vmem:[%s142 + $0x3c4] sm:$0xf]
      %v393 = vld [vmem:[%s142 + $0x3c8] sm:$0xf]
      %v394 = vld [vmem:[%s142 + $0x3cc] sm:$0xf]
      %v395 = vld [vmem:[%s142 + $0x3d0] sm:$0xf]
      %v396 = vld [vmem:[%s142 + $0x3d4] sm:$0xf]
      %v397 = vld [vmem:[%s142 + $0x3d8] sm:$0xf]
      %v398 = vld [vmem:[%s142 + $0x3dc] sm:$0xf]
      %v399 = vld [vmem:[%s142 + $0x3e0] sm:$0xf]
      %v400 = vld [vmem:[%s142 + $0x3e4] sm:$0xf]
      %v401 = vld [vmem:[%s142 + $0x3e8] sm:$0xf]
      %v402 = vld [vmem:[%s142 + $0x3ec] sm:$0xf]
      %v403 = vld [vmem:[%s142 + $0x3f0] sm:$0xf]
      %v404 = vld [vmem:[%s142 + $0x3f4] sm:$0xf]
      %v405 = vld [vmem:[%s142 + $0x3f8] sm:$0xf]
      %v406 = vld [vmem:[%s142 + $0x3fc] sm:$0xf]
      %v407 = vld [vmem:[%s142 + $0x400] sm:$0xf]
      %v408 = vld [vmem:[%s142 + $0x404] sm:$0xf]
      %v409 = vld [vmem:[%s142 + $0x408] sm:$0xf]
      %v410 = vld [vmem:[%s142 + $0x40c] sm:$0xf]
      %v411 = vld [vmem:[%s142 + $0x410] sm:$0xf]
      %v412 = vld [vmem:[%s142 + $0x414] sm:$0xf]
      %v413 = vld [vmem:[%s142 + $0x418] sm:$0xf]
      %v414 = vld [vmem:[%s142 + $0x41c] sm:$0xf]
      %v415 = vld [vmem:[%s142 + $0x420] sm:$0xf]
      %v416 = vld [vmem:[%s142 + $0x424] sm:$0xf]
      %v417 = vld [vmem:[%s142 + $0x428] sm:$0xf]
      %v418 = vld [vmem:[%s142 + $0x42c] sm:$0xf]
      %v419 = vld [vmem:[%s142 + $0x430] sm:$0xf]
      %v420 = vld [vmem:[%s142 + $0x434] sm:$0xf]
      %v421 = vld [vmem:[%s142 + $0x438] sm:$0xf]
      %v422 = vld [vmem:[%s142 + $0x43c] sm:$0xf]
      %v423 = vld [vmem:[%s142 + $0x440] sm:$0xf]
      %v424 = vld [vmem:[%s142 + $0x444] sm:$0xf]
      %v425 = vld [vmem:[%s142 + $0x448] sm:$0xf]
      %v426 = vld [vmem:[%s142 + $0x44c] sm:$0xf]
      %v427 = vld [vmem:[%s142 + $0x450] sm:$0xf]
      %v428 = vld [vmem:[%s142 + $0x454] sm:$0xf]
      %v429 = vld [vmem:[%s142 + $0x458] sm:$0xf]
      %v430 = vld [vmem:[%s142 + $0x45c] sm:$0xf]
      %v431 = vld [vmem:[%s142 + $0x460] sm:$0xf]
      %v432 = vld [vmem:[%s142 + $0x464] sm:$0xf]
      %v433 = vld [vmem:[%s142 + $0x468] sm:$0xf]
      %v434 = vld [vmem:[%s142 + $0x46c] sm:$0xf]
      %v435 = vld [vmem:[%s142 + $0x470] sm:$0xf]
      %v436 = vld [vmem:[%s142 + $0x474] sm:$0xf]
      %v437 = vld [vmem:[%s142 + $0x478] sm:$0xf]
      %v438 = vld [vmem:[%s142 + $0x47c] sm:$0xf]
      %v439 = vld [vmem:[%s142 + $0x480] sm:$0xf]
      %v440 = vld [vmem:[%s142 + $0x484] sm:$0xf]
      %v441 = vld [vmem:[%s142 + $0x488] sm:$0xf]
      %v442 = vld [vmem:[%s142 + $0x48c] sm:$0xf]
      %v443 = vld [vmem:[%s142 + $0x490] sm:$0xf]
      %v444 = vld [vmem:[%s142 + $0x494] sm:$0xf]
      %v445 = vld [vmem:[%s142 + $0x498] sm:$0xf]
      %v446 = vld [vmem:[%s142 + $0x49c] sm:$0xf]
      %v447 = vld [vmem:[%s142 + $0x4a0] sm:$0xf]
      %v448 = vld [vmem:[%s142 + $0x4a4] sm:$0xf]
      %v449 = vld [vmem:[%s142 + $0x4a8] sm:$0xf]
      %v450 = vld [vmem:[%s142 + $0x4ac] sm:$0xf]
      %v451 = vld [vmem:[%s142 + $0x4b0] sm:$0xf]
      %v452 = vld [vmem:[%s142 + $0x4b4] sm:$0xf]
      %v453 = vld [vmem:[%s142 + $0x4b8] sm:$0xf]
      %v454 = vld [vmem:[%s142 + $0x4bc] sm:$0xf]
      %v455 = vld [vmem:[%s142 + $0x4c0] sm:$0xf]
      %v456 = vld [vmem:[%s142 + $0x4c4] sm:$0xf]
      %v457 = vld [vmem:[%s142 + $0x4c8] sm:$0xf]
      %v458 = vld [vmem:[%s142 + $0x4cc] sm:$0xf]
      %v459 = vld [vmem:[%s142 + $0x4d0] sm:$0xf]
      %v460 = vld [vmem:[%s142 + $0x4d4] sm:$0xf]
      %v461 = vld [vmem:[%s142 + $0x4d8] sm:$0xf]
      %v462 = vld [vmem:[%s142 + $0x4dc] sm:$0xf]
      %v463 = vld [vmem:[%s142 + $0x4e0] sm:$0xf]
      %v464 = vld [vmem:[%s142 + $0x4e4] sm:$0xf]
      %v465 = vld [vmem:[%s142 + $0x4e8] sm:$0xf]
      %v466 = vld [vmem:[%s142 + $0x4ec] sm:$0xf]
      %v467 = vld [vmem:[%s142 + $0x4f0] sm:$0xf]
      %v468 = vld [vmem:[%s142 + $0x4f4] sm:$0xf]
      %v469 = vld [vmem:[%s142 + $0x4f8] sm:$0xf]
      %v470 = vld [vmem:[%s142 + $0x4fc] sm:$0xf]
      %v471 = vld [vmem:[%s142 + $0x500] sm:$0xf]
      %v472 = vld [vmem:[%s142 + $0x504] sm:$0xf]
      %v473 = vld [vmem:[%s142 + $0x508] sm:$0xf]
      %v474 = vld [vmem:[%s142 + $0x50c] sm:$0xf]
      %v475 = vld [vmem:[%s142 + $0x510] sm:$0xf]
      %v476 = vld [vmem:[%s142 + $0x514] sm:$0xf]
      %v477 = vld [vmem:[%s142 + $0x518] sm:$0xf]
      %v478 = vld [vmem:[%s142 + $0x51c] sm:$0xf]
      %v479 = vld [vmem:[%s142 + $0x520] sm:$0xf]
      %v480 = vld [vmem:[%s142 + $0x524] sm:$0xf]
      %v481 = vld [vmem:[%s142 + $0x528] sm:$0xf]
      %v482 = vld [vmem:[%s142 + $0x52c] sm:$0xf]
      %v483 = vld [vmem:[%s142 + $0x530] sm:$0xf]
      %v484 = vld [vmem:[%s142 + $0x534] sm:$0xf]
      %v485 = vld [vmem:[%s142 + $0x538] sm:$0xf]
      %v486 = vld [vmem:[%s142 + $0x53c] sm:$0xf]
      %v487 = vld [vmem:[%s142 + $0x540] sm:$0xf]
      %v488 = vld [vmem:[%s142 + $0x544] sm:$0xf]
      %v489 = vld [vmem:[%s142 + $0x548] sm:$0xf]
      %v490 = vld [vmem:[%s142 + $0x54c] sm:$0xf]
      %v491 = vld [vmem:[%s142 + $0x550] sm:$0xf]
      %v492 = vld [vmem:[%s142 + $0x554] sm:$0xf]
      %v493 = vld [vmem:[%s142 + $0x558] sm:$0xf]
      %v494 = vld [vmem:[%s142 + $0x55c] sm:$0xf]
      %v495 = vld [vmem:[%s142 + $0x560] sm:$0xf]
      %v496 = vld [vmem:[%s142 + $0x564] sm:$0xf]
      %v497 = vld [vmem:[%s142 + $0x568] sm:$0xf]
      %v498 = vld [vmem:[%s142 + $0x56c] sm:$0xf]
      %v499 = vld [vmem:[%s142 + $0x570] sm:$0xf]
      %v500 = vld [vmem:[%s142 + $0x574] sm:$0xf]
      %v501 = vld [vmem:[%s142 + $0x578] sm:$0xf]
      %v502 = vld [vmem:[%s142 + $0x57c] sm:$0xf]
      %v503 = vld [vmem:[%s142 + $0x580] sm:$0xf]
      %v504 = vld [vmem:[%s142 + $0x584] sm:$0xf]
      %v505 = vld [vmem:[%s142 + $0x588] sm:$0xf]
      %v506 = vld [vmem:[%s142 + $0x58c] sm:$0xf]
      %v507 = vld [vmem:[%s142 + $0x590] sm:$0xf]
      %v508 = vld [vmem:[%s142 + $0x594] sm:$0xf]
      %v509 = vld [vmem:[%s142 + $0x598] sm:$0xf]
      %v510 = vld [vmem:[%s142 + $0x59c] sm:$0xf]
      %v511 = vld [vmem:[%s142 + $0x5a0] sm:$0xf]
      %v512 = vld [vmem:[%s142 + $0x5a4] sm:$0xf]
      %v513 = vld [vmem:[%s142 + $0x5a8] sm:$0xf]
      %v514 = vld [vmem:[%s142 + $0x5ac] sm:$0xf]
      %v515 = vld [vmem:[%s142 + $0x5b0] sm:$0xf]
      %v516 = vld [vmem:[%s142 + $0x5b4] sm:$0xf]
      %v517 = vld [vmem:[%s142 + $0x5b8] sm:$0xf]
      %v518 = vld [vmem:[%s142 + $0x5bc] sm:$0xf]
      %v519 = vld [vmem:[%s142 + $0x5c0] sm:$0xf]
      %v520 = vld [vmem:[%s142 + $0x5c4] sm:$0xf]
      %v521 = vld [vmem:[%s142 + $0x5c8] sm:$0xf]
      %v522 = vld [vmem:[%s142 + $0x5cc] sm:$0xf]
      %v523 = vld [vmem:[%s142 + $0x5d0] sm:$0xf]
      %v524 = vld [vmem:[%s142 + $0x5d4] sm:$0xf]
      %v525 = vld [vmem:[%s142 + $0x5d8] sm:$0xf]
      %v526 = vld [vmem:[%s142 + $0x5dc] sm:$0xf]
      %v527 = vld [vmem:[%s142 + $0x5e0] sm:$0xf]
      %v528 = vld [vmem:[%s142 + $0x5e4] sm:$0xf]
      %v529 = vld [vmem:[%s142 + $0x5e8] sm:$0xf]
      %v530 = vld [vmem:[%s142 + $0x5ec] sm:$0xf]
      %v531 = vld [vmem:[%s142 + $0x5f0] sm:$0xf]
      %v532 = vld [vmem:[%s142 + $0x5f4] sm:$0xf]
      %v533 = vld [vmem:[%s142 + $0x5f8] sm:$0xf]
      %v534 = vld [vmem:[%s142 + $0x5fc] sm:$0xf]
      %v535 = vld [vmem:[%s142 + $0x600] sm:$0xf]
      %v536 = vld [vmem:[%s142 + $0x604] sm:$0xf]
      %v537 = vld [vmem:[%s142 + $0x608] sm:$0xf]
      %v538 = vld [vmem:[%s142 + $0x60c] sm:$0xf]
      %v539 = vld [vmem:[%s142 + $0x610] sm:$0xf]
      %v540 = vld [vmem:[%s142 + $0x614] sm:$0xf]
      %v541 = vld [vmem:[%s142 + $0x618] sm:$0xf]
      %v542 = vld [vmem:[%s142 + $0x61c] sm:$0xf]
      %v543 = vld [vmem:[%s142 + $0x620] sm:$0xf]
      %v544 = vld [vmem:[%s142 + $0x624] sm:$0xf]
      %v545 = vld [vmem:[%s142 + $0x628] sm:$0xf]
      %v546 = vld [vmem:[%s142 + $0x62c] sm:$0xf]
      %v547 = vld [vmem:[%s142 + $0x630] sm:$0xf]
      %v548 = vld [vmem:[%s142 + $0x634] sm:$0xf]
      %v549 = vld [vmem:[%s142 + $0x638] sm:$0xf]
      %v550 = vld [vmem:[%s142 + $0x63c] sm:$0xf]
      %v551 = vld [vmem:[%s142 + $0x640] sm:$0xf]
      %v552 = vld [vmem:[%s142 + $0x644] sm:$0xf]
      %v553 = vld [vmem:[%s142 + $0x648] sm:$0xf]
      %v554 = vld [vmem:[%s142 + $0x64c] sm:$0xf]
      %v555 = vld [vmem:[%s142 + $0x650] sm:$0xf]
      %v556 = vld [vmem:[%s142 + $0x654] sm:$0xf]
      %v557 = vld [vmem:[%s142 + $0x658] sm:$0xf]
      %v558 = vld [vmem:[%s142 + $0x65c] sm:$0xf]
      %v559 = vld [vmem:[%s142 + $0x660] sm:$0xf]
      %v560 = vld [vmem:[%s142 + $0x664] sm:$0xf]
      %v561 = vld [vmem:[%s142 + $0x668] sm:$0xf]
      %v562 = vld [vmem:[%s142 + $0x66c] sm:$0xf]
      %v563 = vld [vmem:[%s142 + $0x670] sm:$0xf]
      %v564 = vld [vmem:[%s142 + $0x674] sm:$0xf]
      %v565 = vld [vmem:[%s142 + $0x678] sm:$0xf]
      %v566 = vld [vmem:[%s142 + $0x67c] sm:$0xf]
      %v567 = vld [vmem:[%s142 + $0x680] sm:$0xf]
      %v568 = vld [vmem:[%s142 + $0x684] sm:$0xf]
      %v569 = vld [vmem:[%s142 + $0x688] sm:$0xf]
      %v570 = vld [vmem:[%s142 + $0x68c] sm:$0xf]
      %v571 = vld [vmem:[%s142 + $0x690] sm:$0xf]
      %v572 = vld [vmem:[%s142 + $0x694] sm:$0xf]
      %v573 = vld [vmem:[%s142 + $0x698] sm:$0xf]
      %v574 = vld [vmem:[%s142 + $0x69c] sm:$0xf]
      %v575 = vld [vmem:[%s142 + $0x6a0] sm:$0xf]
      %v576 = vld [vmem:[%s142 + $0x6a4] sm:$0xf]
      %v577 = vld [vmem:[%s142 + $0x6a8] sm:$0xf]
      %v578 = vld [vmem:[%s142 + $0x6ac] sm:$0xf]
      %v579 = vld [vmem:[%s142 + $0x6b0] sm:$0xf]
      %v580 = vld [vmem:[%s142 + $0x6b4] sm:$0xf]
      %v581 = vld [vmem:[%s142 + $0x6b8] sm:$0xf]
      %v582 = vld [vmem:[%s142 + $0x6bc] sm:$0xf]
      %v583 = vld [vmem:[%s142 + $0x6c0] sm:$0xf]
      %v584 = vld [vmem:[%s142 + $0x6c4] sm:$0xf]
      %v585 = vld [vmem:[%s142 + $0x6c8] sm:$0xf]
      %v586 = vld [vmem:[%s142 + $0x6cc] sm:$0xf]
      %v587 = vld [vmem:[%s142 + $0x6d0] sm:$0xf]
      %v588 = vld [vmem:[%s142 + $0x6d4] sm:$0xf]
      %v589 = vld [vmem:[%s142 + $0x6d8] sm:$0xf]
      %v590 = vld [vmem:[%s142 + $0x6dc] sm:$0xf]
      %v591 = vld [vmem:[%s142 + $0x6e0] sm:$0xf]
      %v592 = vld [vmem:[%s142 + $0x6e4] sm:$0xf]
      %v593 = vld [vmem:[%s142 + $0x6e8] sm:$0xf]
      %v594 = vld [vmem:[%s142 + $0x6ec] sm:$0xf]
      %v595 = vld [vmem:[%s142 + $0x6f0] sm:$0xf]
      %v596 = vld [vmem:[%s142 + $0x6f4] sm:$0xf]
      %v597 = vld [vmem:[%s142 + $0x6f8] sm:$0xf]
      %v598 = vld [vmem:[%s142 + $0x6fc] sm:$0xf]
      %v599 = vld [vmem:[%s142 + $0x700] sm:$0xf]
      %v600 = vld [vmem:[%s142 + $0x704] sm:$0xf]
      %v601 = vld [vmem:[%s142 + $0x708] sm:$0xf]
      %v602 = vld [vmem:[%s142 + $0x70c] sm:$0xf]
      %v603 = vld [vmem:[%s142 + $0x710] sm:$0xf]
      %v604 = vld [vmem:[%s142 + $0x714] sm:$0xf]
      %v605 = vld [vmem:[%s142 + $0x718] sm:$0xf]
      %v606 = vld [vmem:[%s142 + $0x71c] sm:$0xf]
      %v607 = vld [vmem:[%s142 + $0x720] sm:$0xf]
      %v608 = vld [vmem:[%s142 + $0x724] sm:$0xf]
      %v609 = vld [vmem:[%s142 + $0x728] sm:$0xf]
      %v610 = vld [vmem:[%s142 + $0x72c] sm:$0xf]
      %v611 = vld [vmem:[%s142 + $0x730] sm:$0xf]
      %v612 = vld [vmem:[%s142 + $0x734] sm:$0xf]
      %v613 = vld [vmem:[%s142 + $0x738] sm:$0xf]
      %v614 = vld [vmem:[%s142 + $0x73c] sm:$0xf]
      %v615 = vld [vmem:[%s142 + $0x740] sm:$0xf]
      %v616 = vld [vmem:[%s142 + $0x744] sm:$0xf]
      %v617 = vld [vmem:[%s142 + $0x748] sm:$0xf]
      %v618 = vld [vmem:[%s142 + $0x74c] sm:$0xf]
      %v619 = vld [vmem:[%s142 + $0x750] sm:$0xf]
      %v620 = vld [vmem:[%s142 + $0x754] sm:$0xf]
      %v621 = vld [vmem:[%s142 + $0x758] sm:$0xf]
      %v622 = vld [vmem:[%s142 + $0x75c] sm:$0xf]
      %v623 = vld [vmem:[%s142 + $0x760] sm:$0xf]
      %v624 = vld [vmem:[%s142 + $0x764] sm:$0xf]
      %v625 = vld [vmem:[%s142 + $0x768] sm:$0xf]
      %v626 = vld [vmem:[%s142 + $0x76c] sm:$0xf]
      %v627 = vld [vmem:[%s142 + $0x770] sm:$0xf]
      %v628 = vld [vmem:[%s142 + $0x774] sm:$0xf]
      %v629 = vld [vmem:[%s142 + $0x778] sm:$0xf]
      %v630 = vld [vmem:[%s142 + $0x77c] sm:$0xf]
      %v631 = vld [vmem:[%s142 + $0x780] sm:$0xf]
      %v632 = vld [vmem:[%s142 + $0x784] sm:$0xf]
      %v633 = vld [vmem:[%s142 + $0x788] sm:$0xf]
      %v634 = vld [vmem:[%s142 + $0x78c] sm:$0xf]
      %v635 = vld [vmem:[%s142 + $0x790] sm:$0xf]
      %v636 = vld [vmem:[%s142 + $0x794] sm:$0xf]
      %v637 = vld [vmem:[%s142 + $0x798] sm:$0xf]
      %v638 = vld [vmem:[%s142 + $0x79c] sm:$0xf]
      %v639 = vld [vmem:[%s142 + $0x7a0] sm:$0xf]
      %v640 = vld [vmem:[%s142 + $0x7a4] sm:$0xf]
      %v641 = vld [vmem:[%s142 + $0x7a8] sm:$0xf]
      %v642 = vld [vmem:[%s142 + $0x7ac] sm:$0xf]
      %v643 = vld [vmem:[%s142 + $0x7b0] sm:$0xf]
      %v644 = vld [vmem:[%s142 + $0x7b4] sm:$0xf]
      %v645 = vld [vmem:[%s142 + $0x7b8] sm:$0xf]
      %v646 = vld [vmem:[%s142 + $0x7bc] sm:$0xf]
      %v647 = vld [vmem:[%s142 + $0x7c0] sm:$0xf]
      %v648 = vld [vmem:[%s142 + $0x7c4] sm:$0xf]
      %v649 = vld [vmem:[%s142 + $0x7c8] sm:$0xf]
      %v650 = vld [vmem:[%s142 + $0x7cc] sm:$0xf]
      %v651 = vld [vmem:[%s142 + $0x7d0] sm:$0xf]
      %v652 = vld [vmem:[%s142 + $0x7d4] sm:$0xf]
      %v653 = vld [vmem:[%s142 + $0x7d8] sm:$0xf]
      %v654 = vld [vmem:[%s142 + $0x7dc] sm:$0xf]
      %v655 = vld [vmem:[%s142 + $0x7e0] sm:$0xf]
      %v656 = vld [vmem:[%s142 + $0x7e4] sm:$0xf]
      %v657 = vld [vmem:[%s142 + $0x7e8] sm:$0xf]
      %v658 = vld [vmem:[%s142 + $0x7ec] sm:$0xf]
      %v659 = vld [vmem:[%s142 + $0x7f0] sm:$0xf]
      %v660 = vld [vmem:[%s142 + $0x7f4] sm:$0xf]
      %v661 = vld [vmem:[%s142 + $0x7f8] sm:$0xf]
      %v662 = vld [vmem:[%s142 + $0x7fc] sm:$0xf]
      %v663 = vld [vmem:[%s142 + $0x800] sm:$0xf]
      %v664 = vld [vmem:[%s142 + $0x804] sm:$0xf]
      %v665 = vld [vmem:[%s142 + $0x808] sm:$0xf]
      %v666 = vld [vmem:[%s142 + $0x80c] sm:$0xf]
      %v667 = vld [vmem:[%s142 + $0x810] sm:$0xf]
      %v668 = vld [vmem:[%s142 + $0x814] sm:$0xf]
      %v669 = vld [vmem:[%s142 + $0x818] sm:$0xf]
      %v670 = vld [vmem:[%s142 + $0x81c] sm:$0xf]
      %v671 = vld [vmem:[%s142 + $0x820] sm:$0xf]
      %v672 = vld [vmem:[%s142 + $0x824] sm:$0xf]
      %v673 = vld [vmem:[%s142 + $0x828] sm:$0xf]
      %v674 = vld [vmem:[%s142 + $0x82c] sm:$0xf]
      %v675 = vld [vmem:[%s142 + $0x830] sm:$0xf]
      %v676 = vld [vmem:[%s142 + $0x834] sm:$0xf]
      %v677 = vld [vmem:[%s142 + $0x838] sm:$0xf]
      %v678 = vld [vmem:[%s142 + $0x83c] sm:$0xf]
      %v679 = vld [vmem:[%s142 + $0x840] sm:$0xf]
      %v680 = vld [vmem:[%s142 + $0x844] sm:$0xf]
      %v681 = vld [vmem:[%s142 + $0x848] sm:$0xf]
      %v682 = vld [vmem:[%s142 + $0x84c] sm:$0xf]
      %v683 = vld [vmem:[%s142 + $0x850] sm:$0xf]
      %v684 = vld [vmem:[%s142 + $0x854] sm:$0xf]
      %v685 = vld [vmem:[%s142 + $0x858] sm:$0xf]
      %v686 = vld [vmem:[%s142 + $0x85c] sm:$0xf]
      %v687 = vld [vmem:[%s142 + $0x860] sm:$0xf]
      %v688 = vld [vmem:[%s142 + $0x864] sm:$0xf]
      %v689 = vld [vmem:[%s142 + $0x868] sm:$0xf]
      %v690 = vld [vmem:[%s142 + $0x86c] sm:$0xf]
      %v691 = vld [vmem:[%s142 + $0x870] sm:$0xf]
      %v692 = vld [vmem:[%s142 + $0x874] sm:$0xf]
      %v693 = vld [vmem:[%s142 + $0x878] sm:$0xf]
      %v694 = vld [vmem:[%s142 + $0x87c] sm:$0xf]
      %v695 = vld [vmem:[%s142 + $0x880] sm:$0xf]
      %v696 = vld [vmem:[%s142 + $0x884] sm:$0xf]
      %v697 = vld [vmem:[%s142 + $0x888] sm:$0xf]
      %v698 = vld [vmem:[%s142 + $0x88c] sm:$0xf]
      %v699 = vld [vmem:[%s142 + $0x890] sm:$0xf]
      %v700 = vld [vmem:[%s142 + $0x894] sm:$0xf]
      %v701 = vld [vmem:[%s142 + $0x898] sm:$0xf]
      %v702 = vld [vmem:[%s142 + $0x89c] sm:$0xf]
      %v703 = vld [vmem:[%s142 + $0x8a0] sm:$0xf]
      %v704 = vld [vmem:[%s142 + $0x8a4] sm:$0xf]
      %v705 = vld [vmem:[%s142 + $0x8a8] sm:$0xf]
      %v706 = vld [vmem:[%s142 + $0x8ac] sm:$0xf]
      %v707 = vld [vmem:[%s142 + $0x8b0] sm:$0xf]
      %v708 = vld [vmem:[%s142 + $0x8b4] sm:$0xf]
      %v709 = vld [vmem:[%s142 + $0x8b8] sm:$0xf]
      %v710 = vld [vmem:[%s142 + $0x8bc] sm:$0xf]
      %v711 = vld [vmem:[%s142 + $0x8c0] sm:$0xf]
      %v712 = vld [vmem:[%s142 + $0x8c4] sm:$0xf]
      %v713 = vld [vmem:[%s142 + $0x8c8] sm:$0xf]
      %v714 = vld [vmem:[%s142 + $0x8cc] sm:$0xf]
      %v715 = vld [vmem:[%s142 + $0x8d0] sm:$0xf]
      %v716 = vld [vmem:[%s142 + $0x8d4] sm:$0xf]
      %v717 = vld [vmem:[%s142 + $0x8d8] sm:$0xf]
      %v718 = vld [vmem:[%s142 + $0x8dc] sm:$0xf]
      %v719 = vld [vmem:[%s142 + $0x8e0] sm:$0xf]
      %v720 = vld [vmem:[%s142 + $0x8e4] sm:$0xf]
      %v721 = vld [vmem:[%s142 + $0x8e8] sm:$0xf]
      %v722 = vld [vmem:[%s142 + $0x8ec] sm:$0xf]
      %v723 = vld [vmem:[%s142 + $0x8f0] sm:$0xf]
      %v724 = vld [vmem:[%s142 + $0x8f4] sm:$0xf]
      %v725 = vld [vmem:[%s142 + $0x8f8] sm:$0xf]
      %v726 = vld [vmem:[%s142 + $0x8fc] sm:$0xf]
      %v727 = vld [vmem:[%s142 + $0x900] sm:$0xf]
      %v728 = vld [vmem:[%s142 + $0x904] sm:$0xf]
      %v729 = vld [vmem:[%s142 + $0x908] sm:$0xf]
      %v730 = vld [vmem:[%s142 + $0x90c] sm:$0xf]
      %v731 = vld [vmem:[%s142 + $0x910] sm:$0xf]
      %v732 = vld [vmem:[%s142 + $0x914] sm:$0xf]
      %v733 = vld [vmem:[%s142 + $0x918] sm:$0xf]
      %v734 = vld [vmem:[%s142 + $0x91c] sm:$0xf]
      %v735 = vld [vmem:[%s142 + $0x920] sm:$0xf]
      %v736 = vld [vmem:[%s142 + $0x924] sm:$0xf]
      %v737 = vld [vmem:[%s142 + $0x928] sm:$0xf]
      %v738 = vld [vmem:[%s142 + $0x92c] sm:$0xf]
      %v739 = vld [vmem:[%s142 + $0x930] sm:$0xf]
      %v740 = vld [vmem:[%s142 + $0x934] sm:$0xf]
      %v741 = vld [vmem:[%s142 + $0x938] sm:$0xf]
      %v742 = vld [vmem:[%s142 + $0x93c] sm:$0xf]
      %v743 = vld [vmem:[%s142 + $0x940] sm:$0xf]
      %v744 = vld [vmem:[%s142 + $0x944] sm:$0xf]
      %v745 = vld [vmem:[%s142 + $0x948] sm:$0xf]
      %v746 = vld [vmem:[%s142 + $0x94c] sm:$0xf]
      %v747 = vld [vmem:[%s142 + $0x950] sm:$0xf]
      %v748 = vld [vmem:[%s142 + $0x954] sm:$0xf]
      %v749 = vld [vmem:[%s142 + $0x958] sm:$0xf]
      %v750 = vld [vmem:[%s142 + $0x95c] sm:$0xf]
      %v751 = vld [vmem:[%s142 + $0x960] sm:$0xf]
      %v752 = vld [vmem:[%s142 + $0x964] sm:$0xf]
      %v753 = vld [vmem:[%s142 + $0x968] sm:$0xf]
      %v754 = vld [vmem:[%s142 + $0x96c] sm:$0xf]
      %v755 = vld [vmem:[%s142 + $0x970] sm:$0xf]
      %v756 = vld [vmem:[%s142 + $0x974] sm:$0xf]
      %v757 = vld [vmem:[%s142 + $0x978] sm:$0xf]
      %v758 = vld [vmem:[%s142 + $0x97c] sm:$0xf]
      %v759 = vld [vmem:[%s142 + $0x980] sm:$0xf]
      %v760 = vld [vmem:[%s142 + $0x984] sm:$0xf]
      %v761 = vld [vmem:[%s142 + $0x988] sm:$0xf]
      %v762 = vld [vmem:[%s142 + $0x98c] sm:$0xf]
      %v763 = vld [vmem:[%s142 + $0x990] sm:$0xf]
      %v764 = vld [vmem:[%s142 + $0x994] sm:$0xf]
      %v765 = vld [vmem:[%s142 + $0x998] sm:$0xf]
      %v766 = vld [vmem:[%s142 + $0x99c] sm:$0xf]
      %v767 = vld [vmem:[%s142 + $0x9a0] sm:$0xf]
      %v768 = vld [vmem:[%s142 + $0x9a4] sm:$0xf]
      %v769 = vld [vmem:[%s142 + $0x9a8] sm:$0xf]
      %v770 = vld [vmem:[%s142 + $0x9ac] sm:$0xf]
      %v771 = vld [vmem:[%s142 + $0x9b0] sm:$0xf]
      %v772 = vld [vmem:[%s142 + $0x9b4] sm:$0xf]
      %v773 = vld [vmem:[%s142 + $0x9b8] sm:$0xf]
      %v774 = vld [vmem:[%s142 + $0x9bc] sm:$0xf]
      %v775 = vld [vmem:[%s142 + $0x9c0] sm:$0xf]
      %v776 = vld [vmem:[%s142 + $0x9c4] sm:$0xf]
      %v777 = vld [vmem:[%s142 + $0x9c8] sm:$0xf]
      %v778 = vld [vmem:[%s142 + $0x9cc] sm:$0xf]
      %v779 = vld [vmem:[%s142 + $0x9d0] sm:$0xf]
      %v780 = vld [vmem:[%s142 + $0x9d4] sm:$0xf]
      %v781 = vld [vmem:[%s142 + $0x9d8] sm:$0xf]
      %v782 = vld [vmem:[%s142 + $0x9dc] sm:$0xf]
      %v783 = vld [vmem:[%s142 + $0x9e0] sm:$0xf]
      %v784 = vld [vmem:[%s142 + $0x9e4] sm:$0xf]
      %v785 = vld [vmem:[%s142 + $0x9e8] sm:$0xf]
      %v786 = vld [vmem:[%s142 + $0x9ec] sm:$0xf]
      %v787 = vld [vmem:[%s142 + $0x9f0] sm:$0xf]
      %v788 = vld [vmem:[%s142 + $0x9f4] sm:$0xf]
      %v789 = vld [vmem:[%s142 + $0x9f8] sm:$0xf]
      %v790 = vld [vmem:[%s142 + $0x9fc] sm:$0xf]
      %v791 = vld [vmem:[%s142 + $0xa00] sm:$0xf]
      %v792 = vld [vmem:[%s142 + $0xa04] sm:$0xf]
      %v793 = vld [vmem:[%s142 + $0xa08] sm:$0xf]
      %v794 = vld [vmem:[%s142 + $0xa0c] sm:$0xf]
      %v795 = vld [vmem:[%s142 + $0xa10] sm:$0xf]
      %v796 = vld [vmem:[%s142 + $0xa14] sm:$0xf]
      %v797 = vld [vmem:[%s142 + $0xa18] sm:$0xf]
      %v798 = vld [vmem:[%s142 + $0xa1c] sm:$0xf]
      %v799 = vld [vmem:[%s142 + $0xa20] sm:$0xf]
      %v800 = vld [vmem:[%s142 + $0xa24] sm:$0xf]
      %v801 = vld [vmem:[%s142 + $0xa28] sm:$0xf]
      %v802 = vld [vmem:[%s142 + $0xa2c] sm:$0xf]
      %v803 = vld [vmem:[%s142 + $0xa30] sm:$0xf]
      %v804 = vld [vmem:[%s142 + $0xa34] sm:$0xf]
      %v805 = vld [vmem:[%s142 + $0xa38] sm:$0xf]
      %v806 = vld [vmem:[%s142 + $0xa3c] sm:$0xf]
      %v807 = vld [vmem:[%s142 + $0xa40] sm:$0xf]
      %v808 = vld [vmem:[%s142 + $0xa44] sm:$0xf]
      %v809 = vld [vmem:[%s142 + $0xa48] sm:$0xf]
      %v810 = vld [vmem:[%s142 + $0xa4c] sm:$0xf]
      %v811 = vld [vmem:[%s142 + $0xa50] sm:$0xf]
      %v812 = vld [vmem:[%s142 + $0xa54] sm:$0xf]
      %v813 = vld [vmem:[%s142 + $0xa58] sm:$0xf]
      %v814 = vld [vmem:[%s142 + $0xa5c] sm:$0xf]
      %v815 = vld [vmem:[%s142 + $0xa60] sm:$0xf]
      %v816 = vld [vmem:[%s142 + $0xa64] sm:$0xf]
      %v817 = vld [vmem:[%s142 + $0xa68] sm:$0xf]
      %v818 = vld [vmem:[%s142 + $0xa6c] sm:$0xf]
      %v819 = vld [vmem:[%s142 + $0xa70] sm:$0xf]
      %v820 = vld [vmem:[%s142 + $0xa74] sm:$0xf]
      %v821 = vld [vmem:[%s142 + $0xa78] sm:$0xf]
      %v822 = vld [vmem:[%s142 + $0xa7c] sm:$0xf]
      %v823 = vld [vmem:[%s142 + $0xa80] sm:$0xf]
      %v824 = vld [vmem:[%s142 + $0xa84] sm:$0xf]
      %v825 = vld [vmem:[%s142 + $0xa88] sm:$0xf]
      %v826 = vld [vmem:[%s142 + $0xa8c] sm:$0xf]
      %v827 = vld [vmem:[%s142 + $0xa90] sm:$0xf]
      %v828 = vld [vmem:[%s142 + $0xa94] sm:$0xf]
      %v829 = vld [vmem:[%s142 + $0xa98] sm:$0xf]
      %v830 = vld [vmem:[%s142 + $0xa9c] sm:$0xf]
      %v831 = vld [vmem:[%s142 + $0xaa0] sm:$0xf]
      %v832 = vld [vmem:[%s142 + $0xaa4] sm:$0xf]
      %v833 = vld [vmem:[%s142 + $0xaa8] sm:$0xf]
      %v834 = vld [vmem:[%s142 + $0xaac] sm:$0xf]
      %v835 = vld [vmem:[%s142 + $0xab0] sm:$0xf]
      %v836 = vld [vmem:[%s142 + $0xab4] sm:$0xf]
      %v837 = vld [vmem:[%s142 + $0xab8] sm:$0xf]
      %v838 = vld [vmem:[%s142 + $0xabc] sm:$0xf]
      %v839 = vld [vmem:[%s142 + $0xac0] sm:$0xf]
      %v840 = vld [vmem:[%s142 + $0xac4] sm:$0xf]
      %v841 = vld [vmem:[%s142 + $0xac8] sm:$0xf]
      %v842 = vld [vmem:[%s142 + $0xacc] sm:$0xf]
      %v843 = vld [vmem:[%s142 + $0xad0] sm:$0xf]
      %v844 = vld [vmem:[%s142 + $0xad4] sm:$0xf]
      %v845 = vld [vmem:[%s142 + $0xad8] sm:$0xf]
      %v846 = vld [vmem:[%s142 + $0xadc] sm:$0xf]
      %v847 = vld [vmem:[%s142 + $0xae0] sm:$0xf]
      %v848 = vld [vmem:[%s142 + $0xae4] sm:$0xf]
      %v849 = vld [vmem:[%s142 + $0xae8] sm:$0xf]
      %v850 = vld [vmem:[%s142 + $0xaec] sm:$0xf]
      %v851 = vld [vmem:[%s142 + $0xaf0] sm:$0xf]
      %v852 = vld [vmem:[%s142 + $0xaf4] sm:$0xf]
      %v853 = vld [vmem:[%s142 + $0xaf8] sm:$0xf]
      %v854 = vld [vmem:[%s142 + $0xafc] sm:$0xf]
      %v855 = vld [vmem:[%s142 + $0xb00] sm:$0xf]
      %v856 = vld [vmem:[%s142 + $0xb04] sm:$0xf]
      %v857 = vld [vmem:[%s142 + $0xb08] sm:$0xf]
      %v858 = vld [vmem:[%s142 + $0xb0c] sm:$0xf]
      %v859 = vld [vmem:[%s142 + $0xb10] sm:$0xf]
      %v860 = vld [vmem:[%s142 + $0xb14] sm:$0xf]
      %v861 = vld [vmem:[%s142 + $0xb18] sm:$0xf]
      %v862 = vld [vmem:[%s142 + $0xb1c] sm:$0xf]
      %v863 = vld [vmem:[%s142 + $0xb20] sm:$0xf]
      %v864 = vld [vmem:[%s142 + $0xb24] sm:$0xf]
      %v865 = vld [vmem:[%s142 + $0xb28] sm:$0xf]
      %v866 = vld [vmem:[%s142 + $0xb2c] sm:$0xf]
      %v867 = vld [vmem:[%s142 + $0xb30] sm:$0xf]
      %v868 = vld [vmem:[%s142 + $0xb34] sm:$0xf]
      %v869 = vld [vmem:[%s142 + $0xb38] sm:$0xf]
      %v870 = vld [vmem:[%s142 + $0xb3c] sm:$0xf]
      %v871 = vld [vmem:[%s142 + $0xb40] sm:$0xf]
      %v872 = vld [vmem:[%s142 + $0xb44] sm:$0xf]
      %v873 = vld [vmem:[%s142 + $0xb48] sm:$0xf]
      %v874 = vld [vmem:[%s142 + $0xb4c] sm:$0xf]
      %v875 = vld [vmem:[%s142 + $0xb50] sm:$0xf]
      %v876 = vld [vmem:[%s142 + $0xb54] sm:$0xf]
      %v877 = vld [vmem:[%s142 + $0xb58] sm:$0xf]
      %v878 = vld [vmem:[%s142 + $0xb5c] sm:$0xf]
      %v879 = vld [vmem:[%s142 + $0xb60] sm:$0xf]
      %v880 = vld [vmem:[%s142 + $0xb64] sm:$0xf]
      %v881 = vld [vmem:[%s142 + $0xb68] sm:$0xf]
      %v882 = vld [vmem:[%s142 + $0xb6c] sm:$0xf]
      %v883 = vld [vmem:[%s142 + $0xb70] sm:$0xf]
      %v884 = vld [vmem:[%s142 + $0xb74] sm:$0xf]
      %v885 = vld [vmem:[%s142 + $0xb78] sm:$0xf]
      %v886 = vld [vmem:[%s142 + $0xb7c] sm:$0xf]
      %v887 = vld [vmem:[%s142 + $0xb80] sm:$0xf]
      %v888 = vld [vmem:[%s142 + $0xb84] sm:$0xf]
      %v889 = vld [vmem:[%s142 + $0xb88] sm:$0xf]
      %v890 = vld [vmem:[%s142 + $0xb8c] sm:$0xf]
      %v891 = vld [vmem:[%s142 + $0xb90] sm:$0xf]
      %v892 = vld [vmem:[%s142 + $0xb94] sm:$0xf]
      %v893 = vld [vmem:[%s142 + $0xb98] sm:$0xf]
      %v894 = vld [vmem:[%s142 + $0xb9c] sm:$0xf]
      %v895 = vld [vmem:[%s142 + $0xba0] sm:$0xf]
      %v896 = vld [vmem:[%s142 + $0xba4] sm:$0xf]
      %v897 = vld [vmem:[%s142 + $0xba8] sm:$0xf]
      %v898 = vld [vmem:[%s142 + $0xbac] sm:$0xf]
      %v899 = vld [vmem:[%s142 + $0xbb0] sm:$0xf]
      %v900 = vld [vmem:[%s142 + $0xbb4] sm:$0xf]
      %v901 = vld [vmem:[%s142 + $0xbb8] sm:$0xf]
      %v902 = vld [vmem:[%s142 + $0xbbc] sm:$0xf]
      %v903 = vld [vmem:[%s142 + $0xbc0] sm:$0xf]
      %v904 = vld [vmem:[%s142 + $0xbc4] sm:$0xf]
      %v905 = vld [vmem:[%s142 + $0xbc8] sm:$0xf]
      %v906 = vld [vmem:[%s142 + $0xbcc] sm:$0xf]
      %v907 = vld [vmem:[%s142 + $0xbd0] sm:$0xf]
      %v908 = vld [vmem:[%s142 + $0xbd4] sm:$0xf]
      %v909 = vld [vmem:[%s142 + $0xbd8] sm:$0xf]
      %v910 = vld [vmem:[%s142 + $0xbdc] sm:$0xf]
      %v911 = vld [vmem:[%s142 + $0xbe0] sm:$0xf]
      %v912 = vld [vmem:[%s142 + $0xbe4] sm:$0xf]
      %v913 = vld [vmem:[%s142 + $0xbe8] sm:$0xf]
      %v914 = vld [vmem:[%s142 + $0xbec] sm:$0xf]
      %v915 = vld [vmem:[%s142 + $0xbf0] sm:$0xf]
      %v916 = vld [vmem:[%s142 + $0xbf4] sm:$0xf]
      %v917 = vld [vmem:[%s142 + $0xbf8] sm:$0xf]
      %v918 = vld [vmem:[%s142 + $0xbfc] sm:$0xf]
      %v919 = vld [vmem:[%s142 + $0xc00] sm:$0xf]
      %v920 = vld [vmem:[%s142 + $0xc04] sm:$0xf]
      %v921 = vld [vmem:[%s142 + $0xc08] sm:$0xf]
      %v922 = vld [vmem:[%s142 + $0xc0c] sm:$0xf]
      %v923 = vld [vmem:[%s142 + $0xc10] sm:$0xf]
      %v924 = vld [vmem:[%s142 + $0xc14] sm:$0xf]
      %v925 = vld [vmem:[%s142 + $0xc18] sm:$0xf]
      %v926 = vld [vmem:[%s142 + $0xc1c] sm:$0xf]
      %v927 = vld [vmem:[%s142 + $0xc20] sm:$0xf]
      %v928 = vld [vmem:[%s142 + $0xc24] sm:$0xf]
      %v929 = vld [vmem:[%s142 + $0xc28] sm:$0xf]
      %v930 = vld [vmem:[%s142 + $0xc2c] sm:$0xf]
      %v931 = vld [vmem:[%s142 + $0xc30] sm:$0xf]
      %v932 = vld [vmem:[%s142 + $0xc34] sm:$0xf]
      %v933 = vld [vmem:[%s142 + $0xc38] sm:$0xf]
      %v934 = vld [vmem:[%s142 + $0xc3c] sm:$0xf]
      %v935 = vld [vmem:[%s142 + $0xc40] sm:$0xf]
      %v936 = vld [vmem:[%s142 + $0xc44] sm:$0xf]
      %v937 = vld [vmem:[%s142 + $0xc48] sm:$0xf]
      %v938 = vld [vmem:[%s142 + $0xc4c] sm:$0xf]
      %v939 = vld [vmem:[%s142 + $0xc50] sm:$0xf]
      %v940 = vld [vmem:[%s142 + $0xc54] sm:$0xf]
      %v941 = vld [vmem:[%s142 + $0xc58] sm:$0xf]
      %v942 = vld [vmem:[%s142 + $0xc5c] sm:$0xf]
      %v943 = vld [vmem:[%s142 + $0xc60] sm:$0xf]
      %v944 = vld [vmem:[%s142 + $0xc64] sm:$0xf]
      %v945 = vld [vmem:[%s142 + $0xc68] sm:$0xf]
      %v946 = vld [vmem:[%s142 + $0xc6c] sm:$0xf]
      %v947 = vld [vmem:[%s142 + $0xc70] sm:$0xf]
      %v948 = vld [vmem:[%s142 + $0xc74] sm:$0xf]
      %v949 = vld [vmem:[%s142 + $0xc78] sm:$0xf]
      %v950 = vld [vmem:[%s142 + $0xc7c] sm:$0xf]
      %v951 = vld [vmem:[%s142 + $0xc80] sm:$0xf]
      %v952 = vld [vmem:[%s142 + $0xc84] sm:$0xf]
      %v953 = vld [vmem:[%s142 + $0xc88] sm:$0xf]
      %v954 = vld [vmem:[%s142 + $0xc8c] sm:$0xf]
      %v955 = vld [vmem:[%s142 + $0xc90] sm:$0xf]
      %v956 = vld [vmem:[%s142 + $0xc94] sm:$0xf]
      %v957 = vld [vmem:[%s142 + $0xc98] sm:$0xf]
      %v958 = vld [vmem:[%s142 + $0xc9c] sm:$0xf]
      %v959 = vld [vmem:[%s142 + $0xca0] sm:$0xf]
      %v960 = vld [vmem:[%s142 + $0xca4] sm:$0xf]
      %v961 = vld [vmem:[%s142 + $0xca8] sm:$0xf]
      %v962 = vld [vmem:[%s142 + $0xcac] sm:$0xf]
      %v963 = vld [vmem:[%s142 + $0xcb0] sm:$0xf]
      %v964 = vld [vmem:[%s142 + $0xcb4] sm:$0xf]
      %v965 = vld [vmem:[%s142 + $0xcb8] sm:$0xf]
      %v966 = vld [vmem:[%s142 + $0xcbc] sm:$0xf]
      %v967 = vld [vmem:[%s142 + $0xcc0] sm:$0xf]
      %v968 = vld [vmem:[%s142 + $0xcc4] sm:$0xf]
      %v969 = vld [vmem:[%s142 + $0xcc8] sm:$0xf]
      %v970 = vld [vmem:[%s142 + $0xccc] sm:$0xf]
      %v971 = vld [vmem:[%s142 + $0xcd0] sm:$0xf]
      %v972 = vld [vmem:[%s142 + $0xcd4] sm:$0xf]
      %v973 = vld [vmem:[%s142 + $0xcd8] sm:$0xf]
      %v974 = vld [vmem:[%s142 + $0xcdc] sm:$0xf]
      %v975 = vld [vmem:[%s142 + $0xce0] sm:$0xf]
      %v976 = vld [vmem:[%s142 + $0xce4] sm:$0xf]
      %v977 = vld [vmem:[%s142 + $0xce8] sm:$0xf]
      %v978 = vld [vmem:[%s142 + $0xcec] sm:$0xf]
      %v979 = vld [vmem:[%s142 + $0xcf0] sm:$0xf]
      %v980 = vld [vmem:[%s142 + $0xcf4] sm:$0xf]
      %v981 = vld [vmem:[%s142 + $0xcf8] sm:$0xf]
      %v982 = vld [vmem:[%s142 + $0xcfc] sm:$0xf]
      %v983 = vld [vmem:[%s142 + $0xd00] sm:$0xf]
      %v984 = vld [vmem:[%s142 + $0xd04] sm:$0xf]
      %v985 = vld [vmem:[%s142 + $0xd08] sm:$0xf]
      %v986 = vld [vmem:[%s142 + $0xd0c] sm:$0xf]
      %v987 = vld [vmem:[%s142 + $0xd10] sm:$0xf]
      %v988 = vld [vmem:[%s142 + $0xd14] sm:$0xf]
      %v989 = vld [vmem:[%s142 + $0xd18] sm:$0xf]
      %v990 = vld [vmem:[%s142 + $0xd1c] sm:$0xf]
      %v991 = vld [vmem:[%s142 + $0xd20] sm:$0xf]
      %v992 = vld [vmem:[%s142 + $0xd24] sm:$0xf]
      %v993 = vld [vmem:[%s142 + $0xd28] sm:$0xf]
      %v994 = vld [vmem:[%s142 + $0xd2c] sm:$0xf]
      %v995 = vld [vmem:[%s142 + $0xd30] sm:$0xf]
      %v996 = vld [vmem:[%s142 + $0xd34] sm:$0xf]
      %v997 = vld [vmem:[%s142 + $0xd38] sm:$0xf]
      %v998 = vld [vmem:[%s142 + $0xd3c] sm:$0xf]
      %v999 = vld [vmem:[%s142 + $0xd40] sm:$0xf]
      %v1000 = vld [vmem:[%s142 + $0xd44] sm:$0xf]
      %v1001 = vld [vmem:[%s142 + $0xd48] sm:$0xf]
      %v1002 = vld [vmem:[%s142 + $0xd4c] sm:$0xf]
      %v1003 = vld [vmem:[%s142 + $0xd50] sm:$0xf]
      %v1004 = vld [vmem:[%s142 + $0xd54] sm:$0xf]
      %v1005 = vld [vmem:[%s142 + $0xd58] sm:$0xf]
      %v1006 = vld [vmem:[%s142 + $0xd5c] sm:$0xf]
      %v1007 = vld [vmem:[%s142 + $0xd60] sm:$0xf]
      %v1008 = vld [vmem:[%s142 + $0xd64] sm:$0xf]
      %v1009 = vld [vmem:[%s142 + $0xd68] sm:$0xf]
      %v1010 = vld [vmem:[%s142 + $0xd6c] sm:$0xf]
      %v1011 = vld [vmem:[%s142 + $0xd70] sm:$0xf]
      %v1012 = vld [vmem:[%s142 + $0xd74] sm:$0xf]
      %v1013 = vld [vmem:[%s142 + $0xd78] sm:$0xf]
      %v1014 = vld [vmem:[%s142 + $0xd7c] sm:$0xf]
      %v1015 = vld [vmem:[%s142 + $0xd80] sm:$0xf]
      %v1016 = vld [vmem:[%s142 + $0xd84] sm:$0xf]
      %v1017 = vld [vmem:[%s142 + $0xd88] sm:$0xf]
      %v1018 = vld [vmem:[%s142 + $0xd8c] sm:$0xf]
      %v1019 = vld [vmem:[%s142 + $0xd90] sm:$0xf]
      %v1020 = vld [vmem:[%s142 + $0xd94] sm:$0xf]
      %v1021 = vld [vmem:[%s142 + $0xd98] sm:$0xf]
      %v1022 = vld [vmem:[%s142 + $0xd9c] sm:$0xf]
      %v1023 = vld [vmem:[%s142 + $0xda0] sm:$0xf]
      %v1024 = vld [vmem:[%s142 + $0xda4] sm:$0xf]
      %v1025 = vld [vmem:[%s142 + $0xda8] sm:$0xf]
      %v1026 = vld [vmem:[%s142 + $0xdac] sm:$0xf]
      %v1027 = vld [vmem:[%s142 + $0xdb0] sm:$0xf]
      %v1028 = vld [vmem:[%s142 + $0xdb4] sm:$0xf]
      %v1029 = vld [vmem:[%s142 + $0xdb8] sm:$0xf]
      %v1030 = vld [vmem:[%s142 + $0xdbc] sm:$0xf]
      %v1031 = vld [vmem:[%s142 + $0xdc0] sm:$0xf]
      %v1032 = vld [vmem:[%s142 + $0xdc4] sm:$0xf]
      %v1033 = vld [vmem:[%s142 + $0xdc8] sm:$0xf]
      %v1034 = vld [vmem:[%s142 + $0xdcc] sm:$0xf]
      %v1035 = vld [vmem:[%s142 + $0xdd0] sm:$0xf]
      %v1036 = vld [vmem:[%s142 + $0xdd4] sm:$0xf]
      %v1037 = vld [vmem:[%s142 + $0xdd8] sm:$0xf]
      %v1038 = vld [vmem:[%s142 + $0xddc] sm:$0xf]
      %v1039 = vld [vmem:[%s142 + $0xde0] sm:$0xf]
      %v1040 = vld [vmem:[%s142 + $0xde4] sm:$0xf]
      %v1041 = vld [vmem:[%s142 + $0xde8] sm:$0xf]
      %v1042 = vld [vmem:[%s142 + $0xdec] sm:$0xf]
      %v1043 = vld [vmem:[%s142 + $0xdf0] sm:$0xf]
      %v1044 = vld [vmem:[%s142 + $0xdf4] sm:$0xf]
      %v1045 = vld [vmem:[%s142 + $0xdf8] sm:$0xf]
      %v1046 = vld [vmem:[%s142 + $0xdfc] sm:$0xf]
      %v1047 = vld [vmem:[%s142 + $0xe00] sm:$0xf]
      %v1048 = vld [vmem:[%s142 + $0xe04] sm:$0xf]
      %v1049 = vld [vmem:[%s142 + $0xe08] sm:$0xf]
      %v1050 = vld [vmem:[%s142 + $0xe0c] sm:$0xf]
      %v1051 = vld [vmem:[%s142 + $0xe10] sm:$0xf]
      %v1052 = vld [vmem:[%s142 + $0xe14] sm:$0xf]
      %v1053 = vld [vmem:[%s142 + $0xe18] sm:$0xf]
      %v1054 = vld [vmem:[%s142 + $0xe1c] sm:$0xf]
      %v1055 = vld [vmem:[%s142 + $0xe20] sm:$0xf]
      %v1056 = vld [vmem:[%s142 + $0xe24] sm:$0xf]
      %v1057 = vld [vmem:[%s142 + $0xe28] sm:$0xf]
      %v1058 = vld [vmem:[%s142 + $0xe2c] sm:$0xf]
      %v1059 = vld [vmem:[%s142 + $0xe30] sm:$0xf]
      %v1060 = vld [vmem:[%s142 + $0xe34] sm:$0xf]
      %v1061 = vld [vmem:[%s142 + $0xe38] sm:$0xf]
      %v1062 = vld [vmem:[%s142 + $0xe3c] sm:$0xf]
      %v1063 = vld [vmem:[%s142 + $0xe40] sm:$0xf]
      %v1064 = vld [vmem:[%s142 + $0xe44] sm:$0xf]
      %v1065 = vld [vmem:[%s142 + $0xe48] sm:$0xf]
      %v1066 = vld [vmem:[%s142 + $0xe4c] sm:$0xf]
      %v1067 = vld [vmem:[%s142 + $0xe50] sm:$0xf]
      %v1068 = vld [vmem:[%s142 + $0xe54] sm:$0xf]
      %v1069 = vld [vmem:[%s142 + $0xe58] sm:$0xf]
      %v1070 = vld [vmem:[%s142 + $0xe5c] sm:$0xf]
      %v1071 = vld [vmem:[%s142 + $0xe60] sm:$0xf]
      %v1072 = vld [vmem:[%s142 + $0xe64] sm:$0xf]
      %v1073 = vld [vmem:[%s142 + $0xe68] sm:$0xf]
      %v1074 = vld [vmem:[%s142 + $0xe6c] sm:$0xf]
      %v1075 = vld [vmem:[%s142 + $0xe70] sm:$0xf]
      %v1076 = vld [vmem:[%s142 + $0xe74] sm:$0xf]
      %v1077 = vld [vmem:[%s142 + $0xe78] sm:$0xf]
      %v1078 = vld [vmem:[%s142 + $0xe7c] sm:$0xf]
      %v1079 = vld [vmem:[%s142 + $0xe80] sm:$0xf]
      %v1080 = vld [vmem:[%s142 + $0xe84] sm:$0xf]
      %v1081 = vld [vmem:[%s142 + $0xe88] sm:$0xf]
      %v1082 = vld [vmem:[%s142 + $0xe8c] sm:$0xf]
      %v1083 = vld [vmem:[%s142 + $0xe90] sm:$0xf]
      %v1084 = vld [vmem:[%s142 + $0xe94] sm:$0xf]
      %v1085 = vld [vmem:[%s142 + $0xe98] sm:$0xf]
      %v1086 = vld [vmem:[%s142 + $0xe9c] sm:$0xf]
      %v1087 = vld [vmem:[%s142 + $0xea0] sm:$0xf]
      %v1088 = vld [vmem:[%s142 + $0xea4] sm:$0xf]
      %v1089 = vld [vmem:[%s142 + $0xea8] sm:$0xf]
      %v1090 = vld [vmem:[%s142 + $0xeac] sm:$0xf]
      %v1091 = vld [vmem:[%s142 + $0xeb0] sm:$0xf]
      %v1092 = vld [vmem:[%s142 + $0xeb4] sm:$0xf]
      %v1093 = vld [vmem:[%s142 + $0xeb8] sm:$0xf]
      %v1094 = vld [vmem:[%s142 + $0xebc] sm:$0xf]
      %v1095 = vld [vmem:[%s142 + $0xec0] sm:$0xf]
      %v1096 = vld [vmem:[%s142 + $0xec4] sm:$0xf]
      %v1097 = vld [vmem:[%s142 + $0xec8] sm:$0xf]
      %v1098 = vld [vmem:[%s142 + $0xecc] sm:$0xf]
      %v1099 = vld [vmem:[%s142 + $0xed0] sm:$0xf]
      %v1100 = vld [vmem:[%s142 + $0xed4] sm:$0xf]
      %v1101 = vld [vmem:[%s142 + $0xed8] sm:$0xf]
      %v1102 = vld [vmem:[%s142 + $0xedc] sm:$0xf]
      %v1103 = vld [vmem:[%s142 + $0xee0] sm:$0xf]
      %v1104 = vld [vmem:[%s142 + $0xee4] sm:$0xf]
      %v1105 = vld [vmem:[%s142 + $0xee8] sm:$0xf]
      %v1106 = vld [vmem:[%s142 + $0xeec] sm:$0xf]
      %v1107 = vld [vmem:[%s142 + $0xef0] sm:$0xf]
      %v1108 = vld [vmem:[%s142 + $0xef4] sm:$0xf]
      %v1109 = vld [vmem:[%s142 + $0xef8] sm:$0xf]
      %v1110 = vld [vmem:[%s142 + $0xefc] sm:$0xf]
      %v1111 = vld [vmem:[%s142 + $0xf00] sm:$0xf]
      %v1112 = vld [vmem:[%s142 + $0xf04] sm:$0xf]
      %v1113 = vld [vmem:[%s142 + $0xf08] sm:$0xf]
      %v1114 = vld [vmem:[%s142 + $0xf0c] sm:$0xf]
      %v1115 = vld [vmem:[%s142 + $0xf10] sm:$0xf]
      %v1116 = vld [vmem:[%s142 + $0xf14] sm:$0xf]
      %v1117 = vld [vmem:[%s142 + $0xf18] sm:$0xf]
      %v1118 = vld [vmem:[%s142 + $0xf1c] sm:$0xf]
      %v1119 = vld [vmem:[%s142 + $0xf20] sm:$0xf]
      %v1120 = vld [vmem:[%s142 + $0xf24] sm:$0xf]
      %v1121 = vld [vmem:[%s142 + $0xf28] sm:$0xf]
      %v1122 = vld [vmem:[%s142 + $0xf2c] sm:$0xf]
      %v1123 = vld [vmem:[%s142 + $0xf30] sm:$0xf]
      %v1124 = vld [vmem:[%s142 + $0xf34] sm:$0xf]
      %v1125 = vld [vmem:[%s142 + $0xf38] sm:$0xf]
      %v1126 = vld [vmem:[%s142 + $0xf3c] sm:$0xf]
      %v1127 = vld [vmem:[%s142 + $0xf40] sm:$0xf]
      %v1128 = vld [vmem:[%s142 + $0xf44] sm:$0xf]
      %v1129 = vld [vmem:[%s142 + $0xf48] sm:$0xf]
      %v1130 = vld [vmem:[%s142 + $0xf4c] sm:$0xf]
      %v1131 = vld [vmem:[%s142 + $0xf50] sm:$0xf]
      %v1132 = vld [vmem:[%s142 + $0xf54] sm:$0xf]
      %v1133 = vld [vmem:[%s142 + $0xf58] sm:$0xf]
      %v1134 = vld [vmem:[%s142 + $0xf5c] sm:$0xf]
      %v1135 = vld [vmem:[%s142 + $0xf60] sm:$0xf]
      %v1136 = vld [vmem:[%s142 + $0xf64] sm:$0xf]
      %v1137 = vld [vmem:[%s142 + $0xf68] sm:$0xf]
      %v1138 = vld [vmem:[%s142 + $0xf6c] sm:$0xf]
      %v1139 = vld [vmem:[%s142 + $0xf70] sm:$0xf]
      %v1140 = vld [vmem:[%s142 + $0xf74] sm:$0xf]
      %v1141 = vld [vmem:[%s142 + $0xf78] sm:$0xf]
      %v1142 = vld [vmem:[%s142 + $0xf7c] sm:$0xf]
      %v1143 = vld [vmem:[%s142 + $0xf80] sm:$0xf]
      %v1144 = vld [vmem:[%s142 + $0xf84] sm:$0xf]
      %v1145 = vld [vmem:[%s142 + $0xf88] sm:$0xf]
      %v1146 = vld [vmem:[%s142 + $0xf8c] sm:$0xf]
      %v1147 = vld [vmem:[%s142 + $0xf90] sm:$0xf]
      %v1148 = vld [vmem:[%s142 + $0xf94] sm:$0xf]
      %v1149 = vld [vmem:[%s142 + $0xf98] sm:$0xf]
      %v1150 = vld [vmem:[%s142 + $0xf9c] sm:$0xf]
      %v1151 = vld [vmem:[%s142 + $0xfa0] sm:$0xf]
      %v1152 = vld [vmem:[%s142 + $0xfa4] sm:$0xf]
      %v1153 = vld [vmem:[%s142 + $0xfa8] sm:$0xf]
      %v1154 = vld [vmem:[%s142 + $0xfac] sm:$0xf]
      %v1155 = vld [vmem:[%s142 + $0xfb0] sm:$0xf]
      %v1156 = vld [vmem:[%s142 + $0xfb4] sm:$0xf]
      %v1157 = vld [vmem:[%s142 + $0xfb8] sm:$0xf]
      %v1158 = vld [vmem:[%s142 + $0xfbc] sm:$0xf]
      %v1159 = vld [vmem:[%s142 + $0xfc0] sm:$0xf]
      %v1160 = vld [vmem:[%s142 + $0xfc4] sm:$0xf]
      %v1161 = vld [vmem:[%s142 + $0xfc8] sm:$0xf]
      %v1162 = vld [vmem:[%s142 + $0xfcc] sm:$0xf]
      %v1163 = vld [vmem:[%s142 + $0xfd0] sm:$0xf]
      %v1164 = vld [vmem:[%s142 + $0xfd4] sm:$0xf]
      %v1165 = vld [vmem:[%s142 + $0xfd8] sm:$0xf]
      %v1166 = vld [vmem:[%s142 + $0xfdc] sm:$0xf]
      %v1167 = vld [vmem:[%s142 + $0xfe0] sm:$0xf]
      %v1168 = vld [vmem:[%s142 + $0xfe4] sm:$0xf]
      %v1169 = vld [vmem:[%s142 + $0xfe8] sm:$0xf]
      %v1170 = vld [vmem:[%s142 + $0xfec] sm:$0xf]
      %v1171 = vld [vmem:[%s142 + $0xff0] sm:$0xf]
      %v1172 = vld [vmem:[%s142 + $0xff4] sm:$0xf]
      %v1173 = vld [vmem:[%s142 + $0xff8] sm:$0xf]
      %v1174 = vld [vmem:[%s142 + $0xffc] sm:$0xf]
      %v1175 = vunpack.c.l.bf16 %v151
      %v1176 = vunpack.c.l.bf16 %v152
      %v1177 = vunpack.c.l.bf16 %v153
      %v1178 = vunpack.c.l.bf16 %v154
      %v1179 = vunpack.c.l.bf16 %v155
      %v1180 = vunpack.c.l.bf16 %v156
      %v1181 = vunpack.c.l.bf16 %v157
      %v1182 = vunpack.c.l.bf16 %v158
      %v1183 = vunpack.c.l.bf16 %v159
      %v1184 = vunpack.c.l.bf16 %v160
      %v1185 = vunpack.c.l.bf16 %v161
      %v1186 = vunpack.c.l.bf16 %v162
      %v1187 = vunpack.c.l.bf16 %v163
      %v1188 = vunpack.c.l.bf16 %v164
      %v1189 = vunpack.c.l.bf16 %v165
      %v1190 = vunpack.c.l.bf16 %v166
      %v1191 = vunpack.c.l.bf16 %v167
      %v1192 = vunpack.c.l.bf16 %v168
      %v1193 = vunpack.c.l.bf16 %v169
      %v1194 = vunpack.c.l.bf16 %v170
      %v1195 = vunpack.c.l.bf16 %v171
      %v1196 = vunpack.c.l.bf16 %v172
      %v1197 = vunpack.c.l.bf16 %v173
      %v1198 = vunpack.c.l.bf16 %v174
      %v1199 = vunpack.c.l.bf16 %v175
      %v1200 = vunpack.c.l.bf16 %v176
      %v1201 = vunpack.c.l.bf16 %v177
      %v1202 = vunpack.c.l.bf16 %v178
      %v1203 = vunpack.c.l.bf16 %v179
      %v1204 = vunpack.c.l.bf16 %v180
      %v1205 = vunpack.c.l.bf16 %v181
      %v1206 = vunpack.c.l.bf16 %v182
      %v1207 = vunpack.c.l.bf16 %v183
      %v1208 = vunpack.c.l.bf16 %v184
      %v1209 = vunpack.c.l.bf16 %v185
      %v1210 = vunpack.c.l.bf16 %v186
      %v1211 = vunpack.c.l.bf16 %v187
      %v1212 = vunpack.c.l.bf16 %v188
      %v1213 = vunpack.c.l.bf16 %v189
      %v1214 = vunpack.c.l.bf16 %v190
      %v1215 = vunpack.c.l.bf16 %v191
      %v1216 = vunpack.c.l.bf16 %v192
      %v1217 = vunpack.c.l.bf16 %v193
      %v1218 = vunpack.c.l.bf16 %v194
      %v1219 = vunpack.c.l.bf16 %v195
      %v1220 = vunpack.c.l.bf16 %v196
      %v1221 = vunpack.c.l.bf16 %v197
      %v1222 = vunpack.c.l.bf16 %v198
      %v1223 = vunpack.c.l.bf16 %v199
      %v1224 = vunpack.c.l.bf16 %v200
      %v1225 = vunpack.c.l.bf16 %v201
      %v1226 = vunpack.c.l.bf16 %v202
      %v1227 = vunpack.c.l.bf16 %v203
      %v1228 = vunpack.c.l.bf16 %v204
      %v1229 = vunpack.c.l.bf16 %v205
      %v1230 = vunpack.c.l.bf16 %v206
      %v1231 = vunpack.c.l.bf16 %v207
      %v1232 = vunpack.c.l.bf16 %v208
      %v1233 = vunpack.c.l.bf16 %v209
      %v1234 = vunpack.c.l.bf16 %v210
      %v1235 = vunpack.c.l.bf16 %v211
      %v1236 = vunpack.c.l.bf16 %v212
      %v1237 = vunpack.c.l.bf16 %v213
      %v1238 = vunpack.c.l.bf16 %v214
      %v1239 = vunpack.c.l.bf16 %v215
      %v1240 = vunpack.c.l.bf16 %v216
      %v1241 = vunpack.c.l.bf16 %v217
      %v1242 = vunpack.c.l.bf16 %v218
      %v1243 = vunpack.c.l.bf16 %v219
      %v1244 = vunpack.c.l.bf16 %v220
      %v1245 = vunpack.c.l.bf16 %v221
      %v1246 = vunpack.c.l.bf16 %v222
      %v1247 = vunpack.c.l.bf16 %v223
      %v1248 = vunpack.c.l.bf16 %v224
      %v1249 = vunpack.c.l.bf16 %v225
      %v1250 = vunpack.c.l.bf16 %v226
      %v1251 = vunpack.c.l.bf16 %v227
      %v1252 = vunpack.c.l.bf16 %v228
      %v1253 = vunpack.c.l.bf16 %v229
      %v1254 = vunpack.c.l.bf16 %v230
      %v1255 = vunpack.c.l.bf16 %v231
      %v1256 = vunpack.c.l.bf16 %v232
      %v1257 = vunpack.c.l.bf16 %v233
      %v1258 = vunpack.c.l.bf16 %v234
      %v1259 = vunpack.c.l.bf16 %v235
      %v1260 = vunpack.c.l.bf16 %v236
      %v1261 = vunpack.c.l.bf16 %v237
      %v1262 = vunpack.c.l.bf16 %v238
      %v1263 = vunpack.c.l.bf16 %v239
      %v1264 = vunpack.c.l.bf16 %v240
      %v1265 = vunpack.c.l.bf16 %v241
      %v1266 = vunpack.c.l.bf16 %v242
      %v1267 = vunpack.c.l.bf16 %v243
      %v1268 = vunpack.c.l.bf16 %v244
      %v1269 = vunpack.c.l.bf16 %v245
      %v1270 = vunpack.c.l.bf16 %v246
      %v1271 = vunpack.c.l.bf16 %v247
      %v1272 = vunpack.c.l.bf16 %v248
      %v1273 = vunpack.c.l.bf16 %v249
      %v1274 = vunpack.c.l.bf16 %v250
      %v1275 = vunpack.c.l.bf16 %v251
      %v1276 = vunpack.c.l.bf16 %v252
      %v1277 = vunpack.c.l.bf16 %v253
      %v1278 = vunpack.c.l.bf16 %v254
      %v1279 = vunpack.c.l.bf16 %v255
      %v1280 = vunpack.c.l.bf16 %v256
      %v1281 = vunpack.c.l.bf16 %v257
      %v1282 = vunpack.c.l.bf16 %v258
      %v1283 = vunpack.c.l.bf16 %v259
      %v1284 = vunpack.c.l.bf16 %v260
      %v1285 = vunpack.c.l.bf16 %v261
      %v1286 = vunpack.c.l.bf16 %v262
      %v1287 = vunpack.c.l.bf16 %v263
      %v1288 = vunpack.c.l.bf16 %v264
      %v1289 = vunpack.c.l.bf16 %v265
      %v1290 = vunpack.c.l.bf16 %v266
      %v1291 = vunpack.c.l.bf16 %v267
      %v1292 = vunpack.c.l.bf16 %v268
      %v1293 = vunpack.c.l.bf16 %v269
      %v1294 = vunpack.c.l.bf16 %v270
      %v1295 = vunpack.c.l.bf16 %v271
      %v1296 = vunpack.c.l.bf16 %v272
      %v1297 = vunpack.c.l.bf16 %v273
      %v1298 = vunpack.c.l.bf16 %v274
      %v1299 = vunpack.c.l.bf16 %v275
      %v1300 = vunpack.c.l.bf16 %v276
      %v1301 = vunpack.c.l.bf16 %v277
      %v1302 = vunpack.c.l.bf16 %v278
      %v1303 = vunpack.c.l.bf16 %v279
      %v1304 = vunpack.c.l.bf16 %v280
      %v1305 = vunpack.c.l.bf16 %v281
      %v1306 = vunpack.c.l.bf16 %v282
      %v1307 = vunpack.c.l.bf16 %v283
      %v1308 = vunpack.c.l.bf16 %v284
      %v1309 = vunpack.c.l.bf16 %v285
      %v1310 = vunpack.c.l.bf16 %v286
      %v1311 = vunpack.c.l.bf16 %v287
      %v1312 = vunpack.c.l.bf16 %v288
      %v1313 = vunpack.c.l.bf16 %v289
      %v1314 = vunpack.c.l.bf16 %v290
      %v1315 = vunpack.c.l.bf16 %v291
      %v1316 = vunpack.c.l.bf16 %v292
      %v1317 = vunpack.c.l.bf16 %v293
      %v1318 = vunpack.c.l.bf16 %v294
      %v1319 = vunpack.c.l.bf16 %v295
      %v1320 = vunpack.c.l.bf16 %v296
      %v1321 = vunpack.c.l.bf16 %v297
      %v1322 = vunpack.c.l.bf16 %v298
      %v1323 = vunpack.c.l.bf16 %v299
      %v1324 = vunpack.c.l.bf16 %v300
      %v1325 = vunpack.c.l.bf16 %v301
      %v1326 = vunpack.c.l.bf16 %v302
      %v1327 = vunpack.c.l.bf16 %v303
      %v1328 = vunpack.c.l.bf16 %v304
      %v1329 = vunpack.c.l.bf16 %v305
      %v1330 = vunpack.c.l.bf16 %v306
      %v1331 = vunpack.c.l.bf16 %v307
      %v1332 = vunpack.c.l.bf16 %v308
      %v1333 = vunpack.c.l.bf16 %v309
      %v1334 = vunpack.c.l.bf16 %v310
      %v1335 = vunpack.c.l.bf16 %v311
      %v1336 = vunpack.c.l.bf16 %v312
      %v1337 = vunpack.c.l.bf16 %v313
      %v1338 = vunpack.c.l.bf16 %v314
      %v1339 = vunpack.c.l.bf16 %v315
      %v1340 = vunpack.c.l.bf16 %v316
      %v1341 = vunpack.c.l.bf16 %v317
      %v1342 = vunpack.c.l.bf16 %v318
      %v1343 = vunpack.c.l.bf16 %v319
      %v1344 = vunpack.c.l.bf16 %v320
      %v1345 = vunpack.c.l.bf16 %v321
      %v1346 = vunpack.c.l.bf16 %v322
      %v1347 = vunpack.c.l.bf16 %v323
      %v1348 = vunpack.c.l.bf16 %v324
      %v1349 = vunpack.c.l.bf16 %v325
      %v1350 = vunpack.c.l.bf16 %v326
      %v1351 = vunpack.c.l.bf16 %v327
      %v1352 = vunpack.c.l.bf16 %v328
      %v1353 = vunpack.c.l.bf16 %v329
      %v1354 = vunpack.c.l.bf16 %v330
      %v1355 = vunpack.c.l.bf16 %v331
      %v1356 = vunpack.c.l.bf16 %v332
      %v1357 = vunpack.c.l.bf16 %v333
      %v1358 = vunpack.c.l.bf16 %v334
      %v1359 = vunpack.c.l.bf16 %v335
      %v1360 = vunpack.c.l.bf16 %v336
      %v1361 = vunpack.c.l.bf16 %v337
      %v1362 = vunpack.c.l.bf16 %v338
      %v1363 = vunpack.c.l.bf16 %v339
      %v1364 = vunpack.c.l.bf16 %v340
      %v1365 = vunpack.c.l.bf16 %v341
      %v1366 = vunpack.c.l.bf16 %v342
      %v1367 = vunpack.c.l.bf16 %v343
      %v1368 = vunpack.c.l.bf16 %v344
      %v1369 = vunpack.c.l.bf16 %v345
      %v1370 = vunpack.c.l.bf16 %v346
      %v1371 = vunpack.c.l.bf16 %v347
      %v1372 = vunpack.c.l.bf16 %v348
      %v1373 = vunpack.c.l.bf16 %v349
      %v1374 = vunpack.c.l.bf16 %v350
      %v1375 = vunpack.c.l.bf16 %v351
      %v1376 = vunpack.c.l.bf16 %v352
      %v1377 = vunpack.c.l.bf16 %v353
      %v1378 = vunpack.c.l.bf16 %v354
      %v1379 = vunpack.c.l.bf16 %v355
      %v1380 = vunpack.c.l.bf16 %v356
      %v1381 = vunpack.c.l.bf16 %v357
      %v1382 = vunpack.c.l.bf16 %v358
      %v1383 = vunpack.c.l.bf16 %v359
      %v1384 = vunpack.c.l.bf16 %v360
      %v1385 = vunpack.c.l.bf16 %v361
      %v1386 = vunpack.c.l.bf16 %v362
      %v1387 = vunpack.c.l.bf16 %v363
      %v1388 = vunpack.c.l.bf16 %v364
      %v1389 = vunpack.c.l.bf16 %v365
      %v1390 = vunpack.c.l.bf16 %v366
      %v1391 = vunpack.c.l.bf16 %v367
      %v1392 = vunpack.c.l.bf16 %v368
      %v1393 = vunpack.c.l.bf16 %v369
      %v1394 = vunpack.c.l.bf16 %v370
      %v1395 = vunpack.c.l.bf16 %v371
      %v1396 = vunpack.c.l.bf16 %v372
      %v1397 = vunpack.c.l.bf16 %v373
      %v1398 = vunpack.c.l.bf16 %v374
      %v1399 = vunpack.c.l.bf16 %v375
      %v1400 = vunpack.c.l.bf16 %v376
      %v1401 = vunpack.c.l.bf16 %v377
      %v1402 = vunpack.c.l.bf16 %v378
      %v1403 = vunpack.c.l.bf16 %v379
      %v1404 = vunpack.c.l.bf16 %v380
      %v1405 = vunpack.c.l.bf16 %v381
      %v1406 = vunpack.c.l.bf16 %v382
      %v1407 = vunpack.c.l.bf16 %v383
      %v1408 = vunpack.c.l.bf16 %v384
      %v1409 = vunpack.c.l.bf16 %v385
      %v1410 = vunpack.c.l.bf16 %v386
      %v1411 = vunpack.c.l.bf16 %v387
      %v1412 = vunpack.c.l.bf16 %v388
      %v1413 = vunpack.c.l.bf16 %v389
      %v1414 = vunpack.c.l.bf16 %v390
      %v1415 = vunpack.c.l.bf16 %v391
      %v1416 = vunpack.c.l.bf16 %v392
      %v1417 = vunpack.c.l.bf16 %v393
      %v1418 = vunpack.c.l.bf16 %v394
      %v1419 = vunpack.c.l.bf16 %v395
      %v1420 = vunpack.c.l.bf16 %v396
      %v1421 = vunpack.c.l.bf16 %v397
      %v1422 = vunpack.c.l.bf16 %v398
      %v1423 = vunpack.c.l.bf16 %v399
      %v1424 = vunpack.c.l.bf16 %v400
      %v1425 = vunpack.c.l.bf16 %v401
      %v1426 = vunpack.c.l.bf16 %v402
      %v1427 = vunpack.c.l.bf16 %v403
      %v1428 = vunpack.c.l.bf16 %v404
      %v1429 = vunpack.c.l.bf16 %v405
      %v1430 = vunpack.c.l.bf16 %v406
      %v1431 = vunpack.c.l.bf16 %v407
      %v1432 = vunpack.c.l.bf16 %v408
      %v1433 = vunpack.c.l.bf16 %v409
      %v1434 = vunpack.c.l.bf16 %v410
      %v1435 = vunpack.c.l.bf16 %v411
      %v1436 = vunpack.c.l.bf16 %v412
      %v1437 = vunpack.c.l.bf16 %v413
      %v1438 = vunpack.c.l.bf16 %v414
      %v1439 = vunpack.c.l.bf16 %v415
      %v1440 = vunpack.c.l.bf16 %v416
      %v1441 = vunpack.c.l.bf16 %v417
      %v1442 = vunpack.c.l.bf16 %v418
      %v1443 = vunpack.c.l.bf16 %v419
      %v1444 = vunpack.c.l.bf16 %v420
      %v1445 = vunpack.c.l.bf16 %v421
      %v1446 = vunpack.c.l.bf16 %v422
      %v1447 = vunpack.c.l.bf16 %v423
      %v1448 = vunpack.c.l.bf16 %v424
      %v1449 = vunpack.c.l.bf16 %v425
      %v1450 = vunpack.c.l.bf16 %v426
      %v1451 = vunpack.c.l.bf16 %v427
      %v1452 = vunpack.c.l.bf16 %v428
      %v1453 = vunpack.c.l.bf16 %v429
      %v1454 = vunpack.c.l.bf16 %v430
      %v1455 = vunpack.c.l.bf16 %v431
      %v1456 = vunpack.c.l.bf16 %v432
      %v1457 = vunpack.c.l.bf16 %v433
      %v1458 = vunpack.c.l.bf16 %v434
      %v1459 = vunpack.c.l.bf16 %v435
      %v1460 = vunpack.c.l.bf16 %v436
      %v1461 = vunpack.c.l.bf16 %v437
      %v1462 = vunpack.c.l.bf16 %v438
      %v1463 = vunpack.c.l.bf16 %v439
      %v1464 = vunpack.c.l.bf16 %v440
      %v1465 = vunpack.c.l.bf16 %v441
      %v1466 = vunpack.c.l.bf16 %v442
      %v1467 = vunpack.c.l.bf16 %v443
      %v1468 = vunpack.c.l.bf16 %v444
      %v1469 = vunpack.c.l.bf16 %v445
      %v1470 = vunpack.c.l.bf16 %v446
      %v1471 = vunpack.c.l.bf16 %v447
      %v1472 = vunpack.c.l.bf16 %v448
      %v1473 = vunpack.c.l.bf16 %v449
      %v1474 = vunpack.c.l.bf16 %v450
      %v1475 = vunpack.c.l.bf16 %v451
      %v1476 = vunpack.c.l.bf16 %v452
      %v1477 = vunpack.c.l.bf16 %v453
      %v1478 = vunpack.c.l.bf16 %v454
      %v1479 = vunpack.c.l.bf16 %v455
      %v1480 = vunpack.c.l.bf16 %v456
      %v1481 = vunpack.c.l.bf16 %v457
      %v1482 = vunpack.c.l.bf16 %v458
      %v1483 = vunpack.c.l.bf16 %v459
      %v1484 = vunpack.c.l.bf16 %v460
      %v1485 = vunpack.c.l.bf16 %v461
      %v1486 = vunpack.c.l.bf16 %v462
      %v1487 = vunpack.c.l.bf16 %v463
      %v1488 = vunpack.c.l.bf16 %v464
      %v1489 = vunpack.c.l.bf16 %v465
      %v1490 = vunpack.c.l.bf16 %v466
      %v1491 = vunpack.c.l.bf16 %v467
      %v1492 = vunpack.c.l.bf16 %v468
      %v1493 = vunpack.c.l.bf16 %v469
      %v1494 = vunpack.c.l.bf16 %v470
      %v1495 = vunpack.c.l.bf16 %v471
      %v1496 = vunpack.c.l.bf16 %v472
      %v1497 = vunpack.c.l.bf16 %v473
      %v1498 = vunpack.c.l.bf16 %v474
      %v1499 = vunpack.c.l.bf16 %v475
      %v1500 = vunpack.c.l.bf16 %v476
      %v1501 = vunpack.c.l.bf16 %v477
      %v1502 = vunpack.c.l.bf16 %v478
      %v1503 = vunpack.c.l.bf16 %v479
      %v1504 = vunpack.c.l.bf16 %v480
      %v1505 = vunpack.c.l.bf16 %v481
      %v1506 = vunpack.c.l.bf16 %v482
      %v1507 = vunpack.c.l.bf16 %v483
      %v1508 = vunpack.c.l.bf16 %v484
      %v1509 = vunpack.c.l.bf16 %v485
      %v1510 = vunpack.c.l.bf16 %v486
      %v1511 = vunpack.c.l.bf16 %v487
      %v1512 = vunpack.c.l.bf16 %v488
      %v1513 = vunpack.c.l.bf16 %v489
      %v1514 = vunpack.c.l.bf16 %v490
      %v1515 = vunpack.c.l.bf16 %v491
      %v1516 = vunpack.c.l.bf16 %v492
      %v1517 = vunpack.c.l.bf16 %v493
      %v1518 = vunpack.c.l.bf16 %v494
      %v1519 = vunpack.c.l.bf16 %v495
      %v1520 = vunpack.c.l.bf16 %v496
      %v1521 = vunpack.c.l.bf16 %v497
      %v1522 = vunpack.c.l.bf16 %v498
      %v1523 = vunpack.c.l.bf16 %v499
      %v1524 = vunpack.c.l.bf16 %v500
      %v1525 = vunpack.c.l.bf16 %v501
      %v1526 = vunpack.c.l.bf16 %v502
      %v1527 = vunpack.c.l.bf16 %v503
      %v1528 = vunpack.c.l.bf16 %v504
      %v1529 = vunpack.c.l.bf16 %v505
      %v1530 = vunpack.c.l.bf16 %v506
      %v1531 = vunpack.c.l.bf16 %v507
      %v1532 = vunpack.c.l.bf16 %v508
      %v1533 = vunpack.c.l.bf16 %v509
      %v1534 = vunpack.c.l.bf16 %v510
      %v1535 = vunpack.c.l.bf16 %v511
      %v1536 = vunpack.c.l.bf16 %v512
      %v1537 = vunpack.c.l.bf16 %v513
      %v1538 = vunpack.c.l.bf16 %v514
      %v1539 = vunpack.c.l.bf16 %v515
      %v1540 = vunpack.c.l.bf16 %v516
      %v1541 = vunpack.c.l.bf16 %v517
      %v1542 = vunpack.c.l.bf16 %v518
      %v1543 = vunpack.c.l.bf16 %v519
      %v1544 = vunpack.c.l.bf16 %v520
      %v1545 = vunpack.c.l.bf16 %v521
      %v1546 = vunpack.c.l.bf16 %v522
      %v1547 = vunpack.c.l.bf16 %v523
      %v1548 = vunpack.c.l.bf16 %v524
      %v1549 = vunpack.c.l.bf16 %v525
      %v1550 = vunpack.c.l.bf16 %v526
      %v1551 = vunpack.c.l.bf16 %v527
      %v1552 = vunpack.c.l.bf16 %v528
      %v1553 = vunpack.c.l.bf16 %v529
      %v1554 = vunpack.c.l.bf16 %v530
      %v1555 = vunpack.c.l.bf16 %v531
      %v1556 = vunpack.c.l.bf16 %v532
      %v1557 = vunpack.c.l.bf16 %v533
      %v1558 = vunpack.c.l.bf16 %v534
      %v1559 = vunpack.c.l.bf16 %v535
      %v1560 = vunpack.c.l.bf16 %v536
      %v1561 = vunpack.c.l.bf16 %v537
      %v1562 = vunpack.c.l.bf16 %v538
      %v1563 = vunpack.c.l.bf16 %v539
      %v1564 = vunpack.c.l.bf16 %v540
      %v1565 = vunpack.c.l.bf16 %v541
      %v1566 = vunpack.c.l.bf16 %v542
      %v1567 = vunpack.c.l.bf16 %v543
      %v1568 = vunpack.c.l.bf16 %v544
      %v1569 = vunpack.c.l.bf16 %v545
      %v1570 = vunpack.c.l.bf16 %v546
      %v1571 = vunpack.c.l.bf16 %v547
      %v1572 = vunpack.c.l.bf16 %v548
      %v1573 = vunpack.c.l.bf16 %v549
      %v1574 = vunpack.c.l.bf16 %v550
      %v1575 = vunpack.c.l.bf16 %v551
      %v1576 = vunpack.c.l.bf16 %v552
      %v1577 = vunpack.c.l.bf16 %v553
      %v1578 = vunpack.c.l.bf16 %v554
      %v1579 = vunpack.c.l.bf16 %v555
      %v1580 = vunpack.c.l.bf16 %v556
      %v1581 = vunpack.c.l.bf16 %v557
      %v1582 = vunpack.c.l.bf16 %v558
      %v1583 = vunpack.c.l.bf16 %v559
      %v1584 = vunpack.c.l.bf16 %v560
      %v1585 = vunpack.c.l.bf16 %v561
      %v1586 = vunpack.c.l.bf16 %v562
      %v1587 = vunpack.c.l.bf16 %v563
      %v1588 = vunpack.c.l.bf16 %v564
      %v1589 = vunpack.c.l.bf16 %v565
      %v1590 = vunpack.c.l.bf16 %v566
      %v1591 = vunpack.c.l.bf16 %v567
      %v1592 = vunpack.c.l.bf16 %v568
      %v1593 = vunpack.c.l.bf16 %v569
      %v1594 = vunpack.c.l.bf16 %v570
      %v1595 = vunpack.c.l.bf16 %v571
      %v1596 = vunpack.c.l.bf16 %v572
      %v1597 = vunpack.c.l.bf16 %v573
      %v1598 = vunpack.c.l.bf16 %v574
      %v1599 = vunpack.c.l.bf16 %v575
      %v1600 = vunpack.c.l.bf16 %v576
      %v1601 = vunpack.c.l.bf16 %v577
      %v1602 = vunpack.c.l.bf16 %v578
      %v1603 = vunpack.c.l.bf16 %v579
      %v1604 = vunpack.c.l.bf16 %v580
      %v1605 = vunpack.c.l.bf16 %v581
      %v1606 = vunpack.c.l.bf16 %v582
      %v1607 = vunpack.c.l.bf16 %v583
      %v1608 = vunpack.c.l.bf16 %v584
      %v1609 = vunpack.c.l.bf16 %v585
      %v1610 = vunpack.c.l.bf16 %v586
      %v1611 = vunpack.c.l.bf16 %v587
      %v1612 = vunpack.c.l.bf16 %v588
      %v1613 = vunpack.c.l.bf16 %v589
      %v1614 = vunpack.c.l.bf16 %v590
      %v1615 = vunpack.c.l.bf16 %v591
      %v1616 = vunpack.c.l.bf16 %v592
      %v1617 = vunpack.c.l.bf16 %v593
      %v1618 = vunpack.c.l.bf16 %v594
      %v1619 = vunpack.c.l.bf16 %v595
      %v1620 = vunpack.c.l.bf16 %v596
      %v1621 = vunpack.c.l.bf16 %v597
      %v1622 = vunpack.c.l.bf16 %v598
      %v1623 = vunpack.c.l.bf16 %v599
      %v1624 = vunpack.c.l.bf16 %v600
      %v1625 = vunpack.c.l.bf16 %v601
      %v1626 = vunpack.c.l.bf16 %v602
      %v1627 = vunpack.c.l.bf16 %v603
      %v1628 = vunpack.c.l.bf16 %v604
      %v1629 = vunpack.c.l.bf16 %v605
      %v1630 = vunpack.c.l.bf16 %v606
      %v1631 = vunpack.c.l.bf16 %v607
      %v1632 = vunpack.c.l.bf16 %v608
      %v1633 = vunpack.c.l.bf16 %v609
      %v1634 = vunpack.c.l.bf16 %v610
      %v1635 = vunpack.c.l.bf16 %v611
      %v1636 = vunpack.c.l.bf16 %v612
      %v1637 = vunpack.c.l.bf16 %v613
      %v1638 = vunpack.c.l.bf16 %v614
      %v1639 = vunpack.c.l.bf16 %v615
      %v1640 = vunpack.c.l.bf16 %v616
      %v1641 = vunpack.c.l.bf16 %v617
      %v1642 = vunpack.c.l.bf16 %v618
      %v1643 = vunpack.c.l.bf16 %v619
      %v1644 = vunpack.c.l.bf16 %v620
      %v1645 = vunpack.c.l.bf16 %v621
      %v1646 = vunpack.c.l.bf16 %v622
      %v1647 = vunpack.c.l.bf16 %v623
      %v1648 = vunpack.c.l.bf16 %v624
      %v1649 = vunpack.c.l.bf16 %v625
      %v1650 = vunpack.c.l.bf16 %v626
      %v1651 = vunpack.c.l.bf16 %v627
      %v1652 = vunpack.c.l.bf16 %v628
      %v1653 = vunpack.c.l.bf16 %v629
      %v1654 = vunpack.c.l.bf16 %v630
      %v1655 = vunpack.c.l.bf16 %v631
      %v1656 = vunpack.c.l.bf16 %v632
      %v1657 = vunpack.c.l.bf16 %v633
      %v1658 = vunpack.c.l.bf16 %v634
      %v1659 = vunpack.c.l.bf16 %v635
      %v1660 = vunpack.c.l.bf16 %v636
      %v1661 = vunpack.c.l.bf16 %v637
      %v1662 = vunpack.c.l.bf16 %v638
      %v1663 = vunpack.c.l.bf16 %v639
      %v1664 = vunpack.c.l.bf16 %v640
      %v1665 = vunpack.c.l.bf16 %v641
      %v1666 = vunpack.c.l.bf16 %v642
      %v1667 = vunpack.c.l.bf16 %v643
      %v1668 = vunpack.c.l.bf16 %v644
      %v1669 = vunpack.c.l.bf16 %v645
      %v1670 = vunpack.c.l.bf16 %v646
      %v1671 = vunpack.c.l.bf16 %v647
      %v1672 = vunpack.c.l.bf16 %v648
      %v1673 = vunpack.c.l.bf16 %v649
      %v1674 = vunpack.c.l.bf16 %v650
      %v1675 = vunpack.c.l.bf16 %v651
      %v1676 = vunpack.c.l.bf16 %v652
      %v1677 = vunpack.c.l.bf16 %v653
      %v1678 = vunpack.c.l.bf16 %v654
      %v1679 = vunpack.c.l.bf16 %v655
      %v1680 = vunpack.c.l.bf16 %v656
      %v1681 = vunpack.c.l.bf16 %v657
      %v1682 = vunpack.c.l.bf16 %v658
      %v1683 = vunpack.c.l.bf16 %v659
      %v1684 = vunpack.c.l.bf16 %v660
      %v1685 = vunpack.c.l.bf16 %v661
      %v1686 = vunpack.c.l.bf16 %v662
      %v1687 = vunpack.c.l.bf16 %v663
      %v1688 = vunpack.c.l.bf16 %v664
      %v1689 = vunpack.c.l.bf16 %v665
      %v1690 = vunpack.c.l.bf16 %v666
      %v1691 = vunpack.c.l.bf16 %v667
      %v1692 = vunpack.c.l.bf16 %v668
      %v1693 = vunpack.c.l.bf16 %v669
      %v1694 = vunpack.c.l.bf16 %v670
      %v1695 = vunpack.c.l.bf16 %v671
      %v1696 = vunpack.c.l.bf16 %v672
      %v1697 = vunpack.c.l.bf16 %v673
      %v1698 = vunpack.c.l.bf16 %v674
      %v1699 = vunpack.c.l.bf16 %v675
      %v1700 = vunpack.c.l.bf16 %v676
      %v1701 = vunpack.c.l.bf16 %v677
      %v1702 = vunpack.c.l.bf16 %v678
      %v1703 = vunpack.c.l.bf16 %v679
      %v1704 = vunpack.c.l.bf16 %v680
      %v1705 = vunpack.c.l.bf16 %v681
      %v1706 = vunpack.c.l.bf16 %v682
      %v1707 = vunpack.c.l.bf16 %v683
      %v1708 = vunpack.c.l.bf16 %v684
      %v1709 = vunpack.c.l.bf16 %v685
      %v1710 = vunpack.c.l.bf16 %v686
      %v1711 = vunpack.c.l.bf16 %v687
      %v1712 = vunpack.c.l.bf16 %v688
      %v1713 = vunpack.c.l.bf16 %v689
      %v1714 = vunpack.c.l.bf16 %v690
      %v1715 = vunpack.c.l.bf16 %v691
      %v1716 = vunpack.c.l.bf16 %v692
      %v1717 = vunpack.c.l.bf16 %v693
      %v1718 = vunpack.c.l.bf16 %v694
      %v1719 = vunpack.c.l.bf16 %v695
      %v1720 = vunpack.c.l.bf16 %v696
      %v1721 = vunpack.c.l.bf16 %v697
      %v1722 = vunpack.c.l.bf16 %v698
      %v1723 = vunpack.c.l.bf16 %v699
      %v1724 = vunpack.c.l.bf16 %v700
      %v1725 = vunpack.c.l.bf16 %v701
      %v1726 = vunpack.c.l.bf16 %v702
      %v1727 = vunpack.c.l.bf16 %v703
      %v1728 = vunpack.c.l.bf16 %v704
      %v1729 = vunpack.c.l.bf16 %v705
      %v1730 = vunpack.c.l.bf16 %v706
      %v1731 = vunpack.c.l.bf16 %v707
      %v1732 = vunpack.c.l.bf16 %v708
      %v1733 = vunpack.c.l.bf16 %v709
      %v1734 = vunpack.c.l.bf16 %v710
      %v1735 = vunpack.c.l.bf16 %v711
      %v1736 = vunpack.c.l.bf16 %v712
      %v1737 = vunpack.c.l.bf16 %v713
      %v1738 = vunpack.c.l.bf16 %v714
      %v1739 = vunpack.c.l.bf16 %v715
      %v1740 = vunpack.c.l.bf16 %v716
      %v1741 = vunpack.c.l.bf16 %v717
      %v1742 = vunpack.c.l.bf16 %v718
      %v1743 = vunpack.c.l.bf16 %v719
      %v1744 = vunpack.c.l.bf16 %v720
      %v1745 = vunpack.c.l.bf16 %v721
      %v1746 = vunpack.c.l.bf16 %v722
      %v1747 = vunpack.c.l.bf16 %v723
      %v1748 = vunpack.c.l.bf16 %v724
      %v1749 = vunpack.c.l.bf16 %v725
      %v1750 = vunpack.c.l.bf16 %v726
      %v1751 = vunpack.c.l.bf16 %v727
      %v1752 = vunpack.c.l.bf16 %v728
      %v1753 = vunpack.c.l.bf16 %v729
      %v1754 = vunpack.c.l.bf16 %v730
      %v1755 = vunpack.c.l.bf16 %v731
      %v1756 = vunpack.c.l.bf16 %v732
      %v1757 = vunpack.c.l.bf16 %v733
      %v1758 = vunpack.c.l.bf16 %v734
      %v1759 = vunpack.c.l.bf16 %v735
      %v1760 = vunpack.c.l.bf16 %v736
      %v1761 = vunpack.c.l.bf16 %v737
      %v1762 = vunpack.c.l.bf16 %v738
      %v1763 = vunpack.c.l.bf16 %v739
      %v1764 = vunpack.c.l.bf16 %v740
      %v1765 = vunpack.c.l.bf16 %v741
      %v1766 = vunpack.c.l.bf16 %v742
      %v1767 = vunpack.c.l.bf16 %v743
      %v1768 = vunpack.c.l.bf16 %v744
      %v1769 = vunpack.c.l.bf16 %v745
      %v1770 = vunpack.c.l.bf16 %v746
      %v1771 = vunpack.c.l.bf16 %v747
      %v1772 = vunpack.c.l.bf16 %v748
      %v1773 = vunpack.c.l.bf16 %v749
      %v1774 = vunpack.c.l.bf16 %v750
      %v1775 = vunpack.c.l.bf16 %v751
      %v1776 = vunpack.c.l.bf16 %v752
      %v1777 = vunpack.c.l.bf16 %v753
      %v1778 = vunpack.c.l.bf16 %v754
      %v1779 = vunpack.c.l.bf16 %v755
      %v1780 = vunpack.c.l.bf16 %v756
      %v1781 = vunpack.c.l.bf16 %v757
      %v1782 = vunpack.c.l.bf16 %v758
      %v1783 = vunpack.c.l.bf16 %v759
      %v1784 = vunpack.c.l.bf16 %v760
      %v1785 = vunpack.c.l.bf16 %v761
      %v1786 = vunpack.c.l.bf16 %v762
      %v1787 = vunpack.c.l.bf16 %v763
      %v1788 = vunpack.c.l.bf16 %v764
      %v1789 = vunpack.c.l.bf16 %v765
      %v1790 = vunpack.c.l.bf16 %v766
      %v1791 = vunpack.c.l.bf16 %v767
      %v1792 = vunpack.c.l.bf16 %v768
      %v1793 = vunpack.c.l.bf16 %v769
      %v1794 = vunpack.c.l.bf16 %v770
      %v1795 = vunpack.c.l.bf16 %v771
      %v1796 = vunpack.c.l.bf16 %v772
      %v1797 = vunpack.c.l.bf16 %v773
      %v1798 = vunpack.c.l.bf16 %v774
      %v1799 = vunpack.c.l.bf16 %v775
      %v1800 = vunpack.c.l.bf16 %v776
      %v1801 = vunpack.c.l.bf16 %v777
      %v1802 = vunpack.c.l.bf16 %v778
      %v1803 = vunpack.c.l.bf16 %v779
      %v1804 = vunpack.c.l.bf16 %v780
      %v1805 = vunpack.c.l.bf16 %v781
      %v1806 = vunpack.c.l.bf16 %v782
      %v1807 = vunpack.c.l.bf16 %v783
      %v1808 = vunpack.c.l.bf16 %v784
      %v1809 = vunpack.c.l.bf16 %v785
      %v1810 = vunpack.c.l.bf16 %v786
      %v1811 = vunpack.c.l.bf16 %v787
      %v1812 = vunpack.c.l.bf16 %v788
      %v1813 = vunpack.c.l.bf16 %v789
      %v1814 = vunpack.c.l.bf16 %v790
      %v1815 = vunpack.c.l.bf16 %v791
      %v1816 = vunpack.c.l.bf16 %v792
      %v1817 = vunpack.c.l.bf16 %v793
      %v1818 = vunpack.c.l.bf16 %v794
      %v1819 = vunpack.c.l.bf16 %v795
      %v1820 = vunpack.c.l.bf16 %v796
      %v1821 = vunpack.c.l.bf16 %v797
      %v1822 = vunpack.c.l.bf16 %v798
      %v1823 = vunpack.c.l.bf16 %v799
      %v1824 = vunpack.c.l.bf16 %v800
      %v1825 = vunpack.c.l.bf16 %v801
      %v1826 = vunpack.c.l.bf16 %v802
      %v1827 = vunpack.c.l.bf16 %v803
      %v1828 = vunpack.c.l.bf16 %v804
      %v1829 = vunpack.c.l.bf16 %v805
      %v1830 = vunpack.c.l.bf16 %v806
      %v1831 = vunpack.c.l.bf16 %v807
      %v1832 = vunpack.c.l.bf16 %v808
      %v1833 = vunpack.c.l.bf16 %v809
      %v1834 = vunpack.c.l.bf16 %v810
      %v1835 = vunpack.c.l.bf16 %v811
      %v1836 = vunpack.c.l.bf16 %v812
      %v1837 = vunpack.c.l.bf16 %v813
      %v1838 = vunpack.c.l.bf16 %v814
      %v1839 = vunpack.c.l.bf16 %v815
      %v1840 = vunpack.c.l.bf16 %v816
      %v1841 = vunpack.c.l.bf16 %v817
      %v1842 = vunpack.c.l.bf16 %v818
      %v1843 = vunpack.c.l.bf16 %v819
      %v1844 = vunpack.c.l.bf16 %v820
      %v1845 = vunpack.c.l.bf16 %v821
      %v1846 = vunpack.c.l.bf16 %v822
      %v1847 = vunpack.c.l.bf16 %v823
      %v1848 = vunpack.c.l.bf16 %v824
      %v1849 = vunpack.c.l.bf16 %v825
      %v1850 = vunpack.c.l.bf16 %v826
      %v1851 = vunpack.c.l.bf16 %v827
      %v1852 = vunpack.c.l.bf16 %v828
      %v1853 = vunpack.c.l.bf16 %v829
      %v1854 = vunpack.c.l.bf16 %v830
      %v1855 = vunpack.c.l.bf16 %v831
      %v1856 = vunpack.c.l.bf16 %v832
      %v1857 = vunpack.c.l.bf16 %v833
      %v1858 = vunpack.c.l.bf16 %v834
      %v1859 = vunpack.c.l.bf16 %v835
      %v1860 = vunpack.c.l.bf16 %v836
      %v1861 = vunpack.c.l.bf16 %v837
      %v1862 = vunpack.c.l.bf16 %v838
      %v1863 = vunpack.c.l.bf16 %v839
      %v1864 = vunpack.c.l.bf16 %v840
      %v1865 = vunpack.c.l.bf16 %v841
      %v1866 = vunpack.c.l.bf16 %v842
      %v1867 = vunpack.c.l.bf16 %v843
      %v1868 = vunpack.c.l.bf16 %v844
      %v1869 = vunpack.c.l.bf16 %v845
      %v1870 = vunpack.c.l.bf16 %v846
      %v1871 = vunpack.c.l.bf16 %v847
      %v1872 = vunpack.c.l.bf16 %v848
      %v1873 = vunpack.c.l.bf16 %v849
      %v1874 = vunpack.c.l.bf16 %v850
      %v1875 = vunpack.c.l.bf16 %v851
      %v1876 = vunpack.c.l.bf16 %v852
      %v1877 = vunpack.c.l.bf16 %v853
      %v1878 = vunpack.c.l.bf16 %v854
      %v1879 = vunpack.c.l.bf16 %v855
      %v1880 = vunpack.c.l.bf16 %v856
      %v1881 = vunpack.c.l.bf16 %v857
      %v1882 = vunpack.c.l.bf16 %v858
      %v1883 = vunpack.c.l.bf16 %v859
      %v1884 = vunpack.c.l.bf16 %v860
      %v1885 = vunpack.c.l.bf16 %v861
      %v1886 = vunpack.c.l.bf16 %v862
      %v1887 = vunpack.c.l.bf16 %v863
      %v1888 = vunpack.c.l.bf16 %v864
      %v1889 = vunpack.c.l.bf16 %v865
      %v1890 = vunpack.c.l.bf16 %v866
      %v1891 = vunpack.c.l.bf16 %v867
      %v1892 = vunpack.c.l.bf16 %v868
      %v1893 = vunpack.c.l.bf16 %v869
      %v1894 = vunpack.c.l.bf16 %v870
      %v1895 = vunpack.c.l.bf16 %v871
      %v1896 = vunpack.c.l.bf16 %v872
      %v1897 = vunpack.c.l.bf16 %v873
      %v1898 = vunpack.c.l.bf16 %v874
      %v1899 = vunpack.c.l.bf16 %v875
      %v1900 = vunpack.c.l.bf16 %v876
      %v1901 = vunpack.c.l.bf16 %v877
      %v1902 = vunpack.c.l.bf16 %v878
      %v1903 = vunpack.c.l.bf16 %v879
      %v1904 = vunpack.c.l.bf16 %v880
      %v1905 = vunpack.c.l.bf16 %v881
      %v1906 = vunpack.c.l.bf16 %v882
      %v1907 = vunpack.c.l.bf16 %v883
      %v1908 = vunpack.c.l.bf16 %v884
      %v1909 = vunpack.c.l.bf16 %v885
      %v1910 = vunpack.c.l.bf16 %v886
      %v1911 = vunpack.c.l.bf16 %v887
      %v1912 = vunpack.c.l.bf16 %v888
      %v1913 = vunpack.c.l.bf16 %v889
      %v1914 = vunpack.c.l.bf16 %v890
      %v1915 = vunpack.c.l.bf16 %v891
      %v1916 = vunpack.c.l.bf16 %v892
      %v1917 = vunpack.c.l.bf16 %v893
      %v1918 = vunpack.c.l.bf16 %v894
      %v1919 = vunpack.c.l.bf16 %v895
      %v1920 = vunpack.c.l.bf16 %v896
      %v1921 = vunpack.c.l.bf16 %v897
      %v1922 = vunpack.c.l.bf16 %v898
      %v1923 = vunpack.c.l.bf16 %v899
      %v1924 = vunpack.c.l.bf16 %v900
      %v1925 = vunpack.c.l.bf16 %v901
      %v1926 = vunpack.c.l.bf16 %v902
      %v1927 = vunpack.c.l.bf16 %v903
      %v1928 = vunpack.c.l.bf16 %v904
      %v1929 = vunpack.c.l.bf16 %v905
      %v1930 = vunpack.c.l.bf16 %v906
      %v1931 = vunpack.c.l.bf16 %v907
      %v1932 = vunpack.c.l.bf16 %v908
      %v1933 = vunpack.c.l.bf16 %v909
      %v1934 = vunpack.c.l.bf16 %v910
      %v1935 = vunpack.c.l.bf16 %v911
      %v1936 = vunpack.c.l.bf16 %v912
      %v1937 = vunpack.c.l.bf16 %v913
      %v1938 = vunpack.c.l.bf16 %v914
      %v1939 = vunpack.c.l.bf16 %v915
      %v1940 = vunpack.c.l.bf16 %v916
      %v1941 = vunpack.c.l.bf16 %v917
      %v1942 = vunpack.c.l.bf16 %v918
      %v1943 = vunpack.c.l.bf16 %v919
      %v1944 = vunpack.c.l.bf16 %v920
      %v1945 = vunpack.c.l.bf16 %v921
      %v1946 = vunpack.c.l.bf16 %v922
      %v1947 = vunpack.c.l.bf16 %v923
      %v1948 = vunpack.c.l.bf16 %v924
      %v1949 = vunpack.c.l.bf16 %v925
      %v1950 = vunpack.c.l.bf16 %v926
      %v1951 = vunpack.c.l.bf16 %v927
      %v1952 = vunpack.c.l.bf16 %v928
      %v1953 = vunpack.c.l.bf16 %v929
      %v1954 = vunpack.c.l.bf16 %v930
      %v1955 = vunpack.c.l.bf16 %v931
      %v1956 = vunpack.c.l.bf16 %v932
      %v1957 = vunpack.c.l.bf16 %v933
      %v1958 = vunpack.c.l.bf16 %v934
      %v1959 = vunpack.c.l.bf16 %v935
      %v1960 = vunpack.c.l.bf16 %v936
      %v1961 = vunpack.c.l.bf16 %v937
      %v1962 = vunpack.c.l.bf16 %v938
      %v1963 = vunpack.c.l.bf16 %v939
      %v1964 = vunpack.c.l.bf16 %v940
      %v1965 = vunpack.c.l.bf16 %v941
      %v1966 = vunpack.c.l.bf16 %v942
      %v1967 = vunpack.c.l.bf16 %v943
      %v1968 = vunpack.c.l.bf16 %v944
      %v1969 = vunpack.c.l.bf16 %v945
      %v1970 = vunpack.c.l.bf16 %v946
      %v1971 = vunpack.c.l.bf16 %v947
      %v1972 = vunpack.c.l.bf16 %v948
      %v1973 = vunpack.c.l.bf16 %v949
      %v1974 = vunpack.c.l.bf16 %v950
      %v1975 = vunpack.c.l.bf16 %v951
      %v1976 = vunpack.c.l.bf16 %v952
      %v1977 = vunpack.c.l.bf16 %v953
      %v1978 = vunpack.c.l.bf16 %v954
      %v1979 = vunpack.c.l.bf16 %v955
      %v1980 = vunpack.c.l.bf16 %v956
      %v1981 = vunpack.c.l.bf16 %v957
      %v1982 = vunpack.c.l.bf16 %v958
      %v1983 = vunpack.c.l.bf16 %v959
      %v1984 = vunpack.c.l.bf16 %v960
      %v1985 = vunpack.c.l.bf16 %v961
      %v1986 = vunpack.c.l.bf16 %v962
      %v1987 = vunpack.c.l.bf16 %v963
      %v1988 = vunpack.c.l.bf16 %v964
      %v1989 = vunpack.c.l.bf16 %v965
      %v1990 = vunpack.c.l.bf16 %v966
      %v1991 = vunpack.c.l.bf16 %v967
      %v1992 = vunpack.c.l.bf16 %v968
      %v1993 = vunpack.c.l.bf16 %v969
      %v1994 = vunpack.c.l.bf16 %v970
      %v1995 = vunpack.c.l.bf16 %v971
      %v1996 = vunpack.c.l.bf16 %v972
      %v1997 = vunpack.c.l.bf16 %v973
      %v1998 = vunpack.c.l.bf16 %v974
      %v1999 = vunpack.c.l.bf16 %v975
      %v2000 = vunpack.c.l.bf16 %v976
      %v2001 = vunpack.c.l.bf16 %v977
      %v2002 = vunpack.c.l.bf16 %v978
      %v2003 = vunpack.c.l.bf16 %v979
      %v2004 = vunpack.c.l.bf16 %v980
      %v2005 = vunpack.c.l.bf16 %v981
      %v2006 = vunpack.c.l.bf16 %v982
      %v2007 = vunpack.c.l.bf16 %v983
      %v2008 = vunpack.c.l.bf16 %v984
      %v2009 = vunpack.c.l.bf16 %v985
      %v2010 = vunpack.c.l.bf16 %v986
      %v2011 = vunpack.c.l.bf16 %v987
      %v2012 = vunpack.c.l.bf16 %v988
      %v2013 = vunpack.c.l.bf16 %v989
      %v2014 = vunpack.c.l.bf16 %v990
      %v2015 = vunpack.c.l.bf16 %v991
      %v2016 = vunpack.c.l.bf16 %v992
      %v2017 = vunpack.c.l.bf16 %v993
      %v2018 = vunpack.c.l.bf16 %v994
      %v2019 = vunpack.c.l.bf16 %v995
      %v2020 = vunpack.c.l.bf16 %v996
      %v2021 = vunpack.c.l.bf16 %v997
      %v2022 = vunpack.c.l.bf16 %v998
      %v2023 = vunpack.c.l.bf16 %v999
      %v2024 = vunpack.c.l.bf16 %v1000
      %v2025 = vunpack.c.l.bf16 %v1001
      %v2026 = vunpack.c.l.bf16 %v1002
      %v2027 = vunpack.c.l.bf16 %v1003
      %v2028 = vunpack.c.l.bf16 %v1004
      %v2029 = vunpack.c.l.bf16 %v1005
      %v2030 = vunpack.c.l.bf16 %v1006
      %v2031 = vunpack.c.l.bf16 %v1007
      %v2032 = vunpack.c.l.bf16 %v1008
      %v2033 = vunpack.c.l.bf16 %v1009
      %v2034 = vunpack.c.l.bf16 %v1010
      %v2035 = vunpack.c.l.bf16 %v1011
      %v2036 = vunpack.c.l.bf16 %v1012
      %v2037 = vunpack.c.l.bf16 %v1013
      %v2038 = vunpack.c.l.bf16 %v1014
      %v2039 = vunpack.c.l.bf16 %v1015
      %v2040 = vunpack.c.l.bf16 %v1016
      %v2041 = vunpack.c.l.bf16 %v1017
      %v2042 = vunpack.c.l.bf16 %v1018
      %v2043 = vunpack.c.l.bf16 %v1019
      %v2044 = vunpack.c.l.bf16 %v1020
      %v2045 = vunpack.c.l.bf16 %v1021
      %v2046 = vunpack.c.l.bf16 %v1022
      %v2047 = vunpack.c.l.bf16 %v1023
      %v2048 = vunpack.c.l.bf16 %v1024
      %v2049 = vunpack.c.l.bf16 %v1025
      %v2050 = vunpack.c.l.bf16 %v1026
      %v2051 = vunpack.c.l.bf16 %v1027
      %v2052 = vunpack.c.l.bf16 %v1028
      %v2053 = vunpack.c.l.bf16 %v1029
      %v2054 = vunpack.c.l.bf16 %v1030
      %v2055 = vunpack.c.l.bf16 %v1031
      %v2056 = vunpack.c.l.bf16 %v1032
      %v2057 = vunpack.c.l.bf16 %v1033
      %v2058 = vunpack.c.l.bf16 %v1034
      %v2059 = vunpack.c.l.bf16 %v1035
      %v2060 = vunpack.c.l.bf16 %v1036
      %v2061 = vunpack.c.l.bf16 %v1037
      %v2062 = vunpack.c.l.bf16 %v1038
      %v2063 = vunpack.c.l.bf16 %v1039
      %v2064 = vunpack.c.l.bf16 %v1040
      %v2065 = vunpack.c.l.bf16 %v1041
      %v2066 = vunpack.c.l.bf16 %v1042
      %v2067 = vunpack.c.l.bf16 %v1043
      %v2068 = vunpack.c.l.bf16 %v1044
      %v2069 = vunpack.c.l.bf16 %v1045
      %v2070 = vunpack.c.l.bf16 %v1046
      %v2071 = vunpack.c.l.bf16 %v1047
      %v2072 = vunpack.c.l.bf16 %v1048
      %v2073 = vunpack.c.l.bf16 %v1049
      %v2074 = vunpack.c.l.bf16 %v1050
      %v2075 = vunpack.c.l.bf16 %v1051
      %v2076 = vunpack.c.l.bf16 %v1052
      %v2077 = vunpack.c.l.bf16 %v1053
      %v2078 = vunpack.c.l.bf16 %v1054
      %v2079 = vunpack.c.l.bf16 %v1055
      %v2080 = vunpack.c.l.bf16 %v1056
      %v2081 = vunpack.c.l.bf16 %v1057
      %v2082 = vunpack.c.l.bf16 %v1058
      %v2083 = vunpack.c.l.bf16 %v1059
      %v2084 = vunpack.c.l.bf16 %v1060
      %v2085 = vunpack.c.l.bf16 %v1061
      %v2086 = vunpack.c.l.bf16 %v1062
      %v2087 = vunpack.c.l.bf16 %v1063
      %v2088 = vunpack.c.l.bf16 %v1064
      %v2089 = vunpack.c.l.bf16 %v1065
      %v2090 = vunpack.c.l.bf16 %v1066
      %v2091 = vunpack.c.l.bf16 %v1067
      %v2092 = vunpack.c.l.bf16 %v1068
      %v2093 = vunpack.c.l.bf16 %v1069
      %v2094 = vunpack.c.l.bf16 %v1070
      %v2095 = vunpack.c.l.bf16 %v1071
      %v2096 = vunpack.c.l.bf16 %v1072
      %v2097 = vunpack.c.l.bf16 %v1073
      %v2098 = vunpack.c.l.bf16 %v1074
      %v2099 = vunpack.c.l.bf16 %v1075
      %v2100 = vunpack.c.l.bf16 %v1076
      %v2101 = vunpack.c.l.bf16 %v1077
      %v2102 = vunpack.c.l.bf16 %v1078
      %v2103 = vunpack.c.l.bf16 %v1079
      %v2104 = vunpack.c.l.bf16 %v1080
      %v2105 = vunpack.c.l.bf16 %v1081
      %v2106 = vunpack.c.l.bf16 %v1082
      %v2107 = vunpack.c.l.bf16 %v1083
      %v2108 = vunpack.c.l.bf16 %v1084
      %v2109 = vunpack.c.l.bf16 %v1085
      %v2110 = vunpack.c.l.bf16 %v1086
      %v2111 = vunpack.c.l.bf16 %v1087
      %v2112 = vunpack.c.l.bf16 %v1088
      %v2113 = vunpack.c.l.bf16 %v1089
      %v2114 = vunpack.c.l.bf16 %v1090
      %v2115 = vunpack.c.l.bf16 %v1091
      %v2116 = vunpack.c.l.bf16 %v1092
      %v2117 = vunpack.c.l.bf16 %v1093
      %v2118 = vunpack.c.l.bf16 %v1094
      %v2119 = vunpack.c.l.bf16 %v1095
      %v2120 = vunpack.c.l.bf16 %v1096
      %v2121 = vunpack.c.l.bf16 %v1097
      %v2122 = vunpack.c.l.bf16 %v1098
      %v2123 = vunpack.c.l.bf16 %v1099
      %v2124 = vunpack.c.l.bf16 %v1100
      %v2125 = vunpack.c.l.bf16 %v1101
      %v2126 = vunpack.c.l.bf16 %v1102
      %v2127 = vunpack.c.l.bf16 %v1103
      %v2128 = vunpack.c.l.bf16 %v1104
      %v2129 = vunpack.c.l.bf16 %v1105
      %v2130 = vunpack.c.l.bf16 %v1106
      %v2131 = vunpack.c.l.bf16 %v1107
      %v2132 = vunpack.c.l.bf16 %v1108
      %v2133 = vunpack.c.l.bf16 %v1109
      %v2134 = vunpack.c.l.bf16 %v1110
      %v2135 = vunpack.c.l.bf16 %v1111
      %v2136 = vunpack.c.l.bf16 %v1112
      %v2137 = vunpack.c.l.bf16 %v1113
      %v2138 = vunpack.c.l.bf16 %v1114
      %v2139 = vunpack.c.l.bf16 %v1115
      %v2140 = vunpack.c.l.bf16 %v1116
      %v2141 = vunpack.c.l.bf16 %v1117
      %v2142 = vunpack.c.l.bf16 %v1118
      %v2143 = vunpack.c.l.bf16 %v1119
      %v2144 = vunpack.c.l.bf16 %v1120
      %v2145 = vunpack.c.l.bf16 %v1121
      %v2146 = vunpack.c.l.bf16 %v1122
      %v2147 = vunpack.c.l.bf16 %v1123
      %v2148 = vunpack.c.l.bf16 %v1124
      %v2149 = vunpack.c.l.bf16 %v1125
      %v2150 = vunpack.c.l.bf16 %v1126
      %v2151 = vunpack.c.l.bf16 %v1127
      %v2152 = vunpack.c.l.bf16 %v1128
      %v2153 = vunpack.c.l.bf16 %v1129
      %v2154 = vunpack.c.l.bf16 %v1130
      %v2155 = vunpack.c.l.bf16 %v1131
      %v2156 = vunpack.c.l.bf16 %v1132
      %v2157 = vunpack.c.l.bf16 %v1133
      %v2158 = vunpack.c.l.bf16 %v1134
      %v2159 = vunpack.c.l.bf16 %v1135
      %v2160 = vunpack.c.l.bf16 %v1136
      %v2161 = vunpack.c.l.bf16 %v1137
      %v2162 = vunpack.c.l.bf16 %v1138
      %v2163 = vunpack.c.l.bf16 %v1139
      %v2164 = vunpack.c.l.bf16 %v1140
      %v2165 = vunpack.c.l.bf16 %v1141
      %v2166 = vunpack.c.l.bf16 %v1142
      %v2167 = vunpack.c.l.bf16 %v1143
      %v2168 = vunpack.c.l.bf16 %v1144
      %v2169 = vunpack.c.l.bf16 %v1145
      %v2170 = vunpack.c.l.bf16 %v1146
      %v2171 = vunpack.c.l.bf16 %v1147
      %v2172 = vunpack.c.l.bf16 %v1148
      %v2173 = vunpack.c.l.bf16 %v1149
      %v2174 = vunpack.c.l.bf16 %v1150
      %v2175 = vunpack.c.l.bf16 %v1151
      %v2176 = vunpack.c.l.bf16 %v1152
      %v2177 = vunpack.c.l.bf16 %v1153
      %v2178 = vunpack.c.l.bf16 %v1154
      %v2179 = vunpack.c.l.bf16 %v1155
      %v2180 = vunpack.c.l.bf16 %v1156
      %v2181 = vunpack.c.l.bf16 %v1157
      %v2182 = vunpack.c.l.bf16 %v1158
      %v2183 = vunpack.c.l.bf16 %v1159
      %v2184 = vunpack.c.l.bf16 %v1160
      %v2185 = vunpack.c.l.bf16 %v1161
      %v2186 = vunpack.c.l.bf16 %v1162
      %v2187 = vunpack.c.l.bf16 %v1163
      %v2188 = vunpack.c.l.bf16 %v1164
      %v2189 = vunpack.c.l.bf16 %v1165
      %v2190 = vunpack.c.l.bf16 %v1166
      %v2191 = vunpack.c.l.bf16 %v1167
      %v2192 = vunpack.c.l.bf16 %v1168
      %v2193 = vunpack.c.l.bf16 %v1169
      %v2194 = vunpack.c.l.bf16 %v1170
      %v2195 = vunpack.c.l.bf16 %v1171
      %v2196 = vunpack.c.l.bf16 %v1172
      %v2197 = vunpack.c.l.bf16 %v1173
      %v2198 = vunpack.c.l.bf16 %v1174
      %vm2199 = vcmask 31744
      %v2200 = vsel %vm2199, %v1175, 0.0
      %v2201 = vsel %vm2199, %v1176, 0.0
      %v2202 = vadd.f32 %v2200, %v2201
      %v2203 = vsel %vm2199, %v1177, 0.0
      %v2204 = vadd.f32 %v2202, %v2203
      %v2205 = vsel %vm2199, %v1178, 0.0
      %v2206 = vadd.f32 %v2204, %v2205
      %v2207 = vsel %vm2199, %v1179, 0.0
      %v2208 = vadd.f32 %v2206, %v2207
      %v2209 = vsel %vm2199, %v1180, 0.0
      %v2210 = vadd.f32 %v2208, %v2209
      %v2211 = vsel %vm2199, %v1181, 0.0
      %v2212 = vadd.f32 %v2210, %v2211
      %v2213 = vsel %vm2199, %v1182, 0.0
      %v2214 = vadd.f32 %v2212, %v2213
      %v2215 = vsel %vm2199, %v1183, 0.0
      %v2216 = vadd.f32 %v2214, %v2215
      %v2217 = vsel %vm2199, %v1184, 0.0
      %v2218 = vadd.f32 %v2216, %v2217
      %v2219 = vsel %vm2199, %v1185, 0.0
      %v2220 = vadd.f32 %v2218, %v2219
      %v2221 = vsel %vm2199, %v1186, 0.0
      %v2222 = vadd.f32 %v2220, %v2221
      %v2223 = vsel %vm2199, %v1187, 0.0
      %v2224 = vadd.f32 %v2222, %v2223
      %v2225 = vsel %vm2199, %v1188, 0.0
      %v2226 = vadd.f32 %v2224, %v2225
      %v2227 = vsel %vm2199, %v1189, 0.0
      %v2228 = vadd.f32 %v2226, %v2227
      %v2229 = vsel %vm2199, %v1190, 0.0
      %v2230 = vadd.f32 %v2228, %v2229
      %v2231 = vsel %vm2199, %v1191, 0.0
      %v2232 = vadd.f32 %v2230, %v2231
      %v2233 = vsel %vm2199, %v1192, 0.0
      %v2234 = vadd.f32 %v2232, %v2233
      %v2235 = vsel %vm2199, %v1193, 0.0
      %v2236 = vadd.f32 %v2234, %v2235
      %v2237 = vsel %vm2199, %v1194, 0.0
      %v2238 = vadd.f32 %v2236, %v2237
      %v2239 = vsel %vm2199, %v1195, 0.0
      %v2240 = vadd.f32 %v2238, %v2239
      %v2241 = vsel %vm2199, %v1196, 0.0
      %v2242 = vadd.f32 %v2240, %v2241
      %v2243 = vsel %vm2199, %v1197, 0.0
      %v2244 = vadd.f32 %v2242, %v2243
      %v2245 = vsel %vm2199, %v1198, 0.0
      %v2246 = vadd.f32 %v2244, %v2245
      %v2247 = vsel %vm2199, %v1199, 0.0
      %v2248 = vadd.f32 %v2246, %v2247
      %v2249 = vsel %vm2199, %v1200, 0.0
      %v2250 = vadd.f32 %v2248, %v2249
      %v2251 = vsel %vm2199, %v1201, 0.0
      %v2252 = vadd.f32 %v2250, %v2251
      %v2253 = vsel %vm2199, %v1202, 0.0
      %v2254 = vadd.f32 %v2252, %v2253
      %v2255 = vsel %vm2199, %v1203, 0.0
      %v2256 = vadd.f32 %v2254, %v2255
      %v2257 = vsel %vm2199, %v1204, 0.0
      %v2258 = vadd.f32 %v2256, %v2257
      %v2259 = vsel %vm2199, %v1205, 0.0
      %v2260 = vadd.f32 %v2258, %v2259
      %v2261 = vsel %vm2199, %v1206, 0.0
      %v2262 = vadd.f32 %v2260, %v2261
      %v2263 = vrot.slane %v2262, 4
      %v2264 = vadd.f32 %v2262, %v2263
      %v2265 = vrot.slane %v2264, 2
      %v2266 = vadd.f32 %v2264, %v2265
      %v2267 = vrot.slane %v2266, 1
      %v2268 = vadd.f32 %v2266, %v2267
      %v2269 = vsel %vm2199, %v1207, 0.0
      %v2270 = vsel %vm2199, %v1208, 0.0
      %v2271 = vadd.f32 %v2269, %v2270
      %v2272 = vsel %vm2199, %v1209, 0.0
      %v2273 = vadd.f32 %v2271, %v2272
      %v2274 = vsel %vm2199, %v1210, 0.0
      %v2275 = vadd.f32 %v2273, %v2274
      %v2276 = vsel %vm2199, %v1211, 0.0
      %v2277 = vadd.f32 %v2275, %v2276
      %v2278 = vsel %vm2199, %v1212, 0.0
      %v2279 = vadd.f32 %v2277, %v2278
      %v2280 = vsel %vm2199, %v1213, 0.0
      %v2281 = vadd.f32 %v2279, %v2280
      %v2282 = vsel %vm2199, %v1214, 0.0
      %v2283 = vadd.f32 %v2281, %v2282
      %v2284 = vsel %vm2199, %v1215, 0.0
      %v2285 = vadd.f32 %v2283, %v2284
      %v2286 = vsel %vm2199, %v1216, 0.0
      %v2287 = vadd.f32 %v2285, %v2286
      %v2288 = vsel %vm2199, %v1217, 0.0
      %v2289 = vadd.f32 %v2287, %v2288
      %v2290 = vsel %vm2199, %v1218, 0.0
      %v2291 = vadd.f32 %v2289, %v2290
      %v2292 = vsel %vm2199, %v1219, 0.0
      %v2293 = vadd.f32 %v2291, %v2292
      %v2294 = vsel %vm2199, %v1220, 0.0
      %v2295 = vadd.f32 %v2293, %v2294
      %v2296 = vsel %vm2199, %v1221, 0.0
      %v2297 = vadd.f32 %v2295, %v2296
      %v2298 = vsel %vm2199, %v1222, 0.0
      %v2299 = vadd.f32 %v2297, %v2298
      %v2300 = vsel %vm2199, %v1223, 0.0
      %v2301 = vadd.f32 %v2299, %v2300
      %v2302 = vsel %vm2199, %v1224, 0.0
      %v2303 = vadd.f32 %v2301, %v2302
      %v2304 = vsel %vm2199, %v1225, 0.0
      %v2305 = vadd.f32 %v2303, %v2304
      %v2306 = vsel %vm2199, %v1226, 0.0
      %v2307 = vadd.f32 %v2305, %v2306
      %v2308 = vsel %vm2199, %v1227, 0.0
      %v2309 = vadd.f32 %v2307, %v2308
      %v2310 = vsel %vm2199, %v1228, 0.0
      %v2311 = vadd.f32 %v2309, %v2310
      %v2312 = vsel %vm2199, %v1229, 0.0
      %v2313 = vadd.f32 %v2311, %v2312
      %v2314 = vsel %vm2199, %v1230, 0.0
      %v2315 = vadd.f32 %v2313, %v2314
      %v2316 = vsel %vm2199, %v1231, 0.0
      %v2317 = vadd.f32 %v2315, %v2316
      %v2318 = vsel %vm2199, %v1232, 0.0
      %v2319 = vadd.f32 %v2317, %v2318
      %v2320 = vsel %vm2199, %v1233, 0.0
      %v2321 = vadd.f32 %v2319, %v2320
      %v2322 = vsel %vm2199, %v1234, 0.0
      %v2323 = vadd.f32 %v2321, %v2322
      %v2324 = vsel %vm2199, %v1235, 0.0
      %v2325 = vadd.f32 %v2323, %v2324
      %v2326 = vsel %vm2199, %v1236, 0.0
      %v2327 = vadd.f32 %v2325, %v2326
      %v2328 = vsel %vm2199, %v1237, 0.0
      %v2329 = vadd.f32 %v2327, %v2328
      %v2330 = vsel %vm2199, %v1238, 0.0
      %v2331 = vadd.f32 %v2329, %v2330
      %v2332 = vrot.slane %v2331, 4
      %v2333 = vadd.f32 %v2331, %v2332
      %v2334 = vrot.slane %v2333, 2
      %v2335 = vadd.f32 %v2333, %v2334
      %v2336 = vrot.slane %v2335, 1
      %v2337 = vadd.f32 %v2335, %v2336
      %v2338 = vsel %vm2199, %v1239, 0.0
      %v2339 = vsel %vm2199, %v1240, 0.0
      %v2340 = vadd.f32 %v2338, %v2339
      %v2341 = vsel %vm2199, %v1241, 0.0
      %v2342 = vadd.f32 %v2340, %v2341
      %v2343 = vsel %vm2199, %v1242, 0.0
      %v2344 = vadd.f32 %v2342, %v2343
      %v2345 = vsel %vm2199, %v1243, 0.0
      %v2346 = vadd.f32 %v2344, %v2345
      %v2347 = vsel %vm2199, %v1244, 0.0
      %v2348 = vadd.f32 %v2346, %v2347
      %v2349 = vsel %vm2199, %v1245, 0.0
      %v2350 = vadd.f32 %v2348, %v2349
      %v2351 = vsel %vm2199, %v1246, 0.0
      %v2352 = vadd.f32 %v2350, %v2351
      %v2353 = vsel %vm2199, %v1247, 0.0
      %v2354 = vadd.f32 %v2352, %v2353
      %v2355 = vsel %vm2199, %v1248, 0.0
      %v2356 = vadd.f32 %v2354, %v2355
      %v2357 = vsel %vm2199, %v1249, 0.0
      %v2358 = vadd.f32 %v2356, %v2357
      %v2359 = vsel %vm2199, %v1250, 0.0
      %v2360 = vadd.f32 %v2358, %v2359
      %v2361 = vsel %vm2199, %v1251, 0.0
      %v2362 = vadd.f32 %v2360, %v2361
      %v2363 = vsel %vm2199, %v1252, 0.0
      %v2364 = vadd.f32 %v2362, %v2363
      %v2365 = vsel %vm2199, %v1253, 0.0
      %v2366 = vadd.f32 %v2364, %v2365
      %v2367 = vsel %vm2199, %v1254, 0.0
      %v2368 = vadd.f32 %v2366, %v2367
      %v2369 = vsel %vm2199, %v1255, 0.0
      %v2370 = vadd.f32 %v2368, %v2369
      %v2371 = vsel %vm2199, %v1256, 0.0
      %v2372 = vadd.f32 %v2370, %v2371
      %v2373 = vsel %vm2199, %v1257, 0.0
      %v2374 = vadd.f32 %v2372, %v2373
      %v2375 = vsel %vm2199, %v1258, 0.0
      %v2376 = vadd.f32 %v2374, %v2375
      %v2377 = vsel %vm2199, %v1259, 0.0
      %v2378 = vadd.f32 %v2376, %v2377
      %v2379 = vsel %vm2199, %v1260, 0.0
      %v2380 = vadd.f32 %v2378, %v2379
      %v2381 = vsel %vm2199, %v1261, 0.0
      %v2382 = vadd.f32 %v2380, %v2381
      %v2383 = vsel %vm2199, %v1262, 0.0
      %v2384 = vadd.f32 %v2382, %v2383
      %v2385 = vsel %vm2199, %v1263, 0.0
      %v2386 = vadd.f32 %v2384, %v2385
      %v2387 = vsel %vm2199, %v1264, 0.0
      %v2388 = vadd.f32 %v2386, %v2387
      %v2389 = vsel %vm2199, %v1265, 0.0
      %v2390 = vadd.f32 %v2388, %v2389
      %v2391 = vsel %vm2199, %v1266, 0.0
      %v2392 = vadd.f32 %v2390, %v2391
      %v2393 = vsel %vm2199, %v1267, 0.0
      %v2394 = vadd.f32 %v2392, %v2393
      %v2395 = vsel %vm2199, %v1268, 0.0
      %v2396 = vadd.f32 %v2394, %v2395
      %v2397 = vsel %vm2199, %v1269, 0.0
      %v2398 = vadd.f32 %v2396, %v2397
      %v2399 = vsel %vm2199, %v1270, 0.0
      %v2400 = vadd.f32 %v2398, %v2399
      %v2401 = vrot.slane %v2400, 4
      %v2402 = vadd.f32 %v2400, %v2401
      %v2403 = vrot.slane %v2402, 2
      %v2404 = vadd.f32 %v2402, %v2403
      %v2405 = vrot.slane %v2404, 1
      %v2406 = vadd.f32 %v2404, %v2405
      %v2407 = vsel %vm2199, %v1271, 0.0
      %v2408 = vsel %vm2199, %v1272, 0.0
      %v2409 = vadd.f32 %v2407, %v2408
      %v2410 = vsel %vm2199, %v1273, 0.0
      %v2411 = vadd.f32 %v2409, %v2410
      %v2412 = vsel %vm2199, %v1274, 0.0
      %v2413 = vadd.f32 %v2411, %v2412
      %v2414 = vsel %vm2199, %v1275, 0.0
      %v2415 = vadd.f32 %v2413, %v2414
      %v2416 = vsel %vm2199, %v1276, 0.0
      %v2417 = vadd.f32 %v2415, %v2416
      %v2418 = vsel %vm2199, %v1277, 0.0
      %v2419 = vadd.f32 %v2417, %v2418
      %v2420 = vsel %vm2199, %v1278, 0.0
      %v2421 = vadd.f32 %v2419, %v2420
      %v2422 = vsel %vm2199, %v1279, 0.0
      %v2423 = vadd.f32 %v2421, %v2422
      %v2424 = vsel %vm2199, %v1280, 0.0
      %v2425 = vadd.f32 %v2423, %v2424
      %v2426 = vsel %vm2199, %v1281, 0.0
      %v2427 = vadd.f32 %v2425, %v2426
      %v2428 = vsel %vm2199, %v1282, 0.0
      %v2429 = vadd.f32 %v2427, %v2428
      %v2430 = vsel %vm2199, %v1283, 0.0
      %v2431 = vadd.f32 %v2429, %v2430
      %v2432 = vsel %vm2199, %v1284, 0.0
      %v2433 = vadd.f32 %v2431, %v2432
      %v2434 = vsel %vm2199, %v1285, 0.0
      %v2435 = vadd.f32 %v2433, %v2434
      %v2436 = vsel %vm2199, %v1286, 0.0
      %v2437 = vadd.f32 %v2435, %v2436
      %v2438 = vsel %vm2199, %v1287, 0.0
      %v2439 = vadd.f32 %v2437, %v2438
      %v2440 = vsel %vm2199, %v1288, 0.0
      %v2441 = vadd.f32 %v2439, %v2440
      %v2442 = vsel %vm2199, %v1289, 0.0
      %v2443 = vadd.f32 %v2441, %v2442
      %v2444 = vsel %vm2199, %v1290, 0.0
      %v2445 = vadd.f32 %v2443, %v2444
      %v2446 = vsel %vm2199, %v1291, 0.0
      %v2447 = vadd.f32 %v2445, %v2446
      %v2448 = vsel %vm2199, %v1292, 0.0
      %v2449 = vadd.f32 %v2447, %v2448
      %v2450 = vsel %vm2199, %v1293, 0.0
      %v2451 = vadd.f32 %v2449, %v2450
      %v2452 = vsel %vm2199, %v1294, 0.0
      %v2453 = vadd.f32 %v2451, %v2452
      %v2454 = vsel %vm2199, %v1295, 0.0
      %v2455 = vadd.f32 %v2453, %v2454
      %v2456 = vsel %vm2199, %v1296, 0.0
      %v2457 = vadd.f32 %v2455, %v2456
      %v2458 = vsel %vm2199, %v1297, 0.0
      %v2459 = vadd.f32 %v2457, %v2458
      %v2460 = vsel %vm2199, %v1298, 0.0
      %v2461 = vadd.f32 %v2459, %v2460
      %v2462 = vsel %vm2199, %v1299, 0.0
      %v2463 = vadd.f32 %v2461, %v2462
      %v2464 = vsel %vm2199, %v1300, 0.0
      %v2465 = vadd.f32 %v2463, %v2464
      %v2466 = vsel %vm2199, %v1301, 0.0
      %v2467 = vadd.f32 %v2465, %v2466
      %v2468 = vsel %vm2199, %v1302, 0.0
      %v2469 = vadd.f32 %v2467, %v2468
      %v2470 = vrot.slane %v2469, 4
      %v2471 = vadd.f32 %v2469, %v2470
      %v2472 = vrot.slane %v2471, 2
      %v2473 = vadd.f32 %v2471, %v2472
      %v2474 = vrot.slane %v2473, 1
      %v2475 = vadd.f32 %v2473, %v2474
      %v2476 = vsel %vm2199, %v1303, 0.0
      %v2477 = vsel %vm2199, %v1304, 0.0
      %v2478 = vadd.f32 %v2476, %v2477
      %v2479 = vsel %vm2199, %v1305, 0.0
      %v2480 = vadd.f32 %v2478, %v2479
      %v2481 = vsel %vm2199, %v1306, 0.0
      %v2482 = vadd.f32 %v2480, %v2481
      %v2483 = vsel %vm2199, %v1307, 0.0
      %v2484 = vadd.f32 %v2482, %v2483
      %v2485 = vsel %vm2199, %v1308, 0.0
      %v2486 = vadd.f32 %v2484, %v2485
      %v2487 = vsel %vm2199, %v1309, 0.0
      %v2488 = vadd.f32 %v2486, %v2487
      %v2489 = vsel %vm2199, %v1310, 0.0
      %v2490 = vadd.f32 %v2488, %v2489
      %v2491 = vsel %vm2199, %v1311, 0.0
      %v2492 = vadd.f32 %v2490, %v2491
      %v2493 = vsel %vm2199, %v1312, 0.0
      %v2494 = vadd.f32 %v2492, %v2493
      %v2495 = vsel %vm2199, %v1313, 0.0
      %v2496 = vadd.f32 %v2494, %v2495
      %v2497 = vsel %vm2199, %v1314, 0.0
      %v2498 = vadd.f32 %v2496, %v2497
      %v2499 = vsel %vm2199, %v1315, 0.0
      %v2500 = vadd.f32 %v2498, %v2499
      %v2501 = vsel %vm2199, %v1316, 0.0
      %v2502 = vadd.f32 %v2500, %v2501
      %v2503 = vsel %vm2199, %v1317, 0.0
      %v2504 = vadd.f32 %v2502, %v2503
      %v2505 = vsel %vm2199, %v1318, 0.0
      %v2506 = vadd.f32 %v2504, %v2505
      %v2507 = vsel %vm2199, %v1319, 0.0
      %v2508 = vadd.f32 %v2506, %v2507
      %v2509 = vsel %vm2199, %v1320, 0.0
      %v2510 = vadd.f32 %v2508, %v2509
      %v2511 = vsel %vm2199, %v1321, 0.0
      %v2512 = vadd.f32 %v2510, %v2511
      %v2513 = vsel %vm2199, %v1322, 0.0
      %v2514 = vadd.f32 %v2512, %v2513
      %v2515 = vsel %vm2199, %v1323, 0.0
      %v2516 = vadd.f32 %v2514, %v2515
      %v2517 = vsel %vm2199, %v1324, 0.0
      %v2518 = vadd.f32 %v2516, %v2517
      %v2519 = vsel %vm2199, %v1325, 0.0
      %v2520 = vadd.f32 %v2518, %v2519
      %v2521 = vsel %vm2199, %v1326, 0.0
      %v2522 = vadd.f32 %v2520, %v2521
      %v2523 = vsel %vm2199, %v1327, 0.0
      %v2524 = vadd.f32 %v2522, %v2523
      %v2525 = vsel %vm2199, %v1328, 0.0
      %v2526 = vadd.f32 %v2524, %v2525
      %v2527 = vsel %vm2199, %v1329, 0.0
      %v2528 = vadd.f32 %v2526, %v2527
      %v2529 = vsel %vm2199, %v1330, 0.0
      %v2530 = vadd.f32 %v2528, %v2529
      %v2531 = vsel %vm2199, %v1331, 0.0
      %v2532 = vadd.f32 %v2530, %v2531
      %v2533 = vsel %vm2199, %v1332, 0.0
      %v2534 = vadd.f32 %v2532, %v2533
      %v2535 = vsel %vm2199, %v1333, 0.0
      %v2536 = vadd.f32 %v2534, %v2535
      %v2537 = vsel %vm2199, %v1334, 0.0
      %v2538 = vadd.f32 %v2536, %v2537
      %v2539 = vrot.slane %v2538, 4
      %v2540 = vadd.f32 %v2538, %v2539
      %v2541 = vrot.slane %v2540, 2
      %v2542 = vadd.f32 %v2540, %v2541
      %v2543 = vrot.slane %v2542, 1
      %v2544 = vadd.f32 %v2542, %v2543
      %v2545 = vsel %vm2199, %v1335, 0.0
      %v2546 = vsel %vm2199, %v1336, 0.0
      %v2547 = vadd.f32 %v2545, %v2546
      %v2548 = vsel %vm2199, %v1337, 0.0
      %v2549 = vadd.f32 %v2547, %v2548
      %v2550 = vsel %vm2199, %v1338, 0.0
      %v2551 = vadd.f32 %v2549, %v2550
      %v2552 = vsel %vm2199, %v1339, 0.0
      %v2553 = vadd.f32 %v2551, %v2552
      %v2554 = vsel %vm2199, %v1340, 0.0
      %v2555 = vadd.f32 %v2553, %v2554
      %v2556 = vsel %vm2199, %v1341, 0.0
      %v2557 = vadd.f32 %v2555, %v2556
      %v2558 = vsel %vm2199, %v1342, 0.0
      %v2559 = vadd.f32 %v2557, %v2558
      %v2560 = vsel %vm2199, %v1343, 0.0
      %v2561 = vadd.f32 %v2559, %v2560
      %v2562 = vsel %vm2199, %v1344, 0.0
      %v2563 = vadd.f32 %v2561, %v2562
      %v2564 = vsel %vm2199, %v1345, 0.0
      %v2565 = vadd.f32 %v2563, %v2564
      %v2566 = vsel %vm2199, %v1346, 0.0
      %v2567 = vadd.f32 %v2565, %v2566
      %v2568 = vsel %vm2199, %v1347, 0.0
      %v2569 = vadd.f32 %v2567, %v2568
      %v2570 = vsel %vm2199, %v1348, 0.0
      %v2571 = vadd.f32 %v2569, %v2570
      %v2572 = vsel %vm2199, %v1349, 0.0
      %v2573 = vadd.f32 %v2571, %v2572
      %v2574 = vsel %vm2199, %v1350, 0.0
      %v2575 = vadd.f32 %v2573, %v2574
      %v2576 = vsel %vm2199, %v1351, 0.0
      %v2577 = vadd.f32 %v2575, %v2576
      %v2578 = vsel %vm2199, %v1352, 0.0
      %v2579 = vadd.f32 %v2577, %v2578
      %v2580 = vsel %vm2199, %v1353, 0.0
      %v2581 = vadd.f32 %v2579, %v2580
      %v2582 = vsel %vm2199, %v1354, 0.0
      %v2583 = vadd.f32 %v2581, %v2582
      %v2584 = vsel %vm2199, %v1355, 0.0
      %v2585 = vadd.f32 %v2583, %v2584
      %v2586 = vsel %vm2199, %v1356, 0.0
      %v2587 = vadd.f32 %v2585, %v2586
      %v2588 = vsel %vm2199, %v1357, 0.0
      %v2589 = vadd.f32 %v2587, %v2588
      %v2590 = vsel %vm2199, %v1358, 0.0
      %v2591 = vadd.f32 %v2589, %v2590
      %v2592 = vsel %vm2199, %v1359, 0.0
      %v2593 = vadd.f32 %v2591, %v2592
      %v2594 = vsel %vm2199, %v1360, 0.0
      %v2595 = vadd.f32 %v2593, %v2594
      %v2596 = vsel %vm2199, %v1361, 0.0
      %v2597 = vadd.f32 %v2595, %v2596
      %v2598 = vsel %vm2199, %v1362, 0.0
      %v2599 = vadd.f32 %v2597, %v2598
      %v2600 = vsel %vm2199, %v1363, 0.0
      %v2601 = vadd.f32 %v2599, %v2600
      %v2602 = vsel %vm2199, %v1364, 0.0
      %v2603 = vadd.f32 %v2601, %v2602
      %v2604 = vsel %vm2199, %v1365, 0.0
      %v2605 = vadd.f32 %v2603, %v2604
      %v2606 = vsel %vm2199, %v1366, 0.0
      %v2607 = vadd.f32 %v2605, %v2606
      %v2608 = vrot.slane %v2607, 4
      %v2609 = vadd.f32 %v2607, %v2608
      %v2610 = vrot.slane %v2609, 2
      %v2611 = vadd.f32 %v2609, %v2610
      %v2612 = vrot.slane %v2611, 1
      %v2613 = vadd.f32 %v2611, %v2612
      %v2614 = vsel %vm2199, %v1367, 0.0
      %v2615 = vsel %vm2199, %v1368, 0.0
      %v2616 = vadd.f32 %v2614, %v2615
      %v2617 = vsel %vm2199, %v1369, 0.0
      %v2618 = vadd.f32 %v2616, %v2617
      %v2619 = vsel %vm2199, %v1370, 0.0
      %v2620 = vadd.f32 %v2618, %v2619
      %v2621 = vsel %vm2199, %v1371, 0.0
      %v2622 = vadd.f32 %v2620, %v2621
      %v2623 = vsel %vm2199, %v1372, 0.0
      %v2624 = vadd.f32 %v2622, %v2623
      %v2625 = vsel %vm2199, %v1373, 0.0
      %v2626 = vadd.f32 %v2624, %v2625
      %v2627 = vsel %vm2199, %v1374, 0.0
      %v2628 = vadd.f32 %v2626, %v2627
      %v2629 = vsel %vm2199, %v1375, 0.0
      %v2630 = vadd.f32 %v2628, %v2629
      %v2631 = vsel %vm2199, %v1376, 0.0
      %v2632 = vadd.f32 %v2630, %v2631
      %v2633 = vsel %vm2199, %v1377, 0.0
      %v2634 = vadd.f32 %v2632, %v2633
      %v2635 = vsel %vm2199, %v1378, 0.0
      %v2636 = vadd.f32 %v2634, %v2635
      %v2637 = vsel %vm2199, %v1379, 0.0
      %v2638 = vadd.f32 %v2636, %v2637
      %v2639 = vsel %vm2199, %v1380, 0.0
      %v2640 = vadd.f32 %v2638, %v2639
      %v2641 = vsel %vm2199, %v1381, 0.0
      %v2642 = vadd.f32 %v2640, %v2641
      %v2643 = vsel %vm2199, %v1382, 0.0
      %v2644 = vadd.f32 %v2642, %v2643
      %v2645 = vsel %vm2199, %v1383, 0.0
      %v2646 = vadd.f32 %v2644, %v2645
      %v2647 = vsel %vm2199, %v1384, 0.0
      %v2648 = vadd.f32 %v2646, %v2647
      %v2649 = vsel %vm2199, %v1385, 0.0
      %v2650 = vadd.f32 %v2648, %v2649
      %v2651 = vsel %vm2199, %v1386, 0.0
      %v2652 = vadd.f32 %v2650, %v2651
      %v2653 = vsel %vm2199, %v1387, 0.0
      %v2654 = vadd.f32 %v2652, %v2653
      %v2655 = vsel %vm2199, %v1388, 0.0
      %v2656 = vadd.f32 %v2654, %v2655
      %v2657 = vsel %vm2199, %v1389, 0.0
      %v2658 = vadd.f32 %v2656, %v2657
      %v2659 = vsel %vm2199, %v1390, 0.0
      %v2660 = vadd.f32 %v2658, %v2659
      %v2661 = vsel %vm2199, %v1391, 0.0
      %v2662 = vadd.f32 %v2660, %v2661
      %v2663 = vsel %vm2199, %v1392, 0.0
      %v2664 = vadd.f32 %v2662, %v2663
      %v2665 = vsel %vm2199, %v1393, 0.0
      %v2666 = vadd.f32 %v2664, %v2665
      %v2667 = vsel %vm2199, %v1394, 0.0
      %v2668 = vadd.f32 %v2666, %v2667
      %v2669 = vsel %vm2199, %v1395, 0.0
      %v2670 = vadd.f32 %v2668, %v2669
      %v2671 = vsel %vm2199, %v1396, 0.0
      %v2672 = vadd.f32 %v2670, %v2671
      %v2673 = vsel %vm2199, %v1397, 0.0
      %v2674 = vadd.f32 %v2672, %v2673
      %v2675 = vsel %vm2199, %v1398, 0.0
      %v2676 = vadd.f32 %v2674, %v2675
      %v2677 = vrot.slane %v2676, 4
      %v2678 = vadd.f32 %v2676, %v2677
      %v2679 = vrot.slane %v2678, 2
      %v2680 = vadd.f32 %v2678, %v2679
      %v2681 = vrot.slane %v2680, 1
      %v2682 = vadd.f32 %v2680, %v2681
      %v2683 = vsel %vm2199, %v1399, 0.0
      %v2684 = vsel %vm2199, %v1400, 0.0
      %v2685 = vadd.f32 %v2683, %v2684
      %v2686 = vsel %vm2199, %v1401, 0.0
      %v2687 = vadd.f32 %v2685, %v2686
      %v2688 = vsel %vm2199, %v1402, 0.0
      %v2689 = vadd.f32 %v2687, %v2688
      %v2690 = vsel %vm2199, %v1403, 0.0
      %v2691 = vadd.f32 %v2689, %v2690
      %v2692 = vsel %vm2199, %v1404, 0.0
      %v2693 = vadd.f32 %v2691, %v2692
      %v2694 = vsel %vm2199, %v1405, 0.0
      %v2695 = vadd.f32 %v2693, %v2694
      %v2696 = vsel %vm2199, %v1406, 0.0
      %v2697 = vadd.f32 %v2695, %v2696
      %v2698 = vsel %vm2199, %v1407, 0.0
      %v2699 = vadd.f32 %v2697, %v2698
      %v2700 = vsel %vm2199, %v1408, 0.0
      %v2701 = vadd.f32 %v2699, %v2700
      %v2702 = vsel %vm2199, %v1409, 0.0
      %v2703 = vadd.f32 %v2701, %v2702
      %v2704 = vsel %vm2199, %v1410, 0.0
      %v2705 = vadd.f32 %v2703, %v2704
      %v2706 = vsel %vm2199, %v1411, 0.0
      %v2707 = vadd.f32 %v2705, %v2706
      %v2708 = vsel %vm2199, %v1412, 0.0
      %v2709 = vadd.f32 %v2707, %v2708
      %v2710 = vsel %vm2199, %v1413, 0.0
      %v2711 = vadd.f32 %v2709, %v2710
      %v2712 = vsel %vm2199, %v1414, 0.0
      %v2713 = vadd.f32 %v2711, %v2712
      %v2714 = vsel %vm2199, %v1415, 0.0
      %v2715 = vadd.f32 %v2713, %v2714
      %v2716 = vsel %vm2199, %v1416, 0.0
      %v2717 = vadd.f32 %v2715, %v2716
      %v2718 = vsel %vm2199, %v1417, 0.0
      %v2719 = vadd.f32 %v2717, %v2718
      %v2720 = vsel %vm2199, %v1418, 0.0
      %v2721 = vadd.f32 %v2719, %v2720
      %v2722 = vsel %vm2199, %v1419, 0.0
      %v2723 = vadd.f32 %v2721, %v2722
      %v2724 = vsel %vm2199, %v1420, 0.0
      %v2725 = vadd.f32 %v2723, %v2724
      %v2726 = vsel %vm2199, %v1421, 0.0
      %v2727 = vadd.f32 %v2725, %v2726
      %v2728 = vsel %vm2199, %v1422, 0.0
      %v2729 = vadd.f32 %v2727, %v2728
      %v2730 = vsel %vm2199, %v1423, 0.0
      %v2731 = vadd.f32 %v2729, %v2730
      %v2732 = vsel %vm2199, %v1424, 0.0
      %v2733 = vadd.f32 %v2731, %v2732
      %v2734 = vsel %vm2199, %v1425, 0.0
      %v2735 = vadd.f32 %v2733, %v2734
      %v2736 = vsel %vm2199, %v1426, 0.0
      %v2737 = vadd.f32 %v2735, %v2736
      %v2738 = vsel %vm2199, %v1427, 0.0
      %v2739 = vadd.f32 %v2737, %v2738
      %v2740 = vsel %vm2199, %v1428, 0.0
      %v2741 = vadd.f32 %v2739, %v2740
      %v2742 = vsel %vm2199, %v1429, 0.0
      %v2743 = vadd.f32 %v2741, %v2742
      %v2744 = vsel %vm2199, %v1430, 0.0
      %v2745 = vadd.f32 %v2743, %v2744
      %v2746 = vrot.slane %v2745, 4
      %v2747 = vadd.f32 %v2745, %v2746
      %v2748 = vrot.slane %v2747, 2
      %v2749 = vadd.f32 %v2747, %v2748
      %v2750 = vrot.slane %v2749, 1
      %v2751 = vadd.f32 %v2749, %v2750
      %v2752 = vsel %vm2199, %v1431, 0.0
      %v2753 = vsel %vm2199, %v1432, 0.0
      %v2754 = vadd.f32 %v2752, %v2753
      %v2755 = vsel %vm2199, %v1433, 0.0
      %v2756 = vadd.f32 %v2754, %v2755
      %v2757 = vsel %vm2199, %v1434, 0.0
      %v2758 = vadd.f32 %v2756, %v2757
      %v2759 = vsel %vm2199, %v1435, 0.0
      %v2760 = vadd.f32 %v2758, %v2759
      %v2761 = vsel %vm2199, %v1436, 0.0
      %v2762 = vadd.f32 %v2760, %v2761
      %v2763 = vsel %vm2199, %v1437, 0.0
      %v2764 = vadd.f32 %v2762, %v2763
      %v2765 = vsel %vm2199, %v1438, 0.0
      %v2766 = vadd.f32 %v2764, %v2765
      %v2767 = vsel %vm2199, %v1439, 0.0
      %v2768 = vadd.f32 %v2766, %v2767
      %v2769 = vsel %vm2199, %v1440, 0.0
      %v2770 = vadd.f32 %v2768, %v2769
      %v2771 = vsel %vm2199, %v1441, 0.0
      %v2772 = vadd.f32 %v2770, %v2771
      %v2773 = vsel %vm2199, %v1442, 0.0
      %v2774 = vadd.f32 %v2772, %v2773
      %v2775 = vsel %vm2199, %v1443, 0.0
      %v2776 = vadd.f32 %v2774, %v2775
      %v2777 = vsel %vm2199, %v1444, 0.0
      %v2778 = vadd.f32 %v2776, %v2777
      %v2779 = vsel %vm2199, %v1445, 0.0
      %v2780 = vadd.f32 %v2778, %v2779
      %v2781 = vsel %vm2199, %v1446, 0.0
      %v2782 = vadd.f32 %v2780, %v2781
      %v2783 = vsel %vm2199, %v1447, 0.0
      %v2784 = vadd.f32 %v2782, %v2783
      %v2785 = vsel %vm2199, %v1448, 0.0
      %v2786 = vadd.f32 %v2784, %v2785
      %v2787 = vsel %vm2199, %v1449, 0.0
      %v2788 = vadd.f32 %v2786, %v2787
      %v2789 = vsel %vm2199, %v1450, 0.0
      %v2790 = vadd.f32 %v2788, %v2789
      %v2791 = vsel %vm2199, %v1451, 0.0
      %v2792 = vadd.f32 %v2790, %v2791
      %v2793 = vsel %vm2199, %v1452, 0.0
      %v2794 = vadd.f32 %v2792, %v2793
      %v2795 = vsel %vm2199, %v1453, 0.0
      %v2796 = vadd.f32 %v2794, %v2795
      %v2797 = vsel %vm2199, %v1454, 0.0
      %v2798 = vadd.f32 %v2796, %v2797
      %v2799 = vsel %vm2199, %v1455, 0.0
      %v2800 = vadd.f32 %v2798, %v2799
      %v2801 = vsel %vm2199, %v1456, 0.0
      %v2802 = vadd.f32 %v2800, %v2801
      %v2803 = vsel %vm2199, %v1457, 0.0
      %v2804 = vadd.f32 %v2802, %v2803
      %v2805 = vsel %vm2199, %v1458, 0.0
      %v2806 = vadd.f32 %v2804, %v2805
      %v2807 = vsel %vm2199, %v1459, 0.0
      %v2808 = vadd.f32 %v2806, %v2807
      %v2809 = vsel %vm2199, %v1460, 0.0
      %v2810 = vadd.f32 %v2808, %v2809
      %v2811 = vsel %vm2199, %v1461, 0.0
      %v2812 = vadd.f32 %v2810, %v2811
      %v2813 = vsel %vm2199, %v1462, 0.0
      %v2814 = vadd.f32 %v2812, %v2813
      %v2815 = vrot.slane %v2814, 4
      %v2816 = vadd.f32 %v2814, %v2815
      %v2817 = vrot.slane %v2816, 2
      %v2818 = vadd.f32 %v2816, %v2817
      %v2819 = vrot.slane %v2818, 1
      %v2820 = vadd.f32 %v2818, %v2819
      %v2821 = vsel %vm2199, %v1463, 0.0
      %v2822 = vsel %vm2199, %v1464, 0.0
      %v2823 = vadd.f32 %v2821, %v2822
      %v2824 = vsel %vm2199, %v1465, 0.0
      %v2825 = vadd.f32 %v2823, %v2824
      %v2826 = vsel %vm2199, %v1466, 0.0
      %v2827 = vadd.f32 %v2825, %v2826
      %v2828 = vsel %vm2199, %v1467, 0.0
      %v2829 = vadd.f32 %v2827, %v2828
      %v2830 = vsel %vm2199, %v1468, 0.0
      %v2831 = vadd.f32 %v2829, %v2830
      %v2832 = vsel %vm2199, %v1469, 0.0
      %v2833 = vadd.f32 %v2831, %v2832
      %v2834 = vsel %vm2199, %v1470, 0.0
      %v2835 = vadd.f32 %v2833, %v2834
      %v2836 = vsel %vm2199, %v1471, 0.0
      %v2837 = vadd.f32 %v2835, %v2836
      %v2838 = vsel %vm2199, %v1472, 0.0
      %v2839 = vadd.f32 %v2837, %v2838
      %v2840 = vsel %vm2199, %v1473, 0.0
      %v2841 = vadd.f32 %v2839, %v2840
      %v2842 = vsel %vm2199, %v1474, 0.0
      %v2843 = vadd.f32 %v2841, %v2842
      %v2844 = vsel %vm2199, %v1475, 0.0
      %v2845 = vadd.f32 %v2843, %v2844
      %v2846 = vsel %vm2199, %v1476, 0.0
      %v2847 = vadd.f32 %v2845, %v2846
      %v2848 = vsel %vm2199, %v1477, 0.0
      %v2849 = vadd.f32 %v2847, %v2848
      %v2850 = vsel %vm2199, %v1478, 0.0
      %v2851 = vadd.f32 %v2849, %v2850
      %v2852 = vsel %vm2199, %v1479, 0.0
      %v2853 = vadd.f32 %v2851, %v2852
      %v2854 = vsel %vm2199, %v1480, 0.0
      %v2855 = vadd.f32 %v2853, %v2854
      %v2856 = vsel %vm2199, %v1481, 0.0
      %v2857 = vadd.f32 %v2855, %v2856
      %v2858 = vsel %vm2199, %v1482, 0.0
      %v2859 = vadd.f32 %v2857, %v2858
      %v2860 = vsel %vm2199, %v1483, 0.0
      %v2861 = vadd.f32 %v2859, %v2860
      %v2862 = vsel %vm2199, %v1484, 0.0
      %v2863 = vadd.f32 %v2861, %v2862
      %v2864 = vsel %vm2199, %v1485, 0.0
      %v2865 = vadd.f32 %v2863, %v2864
      %v2866 = vsel %vm2199, %v1486, 0.0
      %v2867 = vadd.f32 %v2865, %v2866
      %v2868 = vsel %vm2199, %v1487, 0.0
      %v2869 = vadd.f32 %v2867, %v2868
      %v2870 = vsel %vm2199, %v1488, 0.0
      %v2871 = vadd.f32 %v2869, %v2870
      %v2872 = vsel %vm2199, %v1489, 0.0
      %v2873 = vadd.f32 %v2871, %v2872
      %v2874 = vsel %vm2199, %v1490, 0.0
      %v2875 = vadd.f32 %v2873, %v2874
      %v2876 = vsel %vm2199, %v1491, 0.0
      %v2877 = vadd.f32 %v2875, %v2876
      %v2878 = vsel %vm2199, %v1492, 0.0
      %v2879 = vadd.f32 %v2877, %v2878
      %v2880 = vsel %vm2199, %v1493, 0.0
      %v2881 = vadd.f32 %v2879, %v2880
      %v2882 = vsel %vm2199, %v1494, 0.0
      %v2883 = vadd.f32 %v2881, %v2882
      %v2884 = vrot.slane %v2883, 4
      %v2885 = vadd.f32 %v2883, %v2884
      %v2886 = vrot.slane %v2885, 2
      %v2887 = vadd.f32 %v2885, %v2886
      %v2888 = vrot.slane %v2887, 1
      %v2889 = vadd.f32 %v2887, %v2888
      %v2890 = vsel %vm2199, %v1495, 0.0
      %v2891 = vsel %vm2199, %v1496, 0.0
      %v2892 = vadd.f32 %v2890, %v2891
      %v2893 = vsel %vm2199, %v1497, 0.0
      %v2894 = vadd.f32 %v2892, %v2893
      %v2895 = vsel %vm2199, %v1498, 0.0
      %v2896 = vadd.f32 %v2894, %v2895
      %v2897 = vsel %vm2199, %v1499, 0.0
      %v2898 = vadd.f32 %v2896, %v2897
      %v2899 = vsel %vm2199, %v1500, 0.0
      %v2900 = vadd.f32 %v2898, %v2899
      %v2901 = vsel %vm2199, %v1501, 0.0
      %v2902 = vadd.f32 %v2900, %v2901
      %v2903 = vsel %vm2199, %v1502, 0.0
      %v2904 = vadd.f32 %v2902, %v2903
      %v2905 = vsel %vm2199, %v1503, 0.0
      %v2906 = vadd.f32 %v2904, %v2905
      %v2907 = vsel %vm2199, %v1504, 0.0
      %v2908 = vadd.f32 %v2906, %v2907
      %v2909 = vsel %vm2199, %v1505, 0.0
      %v2910 = vadd.f32 %v2908, %v2909
      %v2911 = vsel %vm2199, %v1506, 0.0
      %v2912 = vadd.f32 %v2910, %v2911
      %v2913 = vsel %vm2199, %v1507, 0.0
      %v2914 = vadd.f32 %v2912, %v2913
      %v2915 = vsel %vm2199, %v1508, 0.0
      %v2916 = vadd.f32 %v2914, %v2915
      %v2917 = vsel %vm2199, %v1509, 0.0
      %v2918 = vadd.f32 %v2916, %v2917
      %v2919 = vsel %vm2199, %v1510, 0.0
      %v2920 = vadd.f32 %v2918, %v2919
      %v2921 = vsel %vm2199, %v1511, 0.0
      %v2922 = vadd.f32 %v2920, %v2921
      %v2923 = vsel %vm2199, %v1512, 0.0
      %v2924 = vadd.f32 %v2922, %v2923
      %v2925 = vsel %vm2199, %v1513, 0.0
      %v2926 = vadd.f32 %v2924, %v2925
      %v2927 = vsel %vm2199, %v1514, 0.0
      %v2928 = vadd.f32 %v2926, %v2927
      %v2929 = vsel %vm2199, %v1515, 0.0
      %v2930 = vadd.f32 %v2928, %v2929
      %v2931 = vsel %vm2199, %v1516, 0.0
      %v2932 = vadd.f32 %v2930, %v2931
      %v2933 = vsel %vm2199, %v1517, 0.0
      %v2934 = vadd.f32 %v2932, %v2933
      %v2935 = vsel %vm2199, %v1518, 0.0
      %v2936 = vadd.f32 %v2934, %v2935
      %v2937 = vsel %vm2199, %v1519, 0.0
      %v2938 = vadd.f32 %v2936, %v2937
      %v2939 = vsel %vm2199, %v1520, 0.0
      %v2940 = vadd.f32 %v2938, %v2939
      %v2941 = vsel %vm2199, %v1521, 0.0
      %v2942 = vadd.f32 %v2940, %v2941
      %v2943 = vsel %vm2199, %v1522, 0.0
      %v2944 = vadd.f32 %v2942, %v2943
      %v2945 = vsel %vm2199, %v1523, 0.0
      %v2946 = vadd.f32 %v2944, %v2945
      %v2947 = vsel %vm2199, %v1524, 0.0
      %v2948 = vadd.f32 %v2946, %v2947
      %v2949 = vsel %vm2199, %v1525, 0.0
      %v2950 = vadd.f32 %v2948, %v2949
      %v2951 = vsel %vm2199, %v1526, 0.0
      %v2952 = vadd.f32 %v2950, %v2951
      %v2953 = vrot.slane %v2952, 4
      %v2954 = vadd.f32 %v2952, %v2953
      %v2955 = vrot.slane %v2954, 2
      %v2956 = vadd.f32 %v2954, %v2955
      %v2957 = vrot.slane %v2956, 1
      %v2958 = vadd.f32 %v2956, %v2957
      %v2959 = vsel %vm2199, %v1527, 0.0
      %v2960 = vsel %vm2199, %v1528, 0.0
      %v2961 = vadd.f32 %v2959, %v2960
      %v2962 = vsel %vm2199, %v1529, 0.0
      %v2963 = vadd.f32 %v2961, %v2962
      %v2964 = vsel %vm2199, %v1530, 0.0
      %v2965 = vadd.f32 %v2963, %v2964
      %v2966 = vsel %vm2199, %v1531, 0.0
      %v2967 = vadd.f32 %v2965, %v2966
      %v2968 = vsel %vm2199, %v1532, 0.0
      %v2969 = vadd.f32 %v2967, %v2968
      %v2970 = vsel %vm2199, %v1533, 0.0
      %v2971 = vadd.f32 %v2969, %v2970
      %v2972 = vsel %vm2199, %v1534, 0.0
      %v2973 = vadd.f32 %v2971, %v2972
      %v2974 = vsel %vm2199, %v1535, 0.0
      %v2975 = vadd.f32 %v2973, %v2974
      %v2976 = vsel %vm2199, %v1536, 0.0
      %v2977 = vadd.f32 %v2975, %v2976
      %v2978 = vsel %vm2199, %v1537, 0.0
      %v2979 = vadd.f32 %v2977, %v2978
      %v2980 = vsel %vm2199, %v1538, 0.0
      %v2981 = vadd.f32 %v2979, %v2980
      %v2982 = vsel %vm2199, %v1539, 0.0
      %v2983 = vadd.f32 %v2981, %v2982
      %v2984 = vsel %vm2199, %v1540, 0.0
      %v2985 = vadd.f32 %v2983, %v2984
      %v2986 = vsel %vm2199, %v1541, 0.0
      %v2987 = vadd.f32 %v2985, %v2986
      %v2988 = vsel %vm2199, %v1542, 0.0
      %v2989 = vadd.f32 %v2987, %v2988
      %v2990 = vsel %vm2199, %v1543, 0.0
      %v2991 = vadd.f32 %v2989, %v2990
      %v2992 = vsel %vm2199, %v1544, 0.0
      %v2993 = vadd.f32 %v2991, %v2992
      %v2994 = vsel %vm2199, %v1545, 0.0
      %v2995 = vadd.f32 %v2993, %v2994
      %v2996 = vsel %vm2199, %v1546, 0.0
      %v2997 = vadd.f32 %v2995, %v2996
      %v2998 = vsel %vm2199, %v1547, 0.0
      %v2999 = vadd.f32 %v2997, %v2998
      %v3000 = vsel %vm2199, %v1548, 0.0
      %v3001 = vadd.f32 %v2999, %v3000
      %v3002 = vsel %vm2199, %v1549, 0.0
      %v3003 = vadd.f32 %v3001, %v3002
      %v3004 = vsel %vm2199, %v1550, 0.0
      %v3005 = vadd.f32 %v3003, %v3004
      %v3006 = vsel %vm2199, %v1551, 0.0
      %v3007 = vadd.f32 %v3005, %v3006
      %v3008 = vsel %vm2199, %v1552, 0.0
      %v3009 = vadd.f32 %v3007, %v3008
      %v3010 = vsel %vm2199, %v1553, 0.0
      %v3011 = vadd.f32 %v3009, %v3010
      %v3012 = vsel %vm2199, %v1554, 0.0
      %v3013 = vadd.f32 %v3011, %v3012
      %v3014 = vsel %vm2199, %v1555, 0.0
      %v3015 = vadd.f32 %v3013, %v3014
      %v3016 = vsel %vm2199, %v1556, 0.0
      %v3017 = vadd.f32 %v3015, %v3016
      %v3018 = vsel %vm2199, %v1557, 0.0
      %v3019 = vadd.f32 %v3017, %v3018
      %v3020 = vsel %vm2199, %v1558, 0.0
      %v3021 = vadd.f32 %v3019, %v3020
      %v3022 = vrot.slane %v3021, 4
      %v3023 = vadd.f32 %v3021, %v3022
      %v3024 = vrot.slane %v3023, 2
      %v3025 = vadd.f32 %v3023, %v3024
      %v3026 = vrot.slane %v3025, 1
      %v3027 = vadd.f32 %v3025, %v3026
      %v3028 = vsel %vm2199, %v1559, 0.0
      %v3029 = vsel %vm2199, %v1560, 0.0
      %v3030 = vadd.f32 %v3028, %v3029
      %v3031 = vsel %vm2199, %v1561, 0.0
      %v3032 = vadd.f32 %v3030, %v3031
      %v3033 = vsel %vm2199, %v1562, 0.0
      %v3034 = vadd.f32 %v3032, %v3033
      %v3035 = vsel %vm2199, %v1563, 0.0
      %v3036 = vadd.f32 %v3034, %v3035
      %v3037 = vsel %vm2199, %v1564, 0.0
      %v3038 = vadd.f32 %v3036, %v3037
      %v3039 = vsel %vm2199, %v1565, 0.0
      %v3040 = vadd.f32 %v3038, %v3039
      %v3041 = vsel %vm2199, %v1566, 0.0
      %v3042 = vadd.f32 %v3040, %v3041
      %v3043 = vsel %vm2199, %v1567, 0.0
      %v3044 = vadd.f32 %v3042, %v3043
      %v3045 = vsel %vm2199, %v1568, 0.0
      %v3046 = vadd.f32 %v3044, %v3045
      %v3047 = vsel %vm2199, %v1569, 0.0
      %v3048 = vadd.f32 %v3046, %v3047
      %v3049 = vsel %vm2199, %v1570, 0.0
      %v3050 = vadd.f32 %v3048, %v3049
      %v3051 = vsel %vm2199, %v1571, 0.0
      %v3052 = vadd.f32 %v3050, %v3051
      %v3053 = vsel %vm2199, %v1572, 0.0
      %v3054 = vadd.f32 %v3052, %v3053
      %v3055 = vsel %vm2199, %v1573, 0.0
      %v3056 = vadd.f32 %v3054, %v3055
      %v3057 = vsel %vm2199, %v1574, 0.0
      %v3058 = vadd.f32 %v3056, %v3057
      %v3059 = vsel %vm2199, %v1575, 0.0
      %v3060 = vadd.f32 %v3058, %v3059
      %v3061 = vsel %vm2199, %v1576, 0.0
      %v3062 = vadd.f32 %v3060, %v3061
      %v3063 = vsel %vm2199, %v1577, 0.0
      %v3064 = vadd.f32 %v3062, %v3063
      %v3065 = vsel %vm2199, %v1578, 0.0
      %v3066 = vadd.f32 %v3064, %v3065
      %v3067 = vsel %vm2199, %v1579, 0.0
      %v3068 = vadd.f32 %v3066, %v3067
      %v3069 = vsel %vm2199, %v1580, 0.0
      %v3070 = vadd.f32 %v3068, %v3069
      %v3071 = vsel %vm2199, %v1581, 0.0
      %v3072 = vadd.f32 %v3070, %v3071
      %v3073 = vsel %vm2199, %v1582, 0.0
      %v3074 = vadd.f32 %v3072, %v3073
      %v3075 = vsel %vm2199, %v1583, 0.0
      %v3076 = vadd.f32 %v3074, %v3075
      %v3077 = vsel %vm2199, %v1584, 0.0
      %v3078 = vadd.f32 %v3076, %v3077
      %v3079 = vsel %vm2199, %v1585, 0.0
      %v3080 = vadd.f32 %v3078, %v3079
      %v3081 = vsel %vm2199, %v1586, 0.0
      %v3082 = vadd.f32 %v3080, %v3081
      %v3083 = vsel %vm2199, %v1587, 0.0
      %v3084 = vadd.f32 %v3082, %v3083
      %v3085 = vsel %vm2199, %v1588, 0.0
      %v3086 = vadd.f32 %v3084, %v3085
      %v3087 = vsel %vm2199, %v1589, 0.0
      %v3088 = vadd.f32 %v3086, %v3087
      %v3089 = vsel %vm2199, %v1590, 0.0
      %v3090 = vadd.f32 %v3088, %v3089
      %v3091 = vrot.slane %v3090, 4
      %v3092 = vadd.f32 %v3090, %v3091
      %v3093 = vrot.slane %v3092, 2
      %v3094 = vadd.f32 %v3092, %v3093
      %v3095 = vrot.slane %v3094, 1
      %v3096 = vadd.f32 %v3094, %v3095
      %v3097 = vsel %vm2199, %v1591, 0.0
      %v3098 = vsel %vm2199, %v1592, 0.0
      %v3099 = vadd.f32 %v3097, %v3098
      %v3100 = vsel %vm2199, %v1593, 0.0
      %v3101 = vadd.f32 %v3099, %v3100
      %v3102 = vsel %vm2199, %v1594, 0.0
      %v3103 = vadd.f32 %v3101, %v3102
      %v3104 = vsel %vm2199, %v1595, 0.0
      %v3105 = vadd.f32 %v3103, %v3104
      %v3106 = vsel %vm2199, %v1596, 0.0
      %v3107 = vadd.f32 %v3105, %v3106
      %v3108 = vsel %vm2199, %v1597, 0.0
      %v3109 = vadd.f32 %v3107, %v3108
      %v3110 = vsel %vm2199, %v1598, 0.0
      %v3111 = vadd.f32 %v3109, %v3110
      %v3112 = vsel %vm2199, %v1599, 0.0
      %v3113 = vadd.f32 %v3111, %v3112
      %v3114 = vsel %vm2199, %v1600, 0.0
      %v3115 = vadd.f32 %v3113, %v3114
      %v3116 = vsel %vm2199, %v1601, 0.0
      %v3117 = vadd.f32 %v3115, %v3116
      %v3118 = vsel %vm2199, %v1602, 0.0
      %v3119 = vadd.f32 %v3117, %v3118
      %v3120 = vsel %vm2199, %v1603, 0.0
      %v3121 = vadd.f32 %v3119, %v3120
      %v3122 = vsel %vm2199, %v1604, 0.0
      %v3123 = vadd.f32 %v3121, %v3122
      %v3124 = vsel %vm2199, %v1605, 0.0
      %v3125 = vadd.f32 %v3123, %v3124
      %v3126 = vsel %vm2199, %v1606, 0.0
      %v3127 = vadd.f32 %v3125, %v3126
      %v3128 = vsel %vm2199, %v1607, 0.0
      %v3129 = vadd.f32 %v3127, %v3128
      %v3130 = vsel %vm2199, %v1608, 0.0
      %v3131 = vadd.f32 %v3129, %v3130
      %v3132 = vsel %vm2199, %v1609, 0.0
      %v3133 = vadd.f32 %v3131, %v3132
      %v3134 = vsel %vm2199, %v1610, 0.0
      %v3135 = vadd.f32 %v3133, %v3134
      %v3136 = vsel %vm2199, %v1611, 0.0
      %v3137 = vadd.f32 %v3135, %v3136
      %v3138 = vsel %vm2199, %v1612, 0.0
      %v3139 = vadd.f32 %v3137, %v3138
      %v3140 = vsel %vm2199, %v1613, 0.0
      %v3141 = vadd.f32 %v3139, %v3140
      %v3142 = vsel %vm2199, %v1614, 0.0
      %v3143 = vadd.f32 %v3141, %v3142
      %v3144 = vsel %vm2199, %v1615, 0.0
      %v3145 = vadd.f32 %v3143, %v3144
      %v3146 = vsel %vm2199, %v1616, 0.0
      %v3147 = vadd.f32 %v3145, %v3146
      %v3148 = vsel %vm2199, %v1617, 0.0
      %v3149 = vadd.f32 %v3147, %v3148
      %v3150 = vsel %vm2199, %v1618, 0.0
      %v3151 = vadd.f32 %v3149, %v3150
      %v3152 = vsel %vm2199, %v1619, 0.0
      %v3153 = vadd.f32 %v3151, %v3152
      %v3154 = vsel %vm2199, %v1620, 0.0
      %v3155 = vadd.f32 %v3153, %v3154
      %v3156 = vsel %vm2199, %v1621, 0.0
      %v3157 = vadd.f32 %v3155, %v3156
      %v3158 = vsel %vm2199, %v1622, 0.0
      %v3159 = vadd.f32 %v3157, %v3158
      %v3160 = vrot.slane %v3159, 4
      %v3161 = vadd.f32 %v3159, %v3160
      %v3162 = vrot.slane %v3161, 2
      %v3163 = vadd.f32 %v3161, %v3162
      %v3164 = vrot.slane %v3163, 1
      %v3165 = vadd.f32 %v3163, %v3164
      %v3166 = vsel %vm2199, %v1623, 0.0
      %v3167 = vsel %vm2199, %v1624, 0.0
      %v3168 = vadd.f32 %v3166, %v3167
      %v3169 = vsel %vm2199, %v1625, 0.0
      %v3170 = vadd.f32 %v3168, %v3169
      %v3171 = vsel %vm2199, %v1626, 0.0
      %v3172 = vadd.f32 %v3170, %v3171
      %v3173 = vsel %vm2199, %v1627, 0.0
      %v3174 = vadd.f32 %v3172, %v3173
      %v3175 = vsel %vm2199, %v1628, 0.0
      %v3176 = vadd.f32 %v3174, %v3175
      %v3177 = vsel %vm2199, %v1629, 0.0
      %v3178 = vadd.f32 %v3176, %v3177
      %v3179 = vsel %vm2199, %v1630, 0.0
      %v3180 = vadd.f32 %v3178, %v3179
      %v3181 = vsel %vm2199, %v1631, 0.0
      %v3182 = vadd.f32 %v3180, %v3181
      %v3183 = vsel %vm2199, %v1632, 0.0
      %v3184 = vadd.f32 %v3182, %v3183
      %v3185 = vsel %vm2199, %v1633, 0.0
      %v3186 = vadd.f32 %v3184, %v3185
      %v3187 = vsel %vm2199, %v1634, 0.0
      %v3188 = vadd.f32 %v3186, %v3187
      %v3189 = vsel %vm2199, %v1635, 0.0
      %v3190 = vadd.f32 %v3188, %v3189
      %v3191 = vsel %vm2199, %v1636, 0.0
      %v3192 = vadd.f32 %v3190, %v3191
      %v3193 = vsel %vm2199, %v1637, 0.0
      %v3194 = vadd.f32 %v3192, %v3193
      %v3195 = vsel %vm2199, %v1638, 0.0
      %v3196 = vadd.f32 %v3194, %v3195
      %v3197 = vsel %vm2199, %v1639, 0.0
      %v3198 = vadd.f32 %v3196, %v3197
      %v3199 = vsel %vm2199, %v1640, 0.0
      %v3200 = vadd.f32 %v3198, %v3199
      %v3201 = vsel %vm2199, %v1641, 0.0
      %v3202 = vadd.f32 %v3200, %v3201
      %v3203 = vsel %vm2199, %v1642, 0.0
      %v3204 = vadd.f32 %v3202, %v3203
      %v3205 = vsel %vm2199, %v1643, 0.0
      %v3206 = vadd.f32 %v3204, %v3205
      %v3207 = vsel %vm2199, %v1644, 0.0
      %v3208 = vadd.f32 %v3206, %v3207
      %v3209 = vsel %vm2199, %v1645, 0.0
      %v3210 = vadd.f32 %v3208, %v3209
      %v3211 = vsel %vm2199, %v1646, 0.0
      %v3212 = vadd.f32 %v3210, %v3211
      %v3213 = vsel %vm2199, %v1647, 0.0
      %v3214 = vadd.f32 %v3212, %v3213
      %v3215 = vsel %vm2199, %v1648, 0.0
      %v3216 = vadd.f32 %v3214, %v3215
      %v3217 = vsel %vm2199, %v1649, 0.0
      %v3218 = vadd.f32 %v3216, %v3217
      %v3219 = vsel %vm2199, %v1650, 0.0
      %v3220 = vadd.f32 %v3218, %v3219
      %v3221 = vsel %vm2199, %v1651, 0.0
      %v3222 = vadd.f32 %v3220, %v3221
      %v3223 = vsel %vm2199, %v1652, 0.0
      %v3224 = vadd.f32 %v3222, %v3223
      %v3225 = vsel %vm2199, %v1653, 0.0
      %v3226 = vadd.f32 %v3224, %v3225
      %v3227 = vsel %vm2199, %v1654, 0.0
      %v3228 = vadd.f32 %v3226, %v3227
      %v3229 = vrot.slane %v3228, 4
      %v3230 = vadd.f32 %v3228, %v3229
      %v3231 = vrot.slane %v3230, 2
      %v3232 = vadd.f32 %v3230, %v3231
      %v3233 = vrot.slane %v3232, 1
      %v3234 = vadd.f32 %v3232, %v3233
      %v3235 = vsel %vm2199, %v1655, 0.0
      %v3236 = vsel %vm2199, %v1656, 0.0
      %v3237 = vadd.f32 %v3235, %v3236
      %v3238 = vsel %vm2199, %v1657, 0.0
      %v3239 = vadd.f32 %v3237, %v3238
      %v3240 = vsel %vm2199, %v1658, 0.0
      %v3241 = vadd.f32 %v3239, %v3240
      %v3242 = vsel %vm2199, %v1659, 0.0
      %v3243 = vadd.f32 %v3241, %v3242
      %v3244 = vsel %vm2199, %v1660, 0.0
      %v3245 = vadd.f32 %v3243, %v3244
      %v3246 = vsel %vm2199, %v1661, 0.0
      %v3247 = vadd.f32 %v3245, %v3246
      %v3248 = vsel %vm2199, %v1662, 0.0
      %v3249 = vadd.f32 %v3247, %v3248
      %v3250 = vsel %vm2199, %v1663, 0.0
      %v3251 = vadd.f32 %v3249, %v3250
      %v3252 = vsel %vm2199, %v1664, 0.0
      %v3253 = vadd.f32 %v3251, %v3252
      %v3254 = vsel %vm2199, %v1665, 0.0
      %v3255 = vadd.f32 %v3253, %v3254
      %v3256 = vsel %vm2199, %v1666, 0.0
      %v3257 = vadd.f32 %v3255, %v3256
      %v3258 = vsel %vm2199, %v1667, 0.0
      %v3259 = vadd.f32 %v3257, %v3258
      %v3260 = vsel %vm2199, %v1668, 0.0
      %v3261 = vadd.f32 %v3259, %v3260
      %v3262 = vsel %vm2199, %v1669, 0.0
      %v3263 = vadd.f32 %v3261, %v3262
      %v3264 = vsel %vm2199, %v1670, 0.0
      %v3265 = vadd.f32 %v3263, %v3264
      %v3266 = vsel %vm2199, %v1671, 0.0
      %v3267 = vadd.f32 %v3265, %v3266
      %v3268 = vsel %vm2199, %v1672, 0.0
      %v3269 = vadd.f32 %v3267, %v3268
      %v3270 = vsel %vm2199, %v1673, 0.0
      %v3271 = vadd.f32 %v3269, %v3270
      %v3272 = vsel %vm2199, %v1674, 0.0
      %v3273 = vadd.f32 %v3271, %v3272
      %v3274 = vsel %vm2199, %v1675, 0.0
      %v3275 = vadd.f32 %v3273, %v3274
      %v3276 = vsel %vm2199, %v1676, 0.0
      %v3277 = vadd.f32 %v3275, %v3276
      %v3278 = vsel %vm2199, %v1677, 0.0
      %v3279 = vadd.f32 %v3277, %v3278
      %v3280 = vsel %vm2199, %v1678, 0.0
      %v3281 = vadd.f32 %v3279, %v3280
      %v3282 = vsel %vm2199, %v1679, 0.0
      %v3283 = vadd.f32 %v3281, %v3282
      %v3284 = vsel %vm2199, %v1680, 0.0
      %v3285 = vadd.f32 %v3283, %v3284
      %v3286 = vsel %vm2199, %v1681, 0.0
      %v3287 = vadd.f32 %v3285, %v3286
      %v3288 = vsel %vm2199, %v1682, 0.0
      %v3289 = vadd.f32 %v3287, %v3288
      %v3290 = vsel %vm2199, %v1683, 0.0
      %v3291 = vadd.f32 %v3289, %v3290
      %v3292 = vsel %vm2199, %v1684, 0.0
      %v3293 = vadd.f32 %v3291, %v3292
      %v3294 = vsel %vm2199, %v1685, 0.0
      %v3295 = vadd.f32 %v3293, %v3294
      %v3296 = vsel %vm2199, %v1686, 0.0
      %v3297 = vadd.f32 %v3295, %v3296
      %v3298 = vrot.slane %v3297, 4
      %v3299 = vadd.f32 %v3297, %v3298
      %v3300 = vrot.slane %v3299, 2
      %v3301 = vadd.f32 %v3299, %v3300
      %v3302 = vrot.slane %v3301, 1
      %v3303 = vadd.f32 %v3301, %v3302
      %v3304 = vsel %vm2199, %v1687, 0.0
      %v3305 = vsel %vm2199, %v1688, 0.0
      %v3306 = vadd.f32 %v3304, %v3305
      %v3307 = vsel %vm2199, %v1689, 0.0
      %v3308 = vadd.f32 %v3306, %v3307
      %v3309 = vsel %vm2199, %v1690, 0.0
      %v3310 = vadd.f32 %v3308, %v3309
      %v3311 = vsel %vm2199, %v1691, 0.0
      %v3312 = vadd.f32 %v3310, %v3311
      %v3313 = vsel %vm2199, %v1692, 0.0
      %v3314 = vadd.f32 %v3312, %v3313
      %v3315 = vsel %vm2199, %v1693, 0.0
      %v3316 = vadd.f32 %v3314, %v3315
      %v3317 = vsel %vm2199, %v1694, 0.0
      %v3318 = vadd.f32 %v3316, %v3317
      %v3319 = vsel %vm2199, %v1695, 0.0
      %v3320 = vadd.f32 %v3318, %v3319
      %v3321 = vsel %vm2199, %v1696, 0.0
      %v3322 = vadd.f32 %v3320, %v3321
      %v3323 = vsel %vm2199, %v1697, 0.0
      %v3324 = vadd.f32 %v3322, %v3323
      %v3325 = vsel %vm2199, %v1698, 0.0
      %v3326 = vadd.f32 %v3324, %v3325
      %v3327 = vsel %vm2199, %v1699, 0.0
      %v3328 = vadd.f32 %v3326, %v3327
      %v3329 = vsel %vm2199, %v1700, 0.0
      %v3330 = vadd.f32 %v3328, %v3329
      %v3331 = vsel %vm2199, %v1701, 0.0
      %v3332 = vadd.f32 %v3330, %v3331
      %v3333 = vsel %vm2199, %v1702, 0.0
      %v3334 = vadd.f32 %v3332, %v3333
      %v3335 = vsel %vm2199, %v1703, 0.0
      %v3336 = vadd.f32 %v3334, %v3335
      %v3337 = vsel %vm2199, %v1704, 0.0
      %v3338 = vadd.f32 %v3336, %v3337
      %v3339 = vsel %vm2199, %v1705, 0.0
      %v3340 = vadd.f32 %v3338, %v3339
      %v3341 = vsel %vm2199, %v1706, 0.0
      %v3342 = vadd.f32 %v3340, %v3341
      %v3343 = vsel %vm2199, %v1707, 0.0
      %v3344 = vadd.f32 %v3342, %v3343
      %v3345 = vsel %vm2199, %v1708, 0.0
      %v3346 = vadd.f32 %v3344, %v3345
      %v3347 = vsel %vm2199, %v1709, 0.0
      %v3348 = vadd.f32 %v3346, %v3347
      %v3349 = vsel %vm2199, %v1710, 0.0
      %v3350 = vadd.f32 %v3348, %v3349
      %v3351 = vsel %vm2199, %v1711, 0.0
      %v3352 = vadd.f32 %v3350, %v3351
      %v3353 = vsel %vm2199, %v1712, 0.0
      %v3354 = vadd.f32 %v3352, %v3353
      %v3355 = vsel %vm2199, %v1713, 0.0
      %v3356 = vadd.f32 %v3354, %v3355
      %v3357 = vsel %vm2199, %v1714, 0.0
      %v3358 = vadd.f32 %v3356, %v3357
      %v3359 = vsel %vm2199, %v1715, 0.0
      %v3360 = vadd.f32 %v3358, %v3359
      %v3361 = vsel %vm2199, %v1716, 0.0
      %v3362 = vadd.f32 %v3360, %v3361
      %v3363 = vsel %vm2199, %v1717, 0.0
      %v3364 = vadd.f32 %v3362, %v3363
      %v3365 = vsel %vm2199, %v1718, 0.0
      %v3366 = vadd.f32 %v3364, %v3365
      %v3367 = vrot.slane %v3366, 4
      %v3368 = vadd.f32 %v3366, %v3367
      %v3369 = vrot.slane %v3368, 2
      %v3370 = vadd.f32 %v3368, %v3369
      %v3371 = vrot.slane %v3370, 1
      %v3372 = vadd.f32 %v3370, %v3371
      %v3373 = vsel %vm2199, %v1719, 0.0
      %v3374 = vsel %vm2199, %v1720, 0.0
      %v3375 = vadd.f32 %v3373, %v3374
      %v3376 = vsel %vm2199, %v1721, 0.0
      %v3377 = vadd.f32 %v3375, %v3376
      %v3378 = vsel %vm2199, %v1722, 0.0
      %v3379 = vadd.f32 %v3377, %v3378
      %v3380 = vsel %vm2199, %v1723, 0.0
      %v3381 = vadd.f32 %v3379, %v3380
      %v3382 = vsel %vm2199, %v1724, 0.0
      %v3383 = vadd.f32 %v3381, %v3382
      %v3384 = vsel %vm2199, %v1725, 0.0
      %v3385 = vadd.f32 %v3383, %v3384
      %v3386 = vsel %vm2199, %v1726, 0.0
      %v3387 = vadd.f32 %v3385, %v3386
      %v3388 = vsel %vm2199, %v1727, 0.0
      %v3389 = vadd.f32 %v3387, %v3388
      %v3390 = vsel %vm2199, %v1728, 0.0
      %v3391 = vadd.f32 %v3389, %v3390
      %v3392 = vsel %vm2199, %v1729, 0.0
      %v3393 = vadd.f32 %v3391, %v3392
      %v3394 = vsel %vm2199, %v1730, 0.0
      %v3395 = vadd.f32 %v3393, %v3394
      %v3396 = vsel %vm2199, %v1731, 0.0
      %v3397 = vadd.f32 %v3395, %v3396
      %v3398 = vsel %vm2199, %v1732, 0.0
      %v3399 = vadd.f32 %v3397, %v3398
      %v3400 = vsel %vm2199, %v1733, 0.0
      %v3401 = vadd.f32 %v3399, %v3400
      %v3402 = vsel %vm2199, %v1734, 0.0
      %v3403 = vadd.f32 %v3401, %v3402
      %v3404 = vsel %vm2199, %v1735, 0.0
      %v3405 = vadd.f32 %v3403, %v3404
      %v3406 = vsel %vm2199, %v1736, 0.0
      %v3407 = vadd.f32 %v3405, %v3406
      %v3408 = vsel %vm2199, %v1737, 0.0
      %v3409 = vadd.f32 %v3407, %v3408
      %v3410 = vsel %vm2199, %v1738, 0.0
      %v3411 = vadd.f32 %v3409, %v3410
      %v3412 = vsel %vm2199, %v1739, 0.0
      %v3413 = vadd.f32 %v3411, %v3412
      %v3414 = vsel %vm2199, %v1740, 0.0
      %v3415 = vadd.f32 %v3413, %v3414
      %v3416 = vsel %vm2199, %v1741, 0.0
      %v3417 = vadd.f32 %v3415, %v3416
      %v3418 = vsel %vm2199, %v1742, 0.0
      %v3419 = vadd.f32 %v3417, %v3418
      %v3420 = vsel %vm2199, %v1743, 0.0
      %v3421 = vadd.f32 %v3419, %v3420
      %v3422 = vsel %vm2199, %v1744, 0.0
      %v3423 = vadd.f32 %v3421, %v3422
      %v3424 = vsel %vm2199, %v1745, 0.0
      %v3425 = vadd.f32 %v3423, %v3424
      %v3426 = vsel %vm2199, %v1746, 0.0
      %v3427 = vadd.f32 %v3425, %v3426
      %v3428 = vsel %vm2199, %v1747, 0.0
      %v3429 = vadd.f32 %v3427, %v3428
      %v3430 = vsel %vm2199, %v1748, 0.0
      %v3431 = vadd.f32 %v3429, %v3430
      %v3432 = vsel %vm2199, %v1749, 0.0
      %v3433 = vadd.f32 %v3431, %v3432
      %v3434 = vsel %vm2199, %v1750, 0.0
      %v3435 = vadd.f32 %v3433, %v3434
      %v3436 = vrot.slane %v3435, 4
      %v3437 = vadd.f32 %v3435, %v3436
      %v3438 = vrot.slane %v3437, 2
      %v3439 = vadd.f32 %v3437, %v3438
      %v3440 = vrot.slane %v3439, 1
      %v3441 = vadd.f32 %v3439, %v3440
      %v3442 = vsel %vm2199, %v1751, 0.0
      %v3443 = vsel %vm2199, %v1752, 0.0
      %v3444 = vadd.f32 %v3442, %v3443
      %v3445 = vsel %vm2199, %v1753, 0.0
      %v3446 = vadd.f32 %v3444, %v3445
      %v3447 = vsel %vm2199, %v1754, 0.0
      %v3448 = vadd.f32 %v3446, %v3447
      %v3449 = vsel %vm2199, %v1755, 0.0
      %v3450 = vadd.f32 %v3448, %v3449
      %v3451 = vsel %vm2199, %v1756, 0.0
      %v3452 = vadd.f32 %v3450, %v3451
      %v3453 = vsel %vm2199, %v1757, 0.0
      %v3454 = vadd.f32 %v3452, %v3453
      %v3455 = vsel %vm2199, %v1758, 0.0
      %v3456 = vadd.f32 %v3454, %v3455
      %v3457 = vsel %vm2199, %v1759, 0.0
      %v3458 = vadd.f32 %v3456, %v3457
      %v3459 = vsel %vm2199, %v1760, 0.0
      %v3460 = vadd.f32 %v3458, %v3459
      %v3461 = vsel %vm2199, %v1761, 0.0
      %v3462 = vadd.f32 %v3460, %v3461
      %v3463 = vsel %vm2199, %v1762, 0.0
      %v3464 = vadd.f32 %v3462, %v3463
      %v3465 = vsel %vm2199, %v1763, 0.0
      %v3466 = vadd.f32 %v3464, %v3465
      %v3467 = vsel %vm2199, %v1764, 0.0
      %v3468 = vadd.f32 %v3466, %v3467
      %v3469 = vsel %vm2199, %v1765, 0.0
      %v3470 = vadd.f32 %v3468, %v3469
      %v3471 = vsel %vm2199, %v1766, 0.0
      %v3472 = vadd.f32 %v3470, %v3471
      %v3473 = vsel %vm2199, %v1767, 0.0
      %v3474 = vadd.f32 %v3472, %v3473
      %v3475 = vsel %vm2199, %v1768, 0.0
      %v3476 = vadd.f32 %v3474, %v3475
      %v3477 = vsel %vm2199, %v1769, 0.0
      %v3478 = vadd.f32 %v3476, %v3477
      %v3479 = vsel %vm2199, %v1770, 0.0
      %v3480 = vadd.f32 %v3478, %v3479
      %v3481 = vsel %vm2199, %v1771, 0.0
      %v3482 = vadd.f32 %v3480, %v3481
      %v3483 = vsel %vm2199, %v1772, 0.0
      %v3484 = vadd.f32 %v3482, %v3483
      %v3485 = vsel %vm2199, %v1773, 0.0
      %v3486 = vadd.f32 %v3484, %v3485
      %v3487 = vsel %vm2199, %v1774, 0.0
      %v3488 = vadd.f32 %v3486, %v3487
      %v3489 = vsel %vm2199, %v1775, 0.0
      %v3490 = vadd.f32 %v3488, %v3489
      %v3491 = vsel %vm2199, %v1776, 0.0
      %v3492 = vadd.f32 %v3490, %v3491
      %v3493 = vsel %vm2199, %v1777, 0.0
      %v3494 = vadd.f32 %v3492, %v3493
      %v3495 = vsel %vm2199, %v1778, 0.0
      %v3496 = vadd.f32 %v3494, %v3495
      %v3497 = vsel %vm2199, %v1779, 0.0
      %v3498 = vadd.f32 %v3496, %v3497
      %v3499 = vsel %vm2199, %v1780, 0.0
      %v3500 = vadd.f32 %v3498, %v3499
      %v3501 = vsel %vm2199, %v1781, 0.0
      %v3502 = vadd.f32 %v3500, %v3501
      %v3503 = vsel %vm2199, %v1782, 0.0
      %v3504 = vadd.f32 %v3502, %v3503
      %v3505 = vrot.slane %v3504, 4
      %v3506 = vadd.f32 %v3504, %v3505
      %v3507 = vrot.slane %v3506, 2
      %v3508 = vadd.f32 %v3506, %v3507
      %v3509 = vrot.slane %v3508, 1
      %v3510 = vadd.f32 %v3508, %v3509
      %v3511 = vsel %vm2199, %v1783, 0.0
      %v3512 = vsel %vm2199, %v1784, 0.0
      %v3513 = vadd.f32 %v3511, %v3512
      %v3514 = vsel %vm2199, %v1785, 0.0
      %v3515 = vadd.f32 %v3513, %v3514
      %v3516 = vsel %vm2199, %v1786, 0.0
      %v3517 = vadd.f32 %v3515, %v3516
      %v3518 = vsel %vm2199, %v1787, 0.0
      %v3519 = vadd.f32 %v3517, %v3518
      %v3520 = vsel %vm2199, %v1788, 0.0
      %v3521 = vadd.f32 %v3519, %v3520
      %v3522 = vsel %vm2199, %v1789, 0.0
      %v3523 = vadd.f32 %v3521, %v3522
      %v3524 = vsel %vm2199, %v1790, 0.0
      %v3525 = vadd.f32 %v3523, %v3524
      %v3526 = vsel %vm2199, %v1791, 0.0
      %v3527 = vadd.f32 %v3525, %v3526
      %v3528 = vsel %vm2199, %v1792, 0.0
      %v3529 = vadd.f32 %v3527, %v3528
      %v3530 = vsel %vm2199, %v1793, 0.0
      %v3531 = vadd.f32 %v3529, %v3530
      %v3532 = vsel %vm2199, %v1794, 0.0
      %v3533 = vadd.f32 %v3531, %v3532
      %v3534 = vsel %vm2199, %v1795, 0.0
      %v3535 = vadd.f32 %v3533, %v3534
      %v3536 = vsel %vm2199, %v1796, 0.0
      %v3537 = vadd.f32 %v3535, %v3536
      %v3538 = vsel %vm2199, %v1797, 0.0
      %v3539 = vadd.f32 %v3537, %v3538
      %v3540 = vsel %vm2199, %v1798, 0.0
      %v3541 = vadd.f32 %v3539, %v3540
      %v3542 = vsel %vm2199, %v1799, 0.0
      %v3543 = vadd.f32 %v3541, %v3542
      %v3544 = vsel %vm2199, %v1800, 0.0
      %v3545 = vadd.f32 %v3543, %v3544
      %v3546 = vsel %vm2199, %v1801, 0.0
      %v3547 = vadd.f32 %v3545, %v3546
      %v3548 = vsel %vm2199, %v1802, 0.0
      %v3549 = vadd.f32 %v3547, %v3548
      %v3550 = vsel %vm2199, %v1803, 0.0
      %v3551 = vadd.f32 %v3549, %v3550
      %v3552 = vsel %vm2199, %v1804, 0.0
      %v3553 = vadd.f32 %v3551, %v3552
      %v3554 = vsel %vm2199, %v1805, 0.0
      %v3555 = vadd.f32 %v3553, %v3554
      %v3556 = vsel %vm2199, %v1806, 0.0
      %v3557 = vadd.f32 %v3555, %v3556
      %v3558 = vsel %vm2199, %v1807, 0.0
      %v3559 = vadd.f32 %v3557, %v3558
      %v3560 = vsel %vm2199, %v1808, 0.0
      %v3561 = vadd.f32 %v3559, %v3560
      %v3562 = vsel %vm2199, %v1809, 0.0
      %v3563 = vadd.f32 %v3561, %v3562
      %v3564 = vsel %vm2199, %v1810, 0.0
      %v3565 = vadd.f32 %v3563, %v3564
      %v3566 = vsel %vm2199, %v1811, 0.0
      %v3567 = vadd.f32 %v3565, %v3566
      %v3568 = vsel %vm2199, %v1812, 0.0
      %v3569 = vadd.f32 %v3567, %v3568
      %v3570 = vsel %vm2199, %v1813, 0.0
      %v3571 = vadd.f32 %v3569, %v3570
      %v3572 = vsel %vm2199, %v1814, 0.0
      %v3573 = vadd.f32 %v3571, %v3572
      %v3574 = vrot.slane %v3573, 4
      %v3575 = vadd.f32 %v3573, %v3574
      %v3576 = vrot.slane %v3575, 2
      %v3577 = vadd.f32 %v3575, %v3576
      %v3578 = vrot.slane %v3577, 1
      %v3579 = vadd.f32 %v3577, %v3578
      %v3580 = vsel %vm2199, %v1815, 0.0
      %v3581 = vsel %vm2199, %v1816, 0.0
      %v3582 = vadd.f32 %v3580, %v3581
      %v3583 = vsel %vm2199, %v1817, 0.0
      %v3584 = vadd.f32 %v3582, %v3583
      %v3585 = vsel %vm2199, %v1818, 0.0
      %v3586 = vadd.f32 %v3584, %v3585
      %v3587 = vsel %vm2199, %v1819, 0.0
      %v3588 = vadd.f32 %v3586, %v3587
      %v3589 = vsel %vm2199, %v1820, 0.0
      %v3590 = vadd.f32 %v3588, %v3589
      %v3591 = vsel %vm2199, %v1821, 0.0
      %v3592 = vadd.f32 %v3590, %v3591
      %v3593 = vsel %vm2199, %v1822, 0.0
      %v3594 = vadd.f32 %v3592, %v3593
      %v3595 = vsel %vm2199, %v1823, 0.0
      %v3596 = vadd.f32 %v3594, %v3595
      %v3597 = vsel %vm2199, %v1824, 0.0
      %v3598 = vadd.f32 %v3596, %v3597
      %v3599 = vsel %vm2199, %v1825, 0.0
      %v3600 = vadd.f32 %v3598, %v3599
      %v3601 = vsel %vm2199, %v1826, 0.0
      %v3602 = vadd.f32 %v3600, %v3601
      %v3603 = vsel %vm2199, %v1827, 0.0
      %v3604 = vadd.f32 %v3602, %v3603
      %v3605 = vsel %vm2199, %v1828, 0.0
      %v3606 = vadd.f32 %v3604, %v3605
      %v3607 = vsel %vm2199, %v1829, 0.0
      %v3608 = vadd.f32 %v3606, %v3607
      %v3609 = vsel %vm2199, %v1830, 0.0
      %v3610 = vadd.f32 %v3608, %v3609
      %v3611 = vsel %vm2199, %v1831, 0.0
      %v3612 = vadd.f32 %v3610, %v3611
      %v3613 = vsel %vm2199, %v1832, 0.0
      %v3614 = vadd.f32 %v3612, %v3613
      %v3615 = vsel %vm2199, %v1833, 0.0
      %v3616 = vadd.f32 %v3614, %v3615
      %v3617 = vsel %vm2199, %v1834, 0.0
      %v3618 = vadd.f32 %v3616, %v3617
      %v3619 = vsel %vm2199, %v1835, 0.0
      %v3620 = vadd.f32 %v3618, %v3619
      %v3621 = vsel %vm2199, %v1836, 0.0
      %v3622 = vadd.f32 %v3620, %v3621
      %v3623 = vsel %vm2199, %v1837, 0.0
      %v3624 = vadd.f32 %v3622, %v3623
      %v3625 = vsel %vm2199, %v1838, 0.0
      %v3626 = vadd.f32 %v3624, %v3625
      %v3627 = vsel %vm2199, %v1839, 0.0
      %v3628 = vadd.f32 %v3626, %v3627
      %v3629 = vsel %vm2199, %v1840, 0.0
      %v3630 = vadd.f32 %v3628, %v3629
      %v3631 = vsel %vm2199, %v1841, 0.0
      %v3632 = vadd.f32 %v3630, %v3631
      %v3633 = vsel %vm2199, %v1842, 0.0
      %v3634 = vadd.f32 %v3632, %v3633
      %v3635 = vsel %vm2199, %v1843, 0.0
      %v3636 = vadd.f32 %v3634, %v3635
      %v3637 = vsel %vm2199, %v1844, 0.0
      %v3638 = vadd.f32 %v3636, %v3637
      %v3639 = vsel %vm2199, %v1845, 0.0
      %v3640 = vadd.f32 %v3638, %v3639
      %v3641 = vsel %vm2199, %v1846, 0.0
      %v3642 = vadd.f32 %v3640, %v3641
      %v3643 = vrot.slane %v3642, 4
      %v3644 = vadd.f32 %v3642, %v3643
      %v3645 = vrot.slane %v3644, 2
      %v3646 = vadd.f32 %v3644, %v3645
      %v3647 = vrot.slane %v3646, 1
      %v3648 = vadd.f32 %v3646, %v3647
      %v3649 = vsel %vm2199, %v1847, 0.0
      %v3650 = vsel %vm2199, %v1848, 0.0
      %v3651 = vadd.f32 %v3649, %v3650
      %v3652 = vsel %vm2199, %v1849, 0.0
      %v3653 = vadd.f32 %v3651, %v3652
      %v3654 = vsel %vm2199, %v1850, 0.0
      %v3655 = vadd.f32 %v3653, %v3654
      %v3656 = vsel %vm2199, %v1851, 0.0
      %v3657 = vadd.f32 %v3655, %v3656
      %v3658 = vsel %vm2199, %v1852, 0.0
      %v3659 = vadd.f32 %v3657, %v3658
      %v3660 = vsel %vm2199, %v1853, 0.0
      %v3661 = vadd.f32 %v3659, %v3660
      %v3662 = vsel %vm2199, %v1854, 0.0
      %v3663 = vadd.f32 %v3661, %v3662
      %v3664 = vsel %vm2199, %v1855, 0.0
      %v3665 = vadd.f32 %v3663, %v3664
      %v3666 = vsel %vm2199, %v1856, 0.0
      %v3667 = vadd.f32 %v3665, %v3666
      %v3668 = vsel %vm2199, %v1857, 0.0
      %v3669 = vadd.f32 %v3667, %v3668
      %v3670 = vsel %vm2199, %v1858, 0.0
      %v3671 = vadd.f32 %v3669, %v3670
      %v3672 = vsel %vm2199, %v1859, 0.0
      %v3673 = vadd.f32 %v3671, %v3672
      %v3674 = vsel %vm2199, %v1860, 0.0
      %v3675 = vadd.f32 %v3673, %v3674
      %v3676 = vsel %vm2199, %v1861, 0.0
      %v3677 = vadd.f32 %v3675, %v3676
      %v3678 = vsel %vm2199, %v1862, 0.0
      %v3679 = vadd.f32 %v3677, %v3678
      %v3680 = vsel %vm2199, %v1863, 0.0
      %v3681 = vadd.f32 %v3679, %v3680
      %v3682 = vsel %vm2199, %v1864, 0.0
      %v3683 = vadd.f32 %v3681, %v3682
      %v3684 = vsel %vm2199, %v1865, 0.0
      %v3685 = vadd.f32 %v3683, %v3684
      %v3686 = vsel %vm2199, %v1866, 0.0
      %v3687 = vadd.f32 %v3685, %v3686
      %v3688 = vsel %vm2199, %v1867, 0.0
      %v3689 = vadd.f32 %v3687, %v3688
      %v3690 = vsel %vm2199, %v1868, 0.0
      %v3691 = vadd.f32 %v3689, %v3690
      %v3692 = vsel %vm2199, %v1869, 0.0
      %v3693 = vadd.f32 %v3691, %v3692
      %v3694 = vsel %vm2199, %v1870, 0.0
      %v3695 = vadd.f32 %v3693, %v3694
      %v3696 = vsel %vm2199, %v1871, 0.0
      %v3697 = vadd.f32 %v3695, %v3696
      %v3698 = vsel %vm2199, %v1872, 0.0
      %v3699 = vadd.f32 %v3697, %v3698
      %v3700 = vsel %vm2199, %v1873, 0.0
      %v3701 = vadd.f32 %v3699, %v3700
      %v3702 = vsel %vm2199, %v1874, 0.0
      %v3703 = vadd.f32 %v3701, %v3702
      %v3704 = vsel %vm2199, %v1875, 0.0
      %v3705 = vadd.f32 %v3703, %v3704
      %v3706 = vsel %vm2199, %v1876, 0.0
      %v3707 = vadd.f32 %v3705, %v3706
      %v3708 = vsel %vm2199, %v1877, 0.0
      %v3709 = vadd.f32 %v3707, %v3708
      %v3710 = vsel %vm2199, %v1878, 0.0
      %v3711 = vadd.f32 %v3709, %v3710
      %v3712 = vrot.slane %v3711, 4
      %v3713 = vadd.f32 %v3711, %v3712
      %v3714 = vrot.slane %v3713, 2
      %v3715 = vadd.f32 %v3713, %v3714
      %v3716 = vrot.slane %v3715, 1
      %v3717 = vadd.f32 %v3715, %v3716
      %v3718 = vsel %vm2199, %v1879, 0.0
      %v3719 = vsel %vm2199, %v1880, 0.0
      %v3720 = vadd.f32 %v3718, %v3719
      %v3721 = vsel %vm2199, %v1881, 0.0
      %v3722 = vadd.f32 %v3720, %v3721
      %v3723 = vsel %vm2199, %v1882, 0.0
      %v3724 = vadd.f32 %v3722, %v3723
      %v3725 = vsel %vm2199, %v1883, 0.0
      %v3726 = vadd.f32 %v3724, %v3725
      %v3727 = vsel %vm2199, %v1884, 0.0
      %v3728 = vadd.f32 %v3726, %v3727
      %v3729 = vsel %vm2199, %v1885, 0.0
      %v3730 = vadd.f32 %v3728, %v3729
      %v3731 = vsel %vm2199, %v1886, 0.0
      %v3732 = vadd.f32 %v3730, %v3731
      %v3733 = vsel %vm2199, %v1887, 0.0
      %v3734 = vadd.f32 %v3732, %v3733
      %v3735 = vsel %vm2199, %v1888, 0.0
      %v3736 = vadd.f32 %v3734, %v3735
      %v3737 = vsel %vm2199, %v1889, 0.0
      %v3738 = vadd.f32 %v3736, %v3737
      %v3739 = vsel %vm2199, %v1890, 0.0
      %v3740 = vadd.f32 %v3738, %v3739
      %v3741 = vsel %vm2199, %v1891, 0.0
      %v3742 = vadd.f32 %v3740, %v3741
      %v3743 = vsel %vm2199, %v1892, 0.0
      %v3744 = vadd.f32 %v3742, %v3743
      %v3745 = vsel %vm2199, %v1893, 0.0
      %v3746 = vadd.f32 %v3744, %v3745
      %v3747 = vsel %vm2199, %v1894, 0.0
      %v3748 = vadd.f32 %v3746, %v3747
      %v3749 = vsel %vm2199, %v1895, 0.0
      %v3750 = vadd.f32 %v3748, %v3749
      %v3751 = vsel %vm2199, %v1896, 0.0
      %v3752 = vadd.f32 %v3750, %v3751
      %v3753 = vsel %vm2199, %v1897, 0.0
      %v3754 = vadd.f32 %v3752, %v3753
      %v3755 = vsel %vm2199, %v1898, 0.0
      %v3756 = vadd.f32 %v3754, %v3755
      %v3757 = vsel %vm2199, %v1899, 0.0
      %v3758 = vadd.f32 %v3756, %v3757
      %v3759 = vsel %vm2199, %v1900, 0.0
      %v3760 = vadd.f32 %v3758, %v3759
      %v3761 = vsel %vm2199, %v1901, 0.0
      %v3762 = vadd.f32 %v3760, %v3761
      %v3763 = vsel %vm2199, %v1902, 0.0
      %v3764 = vadd.f32 %v3762, %v3763
      %v3765 = vsel %vm2199, %v1903, 0.0
      %v3766 = vadd.f32 %v3764, %v3765
      %v3767 = vsel %vm2199, %v1904, 0.0
      %v3768 = vadd.f32 %v3766, %v3767
      %v3769 = vsel %vm2199, %v1905, 0.0
      %v3770 = vadd.f32 %v3768, %v3769
      %v3771 = vsel %vm2199, %v1906, 0.0
      %v3772 = vadd.f32 %v3770, %v3771
      %v3773 = vsel %vm2199, %v1907, 0.0
      %v3774 = vadd.f32 %v3772, %v3773
      %v3775 = vsel %vm2199, %v1908, 0.0
      %v3776 = vadd.f32 %v3774, %v3775
      %v3777 = vsel %vm2199, %v1909, 0.0
      %v3778 = vadd.f32 %v3776, %v3777
      %v3779 = vsel %vm2199, %v1910, 0.0
      %v3780 = vadd.f32 %v3778, %v3779
      %v3781 = vrot.slane %v3780, 4
      %v3782 = vadd.f32 %v3780, %v3781
      %v3783 = vrot.slane %v3782, 2
      %v3784 = vadd.f32 %v3782, %v3783
      %v3785 = vrot.slane %v3784, 1
      %v3786 = vadd.f32 %v3784, %v3785
      %v3787 = vsel %vm2199, %v1911, 0.0
      %v3788 = vsel %vm2199, %v1912, 0.0
      %v3789 = vadd.f32 %v3787, %v3788
      %v3790 = vsel %vm2199, %v1913, 0.0
      %v3791 = vadd.f32 %v3789, %v3790
      %v3792 = vsel %vm2199, %v1914, 0.0
      %v3793 = vadd.f32 %v3791, %v3792
      %v3794 = vsel %vm2199, %v1915, 0.0
      %v3795 = vadd.f32 %v3793, %v3794
      %v3796 = vsel %vm2199, %v1916, 0.0
      %v3797 = vadd.f32 %v3795, %v3796
      %v3798 = vsel %vm2199, %v1917, 0.0
      %v3799 = vadd.f32 %v3797, %v3798
      %v3800 = vsel %vm2199, %v1918, 0.0
      %v3801 = vadd.f32 %v3799, %v3800
      %v3802 = vsel %vm2199, %v1919, 0.0
      %v3803 = vadd.f32 %v3801, %v3802
      %v3804 = vsel %vm2199, %v1920, 0.0
      %v3805 = vadd.f32 %v3803, %v3804
      %v3806 = vsel %vm2199, %v1921, 0.0
      %v3807 = vadd.f32 %v3805, %v3806
      %v3808 = vsel %vm2199, %v1922, 0.0
      %v3809 = vadd.f32 %v3807, %v3808
      %v3810 = vsel %vm2199, %v1923, 0.0
      %v3811 = vadd.f32 %v3809, %v3810
      %v3812 = vsel %vm2199, %v1924, 0.0
      %v3813 = vadd.f32 %v3811, %v3812
      %v3814 = vsel %vm2199, %v1925, 0.0
      %v3815 = vadd.f32 %v3813, %v3814
      %v3816 = vsel %vm2199, %v1926, 0.0
      %v3817 = vadd.f32 %v3815, %v3816
      %v3818 = vsel %vm2199, %v1927, 0.0
      %v3819 = vadd.f32 %v3817, %v3818
      %v3820 = vsel %vm2199, %v1928, 0.0
      %v3821 = vadd.f32 %v3819, %v3820
      %v3822 = vsel %vm2199, %v1929, 0.0
      %v3823 = vadd.f32 %v3821, %v3822
      %v3824 = vsel %vm2199, %v1930, 0.0
      %v3825 = vadd.f32 %v3823, %v3824
      %v3826 = vsel %vm2199, %v1931, 0.0
      %v3827 = vadd.f32 %v3825, %v3826
      %v3828 = vsel %vm2199, %v1932, 0.0
      %v3829 = vadd.f32 %v3827, %v3828
      %v3830 = vsel %vm2199, %v1933, 0.0
      %v3831 = vadd.f32 %v3829, %v3830
      %v3832 = vsel %vm2199, %v1934, 0.0
      %v3833 = vadd.f32 %v3831, %v3832
      %v3834 = vsel %vm2199, %v1935, 0.0
      %v3835 = vadd.f32 %v3833, %v3834
      %v3836 = vsel %vm2199, %v1936, 0.0
      %v3837 = vadd.f32 %v3835, %v3836
      %v3838 = vsel %vm2199, %v1937, 0.0
      %v3839 = vadd.f32 %v3837, %v3838
      %v3840 = vsel %vm2199, %v1938, 0.0
      %v3841 = vadd.f32 %v3839, %v3840
      %v3842 = vsel %vm2199, %v1939, 0.0
      %v3843 = vadd.f32 %v3841, %v3842
      %v3844 = vsel %vm2199, %v1940, 0.0
      %v3845 = vadd.f32 %v3843, %v3844
      %v3846 = vsel %vm2199, %v1941, 0.0
      %v3847 = vadd.f32 %v3845, %v3846
      %v3848 = vsel %vm2199, %v1942, 0.0
      %v3849 = vadd.f32 %v3847, %v3848
      %v3850 = vrot.slane %v3849, 4
      %v3851 = vadd.f32 %v3849, %v3850
      %v3852 = vrot.slane %v3851, 2
      %v3853 = vadd.f32 %v3851, %v3852
      %v3854 = vrot.slane %v3853, 1
      %v3855 = vadd.f32 %v3853, %v3854
      %v3856 = vsel %vm2199, %v1943, 0.0
      %v3857 = vsel %vm2199, %v1944, 0.0
      %v3858 = vadd.f32 %v3856, %v3857
      %v3859 = vsel %vm2199, %v1945, 0.0
      %v3860 = vadd.f32 %v3858, %v3859
      %v3861 = vsel %vm2199, %v1946, 0.0
      %v3862 = vadd.f32 %v3860, %v3861
      %v3863 = vsel %vm2199, %v1947, 0.0
      %v3864 = vadd.f32 %v3862, %v3863
      %v3865 = vsel %vm2199, %v1948, 0.0
      %v3866 = vadd.f32 %v3864, %v3865
      %v3867 = vsel %vm2199, %v1949, 0.0
      %v3868 = vadd.f32 %v3866, %v3867
      %v3869 = vsel %vm2199, %v1950, 0.0
      %v3870 = vadd.f32 %v3868, %v3869
      %v3871 = vsel %vm2199, %v1951, 0.0
      %v3872 = vadd.f32 %v3870, %v3871
      %v3873 = vsel %vm2199, %v1952, 0.0
      %v3874 = vadd.f32 %v3872, %v3873
      %v3875 = vsel %vm2199, %v1953, 0.0
      %v3876 = vadd.f32 %v3874, %v3875
      %v3877 = vsel %vm2199, %v1954, 0.0
      %v3878 = vadd.f32 %v3876, %v3877
      %v3879 = vsel %vm2199, %v1955, 0.0
      %v3880 = vadd.f32 %v3878, %v3879
      %v3881 = vsel %vm2199, %v1956, 0.0
      %v3882 = vadd.f32 %v3880, %v3881
      %v3883 = vsel %vm2199, %v1957, 0.0
      %v3884 = vadd.f32 %v3882, %v3883
      %v3885 = vsel %vm2199, %v1958, 0.0
      %v3886 = vadd.f32 %v3884, %v3885
      %v3887 = vsel %vm2199, %v1959, 0.0
      %v3888 = vadd.f32 %v3886, %v3887
      %v3889 = vsel %vm2199, %v1960, 0.0
      %v3890 = vadd.f32 %v3888, %v3889
      %v3891 = vsel %vm2199, %v1961, 0.0
      %v3892 = vadd.f32 %v3890, %v3891
      %v3893 = vsel %vm2199, %v1962, 0.0
      %v3894 = vadd.f32 %v3892, %v3893
      %v3895 = vsel %vm2199, %v1963, 0.0
      %v3896 = vadd.f32 %v3894, %v3895
      %v3897 = vsel %vm2199, %v1964, 0.0
      %v3898 = vadd.f32 %v3896, %v3897
      %v3899 = vsel %vm2199, %v1965, 0.0
      %v3900 = vadd.f32 %v3898, %v3899
      %v3901 = vsel %vm2199, %v1966, 0.0
      %v3902 = vadd.f32 %v3900, %v3901
      %v3903 = vsel %vm2199, %v1967, 0.0
      %v3904 = vadd.f32 %v3902, %v3903
      %v3905 = vsel %vm2199, %v1968, 0.0
      %v3906 = vadd.f32 %v3904, %v3905
      %v3907 = vsel %vm2199, %v1969, 0.0
      %v3908 = vadd.f32 %v3906, %v3907
      %v3909 = vsel %vm2199, %v1970, 0.0
      %v3910 = vadd.f32 %v3908, %v3909
      %v3911 = vsel %vm2199, %v1971, 0.0
      %v3912 = vadd.f32 %v3910, %v3911
      %v3913 = vsel %vm2199, %v1972, 0.0
      %v3914 = vadd.f32 %v3912, %v3913
      %v3915 = vsel %vm2199, %v1973, 0.0
      %v3916 = vadd.f32 %v3914, %v3915
      %v3917 = vsel %vm2199, %v1974, 0.0
      %v3918 = vadd.f32 %v3916, %v3917
      %v3919 = vrot.slane %v3918, 4
      %v3920 = vadd.f32 %v3918, %v3919
      %v3921 = vrot.slane %v3920, 2
      %v3922 = vadd.f32 %v3920, %v3921
      %v3923 = vrot.slane %v3922, 1
      %v3924 = vadd.f32 %v3922, %v3923
      %v3925 = vsel %vm2199, %v1975, 0.0
      %v3926 = vsel %vm2199, %v1976, 0.0
      %v3927 = vadd.f32 %v3925, %v3926
      %v3928 = vsel %vm2199, %v1977, 0.0
      %v3929 = vadd.f32 %v3927, %v3928
      %v3930 = vsel %vm2199, %v1978, 0.0
      %v3931 = vadd.f32 %v3929, %v3930
      %v3932 = vsel %vm2199, %v1979, 0.0
      %v3933 = vadd.f32 %v3931, %v3932
      %v3934 = vsel %vm2199, %v1980, 0.0
      %v3935 = vadd.f32 %v3933, %v3934
      %v3936 = vsel %vm2199, %v1981, 0.0
      %v3937 = vadd.f32 %v3935, %v3936
      %v3938 = vsel %vm2199, %v1982, 0.0
      %v3939 = vadd.f32 %v3937, %v3938
      %v3940 = vsel %vm2199, %v1983, 0.0
      %v3941 = vadd.f32 %v3939, %v3940
      %v3942 = vsel %vm2199, %v1984, 0.0
      %v3943 = vadd.f32 %v3941, %v3942
      %v3944 = vsel %vm2199, %v1985, 0.0
      %v3945 = vadd.f32 %v3943, %v3944
      %v3946 = vsel %vm2199, %v1986, 0.0
      %v3947 = vadd.f32 %v3945, %v3946
      %v3948 = vsel %vm2199, %v1987, 0.0
      %v3949 = vadd.f32 %v3947, %v3948
      %v3950 = vsel %vm2199, %v1988, 0.0
      %v3951 = vadd.f32 %v3949, %v3950
      %v3952 = vsel %vm2199, %v1989, 0.0
      %v3953 = vadd.f32 %v3951, %v3952
      %v3954 = vsel %vm2199, %v1990, 0.0
      %v3955 = vadd.f32 %v3953, %v3954
      %v3956 = vsel %vm2199, %v1991, 0.0
      %v3957 = vadd.f32 %v3955, %v3956
      %v3958 = vsel %vm2199, %v1992, 0.0
      %v3959 = vadd.f32 %v3957, %v3958
      %v3960 = vsel %vm2199, %v1993, 0.0
      %v3961 = vadd.f32 %v3959, %v3960
      %v3962 = vsel %vm2199, %v1994, 0.0
      %v3963 = vadd.f32 %v3961, %v3962
      %v3964 = vsel %vm2199, %v1995, 0.0
      %v3965 = vadd.f32 %v3963, %v3964
      %v3966 = vsel %vm2199, %v1996, 0.0
      %v3967 = vadd.f32 %v3965, %v3966
      %v3968 = vsel %vm2199, %v1997, 0.0
      %v3969 = vadd.f32 %v3967, %v3968
      %v3970 = vsel %vm2199, %v1998, 0.0
      %v3971 = vadd.f32 %v3969, %v3970
      %v3972 = vsel %vm2199, %v1999, 0.0
      %v3973 = vadd.f32 %v3971, %v3972
      %v3974 = vsel %vm2199, %v2000, 0.0
      %v3975 = vadd.f32 %v3973, %v3974
      %v3976 = vsel %vm2199, %v2001, 0.0
      %v3977 = vadd.f32 %v3975, %v3976
      %v3978 = vsel %vm2199, %v2002, 0.0
      %v3979 = vadd.f32 %v3977, %v3978
      %v3980 = vsel %vm2199, %v2003, 0.0
      %v3981 = vadd.f32 %v3979, %v3980
      %v3982 = vsel %vm2199, %v2004, 0.0
      %v3983 = vadd.f32 %v3981, %v3982
      %v3984 = vsel %vm2199, %v2005, 0.0
      %v3985 = vadd.f32 %v3983, %v3984
      %v3986 = vsel %vm2199, %v2006, 0.0
      %v3987 = vadd.f32 %v3985, %v3986
      %v3988 = vrot.slane %v3987, 4
      %v3989 = vadd.f32 %v3987, %v3988
      %v3990 = vrot.slane %v3989, 2
      %v3991 = vadd.f32 %v3989, %v3990
      %v3992 = vrot.slane %v3991, 1
      %v3993 = vadd.f32 %v3991, %v3992
      %v3994 = vsel %vm2199, %v2007, 0.0
      %v3995 = vsel %vm2199, %v2008, 0.0
      %v3996 = vadd.f32 %v3994, %v3995
      %v3997 = vsel %vm2199, %v2009, 0.0
      %v3998 = vadd.f32 %v3996, %v3997
      %v3999 = vsel %vm2199, %v2010, 0.0
      %v4000 = vadd.f32 %v3998, %v3999
      %v4001 = vsel %vm2199, %v2011, 0.0
      %v4002 = vadd.f32 %v4000, %v4001
      %v4003 = vsel %vm2199, %v2012, 0.0
      %v4004 = vadd.f32 %v4002, %v4003
      %v4005 = vsel %vm2199, %v2013, 0.0
      %v4006 = vadd.f32 %v4004, %v4005
      %v4007 = vsel %vm2199, %v2014, 0.0
      %v4008 = vadd.f32 %v4006, %v4007
      %v4009 = vsel %vm2199, %v2015, 0.0
      %v4010 = vadd.f32 %v4008, %v4009
      %v4011 = vsel %vm2199, %v2016, 0.0
      %v4012 = vadd.f32 %v4010, %v4011
      %v4013 = vsel %vm2199, %v2017, 0.0
      %v4014 = vadd.f32 %v4012, %v4013
      %v4015 = vsel %vm2199, %v2018, 0.0
      %v4016 = vadd.f32 %v4014, %v4015
      %v4017 = vsel %vm2199, %v2019, 0.0
      %v4018 = vadd.f32 %v4016, %v4017
      %v4019 = vsel %vm2199, %v2020, 0.0
      %v4020 = vadd.f32 %v4018, %v4019
      %v4021 = vsel %vm2199, %v2021, 0.0
      %v4022 = vadd.f32 %v4020, %v4021
      %v4023 = vsel %vm2199, %v2022, 0.0
      %v4024 = vadd.f32 %v4022, %v4023
      %v4025 = vsel %vm2199, %v2023, 0.0
      %v4026 = vadd.f32 %v4024, %v4025
      %v4027 = vsel %vm2199, %v2024, 0.0
      %v4028 = vadd.f32 %v4026, %v4027
      %v4029 = vsel %vm2199, %v2025, 0.0
      %v4030 = vadd.f32 %v4028, %v4029
      %v4031 = vsel %vm2199, %v2026, 0.0
      %v4032 = vadd.f32 %v4030, %v4031
      %v4033 = vsel %vm2199, %v2027, 0.0
      %v4034 = vadd.f32 %v4032, %v4033
      %v4035 = vsel %vm2199, %v2028, 0.0
      %v4036 = vadd.f32 %v4034, %v4035
      %v4037 = vsel %vm2199, %v2029, 0.0
      %v4038 = vadd.f32 %v4036, %v4037
      %v4039 = vsel %vm2199, %v2030, 0.0
      %v4040 = vadd.f32 %v4038, %v4039
      %v4041 = vsel %vm2199, %v2031, 0.0
      %v4042 = vadd.f32 %v4040, %v4041
      %v4043 = vsel %vm2199, %v2032, 0.0
      %v4044 = vadd.f32 %v4042, %v4043
      %v4045 = vsel %vm2199, %v2033, 0.0
      %v4046 = vadd.f32 %v4044, %v4045
      %v4047 = vsel %vm2199, %v2034, 0.0
      %v4048 = vadd.f32 %v4046, %v4047
      %v4049 = vsel %vm2199, %v2035, 0.0
      %v4050 = vadd.f32 %v4048, %v4049
      %v4051 = vsel %vm2199, %v2036, 0.0
      %v4052 = vadd.f32 %v4050, %v4051
      %v4053 = vsel %vm2199, %v2037, 0.0
      %v4054 = vadd.f32 %v4052, %v4053
      %v4055 = vsel %vm2199, %v2038, 0.0
      %v4056 = vadd.f32 %v4054, %v4055
      %v4057 = vrot.slane %v4056, 4
      %v4058 = vadd.f32 %v4056, %v4057
      %v4059 = vrot.slane %v4058, 2
      %v4060 = vadd.f32 %v4058, %v4059
      %v4061 = vrot.slane %v4060, 1
      %v4062 = vadd.f32 %v4060, %v4061
      %v4063 = vsel %vm2199, %v2039, 0.0
      %v4064 = vsel %vm2199, %v2040, 0.0
      %v4065 = vadd.f32 %v4063, %v4064
      %v4066 = vsel %vm2199, %v2041, 0.0
      %v4067 = vadd.f32 %v4065, %v4066
      %v4068 = vsel %vm2199, %v2042, 0.0
      %v4069 = vadd.f32 %v4067, %v4068
      %v4070 = vsel %vm2199, %v2043, 0.0
      %v4071 = vadd.f32 %v4069, %v4070
      %v4072 = vsel %vm2199, %v2044, 0.0
      %v4073 = vadd.f32 %v4071, %v4072
      %v4074 = vsel %vm2199, %v2045, 0.0
      %v4075 = vadd.f32 %v4073, %v4074
      %v4076 = vsel %vm2199, %v2046, 0.0
      %v4077 = vadd.f32 %v4075, %v4076
      %v4078 = vsel %vm2199, %v2047, 0.0
      %v4079 = vadd.f32 %v4077, %v4078
      %v4080 = vsel %vm2199, %v2048, 0.0
      %v4081 = vadd.f32 %v4079, %v4080
      %v4082 = vsel %vm2199, %v2049, 0.0
      %v4083 = vadd.f32 %v4081, %v4082
      %v4084 = vsel %vm2199, %v2050, 0.0
      %v4085 = vadd.f32 %v4083, %v4084
      %v4086 = vsel %vm2199, %v2051, 0.0
      %v4087 = vadd.f32 %v4085, %v4086
      %v4088 = vsel %vm2199, %v2052, 0.0
      %v4089 = vadd.f32 %v4087, %v4088
      %v4090 = vsel %vm2199, %v2053, 0.0
      %v4091 = vadd.f32 %v4089, %v4090
      %v4092 = vsel %vm2199, %v2054, 0.0
      %v4093 = vadd.f32 %v4091, %v4092
      %v4094 = vsel %vm2199, %v2055, 0.0
      %v4095 = vadd.f32 %v4093, %v4094
      %v4096 = vsel %vm2199, %v2056, 0.0
      %v4097 = vadd.f32 %v4095, %v4096
      %v4098 = vsel %vm2199, %v2057, 0.0
      %v4099 = vadd.f32 %v4097, %v4098
      %v4100 = vsel %vm2199, %v2058, 0.0
      %v4101 = vadd.f32 %v4099, %v4100
      %v4102 = vsel %vm2199, %v2059, 0.0
      %v4103 = vadd.f32 %v4101, %v4102
      %v4104 = vsel %vm2199, %v2060, 0.0
      %v4105 = vadd.f32 %v4103, %v4104
      %v4106 = vsel %vm2199, %v2061, 0.0
      %v4107 = vadd.f32 %v4105, %v4106
      %v4108 = vsel %vm2199, %v2062, 0.0
      %v4109 = vadd.f32 %v4107, %v4108
      %v4110 = vsel %vm2199, %v2063, 0.0
      %v4111 = vadd.f32 %v4109, %v4110
      %v4112 = vsel %vm2199, %v2064, 0.0
      %v4113 = vadd.f32 %v4111, %v4112
      %v4114 = vsel %vm2199, %v2065, 0.0
      %v4115 = vadd.f32 %v4113, %v4114
      %v4116 = vsel %vm2199, %v2066, 0.0
      %v4117 = vadd.f32 %v4115, %v4116
      %v4118 = vsel %vm2199, %v2067, 0.0
      %v4119 = vadd.f32 %v4117, %v4118
      %v4120 = vsel %vm2199, %v2068, 0.0
      %v4121 = vadd.f32 %v4119, %v4120
      %v4122 = vsel %vm2199, %v2069, 0.0
      %v4123 = vadd.f32 %v4121, %v4122
      %v4124 = vsel %vm2199, %v2070, 0.0
      %v4125 = vadd.f32 %v4123, %v4124
      %v4126 = vrot.slane %v4125, 4
      %v4127 = vadd.f32 %v4125, %v4126
      %v4128 = vrot.slane %v4127, 2
      %v4129 = vadd.f32 %v4127, %v4128
      %v4130 = vrot.slane %v4129, 1
      %v4131 = vadd.f32 %v4129, %v4130
      %v4132 = vsel %vm2199, %v2071, 0.0
      %v4133 = vsel %vm2199, %v2072, 0.0
      %v4134 = vadd.f32 %v4132, %v4133
      %v4135 = vsel %vm2199, %v2073, 0.0
      %v4136 = vadd.f32 %v4134, %v4135
      %v4137 = vsel %vm2199, %v2074, 0.0
      %v4138 = vadd.f32 %v4136, %v4137
      %v4139 = vsel %vm2199, %v2075, 0.0
      %v4140 = vadd.f32 %v4138, %v4139
      %v4141 = vsel %vm2199, %v2076, 0.0
      %v4142 = vadd.f32 %v4140, %v4141
      %v4143 = vsel %vm2199, %v2077, 0.0
      %v4144 = vadd.f32 %v4142, %v4143
      %v4145 = vsel %vm2199, %v2078, 0.0
      %v4146 = vadd.f32 %v4144, %v4145
      %v4147 = vsel %vm2199, %v2079, 0.0
      %v4148 = vadd.f32 %v4146, %v4147
      %v4149 = vsel %vm2199, %v2080, 0.0
      %v4150 = vadd.f32 %v4148, %v4149
      %v4151 = vsel %vm2199, %v2081, 0.0
      %v4152 = vadd.f32 %v4150, %v4151
      %v4153 = vsel %vm2199, %v2082, 0.0
      %v4154 = vadd.f32 %v4152, %v4153
      %v4155 = vsel %vm2199, %v2083, 0.0
      %v4156 = vadd.f32 %v4154, %v4155
      %v4157 = vsel %vm2199, %v2084, 0.0
      %v4158 = vadd.f32 %v4156, %v4157
      %v4159 = vsel %vm2199, %v2085, 0.0
      %v4160 = vadd.f32 %v4158, %v4159
      %v4161 = vsel %vm2199, %v2086, 0.0
      %v4162 = vadd.f32 %v4160, %v4161
      %v4163 = vsel %vm2199, %v2087, 0.0
      %v4164 = vadd.f32 %v4162, %v4163
      %v4165 = vsel %vm2199, %v2088, 0.0
      %v4166 = vadd.f32 %v4164, %v4165
      %v4167 = vsel %vm2199, %v2089, 0.0
      %v4168 = vadd.f32 %v4166, %v4167
      %v4169 = vsel %vm2199, %v2090, 0.0
      %v4170 = vadd.f32 %v4168, %v4169
      %v4171 = vsel %vm2199, %v2091, 0.0
      %v4172 = vadd.f32 %v4170, %v4171
      %v4173 = vsel %vm2199, %v2092, 0.0
      %v4174 = vadd.f32 %v4172, %v4173
      %v4175 = vsel %vm2199, %v2093, 0.0
      %v4176 = vadd.f32 %v4174, %v4175
      %v4177 = vsel %vm2199, %v2094, 0.0
      %v4178 = vadd.f32 %v4176, %v4177
      %v4179 = vsel %vm2199, %v2095, 0.0
      %v4180 = vadd.f32 %v4178, %v4179
      %v4181 = vsel %vm2199, %v2096, 0.0
      %v4182 = vadd.f32 %v4180, %v4181
      %v4183 = vsel %vm2199, %v2097, 0.0
      %v4184 = vadd.f32 %v4182, %v4183
      %v4185 = vsel %vm2199, %v2098, 0.0
      %v4186 = vadd.f32 %v4184, %v4185
      %v4187 = vsel %vm2199, %v2099, 0.0
      %v4188 = vadd.f32 %v4186, %v4187
      %v4189 = vsel %vm2199, %v2100, 0.0
      %v4190 = vadd.f32 %v4188, %v4189
      %v4191 = vsel %vm2199, %v2101, 0.0
      %v4192 = vadd.f32 %v4190, %v4191
      %v4193 = vsel %vm2199, %v2102, 0.0
      %v4194 = vadd.f32 %v4192, %v4193
      %v4195 = vrot.slane %v4194, 4
      %v4196 = vadd.f32 %v4194, %v4195
      %v4197 = vrot.slane %v4196, 2
      %v4198 = vadd.f32 %v4196, %v4197
      %v4199 = vrot.slane %v4198, 1
      %v4200 = vadd.f32 %v4198, %v4199
      %v4201 = vsel %vm2199, %v2103, 0.0
      %v4202 = vsel %vm2199, %v2104, 0.0
      %v4203 = vadd.f32 %v4201, %v4202
      %v4204 = vsel %vm2199, %v2105, 0.0
      %v4205 = vadd.f32 %v4203, %v4204
      %v4206 = vsel %vm2199, %v2106, 0.0
      %v4207 = vadd.f32 %v4205, %v4206
      %v4208 = vsel %vm2199, %v2107, 0.0
      %v4209 = vadd.f32 %v4207, %v4208
      %v4210 = vsel %vm2199, %v2108, 0.0
      %v4211 = vadd.f32 %v4209, %v4210
      %v4212 = vsel %vm2199, %v2109, 0.0
      %v4213 = vadd.f32 %v4211, %v4212
      %v4214 = vsel %vm2199, %v2110, 0.0
      %v4215 = vadd.f32 %v4213, %v4214
      %v4216 = vsel %vm2199, %v2111, 0.0
      %v4217 = vadd.f32 %v4215, %v4216
      %v4218 = vsel %vm2199, %v2112, 0.0
      %v4219 = vadd.f32 %v4217, %v4218
      %v4220 = vsel %vm2199, %v2113, 0.0
      %v4221 = vadd.f32 %v4219, %v4220
      %v4222 = vsel %vm2199, %v2114, 0.0
      %v4223 = vadd.f32 %v4221, %v4222
      %v4224 = vsel %vm2199, %v2115, 0.0
      %v4225 = vadd.f32 %v4223, %v4224
      %v4226 = vsel %vm2199, %v2116, 0.0
      %v4227 = vadd.f32 %v4225, %v4226
      %v4228 = vsel %vm2199, %v2117, 0.0
      %v4229 = vadd.f32 %v4227, %v4228
      %v4230 = vsel %vm2199, %v2118, 0.0
      %v4231 = vadd.f32 %v4229, %v4230
      %v4232 = vsel %vm2199, %v2119, 0.0
      %v4233 = vadd.f32 %v4231, %v4232
      %v4234 = vsel %vm2199, %v2120, 0.0
      %v4235 = vadd.f32 %v4233, %v4234
      %v4236 = vsel %vm2199, %v2121, 0.0
      %v4237 = vadd.f32 %v4235, %v4236
      %v4238 = vsel %vm2199, %v2122, 0.0
      %v4239 = vadd.f32 %v4237, %v4238
      %v4240 = vsel %vm2199, %v2123, 0.0
      %v4241 = vadd.f32 %v4239, %v4240
      %v4242 = vsel %vm2199, %v2124, 0.0
      %v4243 = vadd.f32 %v4241, %v4242
      %v4244 = vsel %vm2199, %v2125, 0.0
      %v4245 = vadd.f32 %v4243, %v4244
      %v4246 = vsel %vm2199, %v2126, 0.0
      %v4247 = vadd.f32 %v4245, %v4246
      %v4248 = vsel %vm2199, %v2127, 0.0
      %v4249 = vadd.f32 %v4247, %v4248
      %v4250 = vsel %vm2199, %v2128, 0.0
      %v4251 = vadd.f32 %v4249, %v4250
      %v4252 = vsel %vm2199, %v2129, 0.0
      %v4253 = vadd.f32 %v4251, %v4252
      %v4254 = vsel %vm2199, %v2130, 0.0
      %v4255 = vadd.f32 %v4253, %v4254
      %v4256 = vsel %vm2199, %v2131, 0.0
      %v4257 = vadd.f32 %v4255, %v4256
      %v4258 = vsel %vm2199, %v2132, 0.0
      %v4259 = vadd.f32 %v4257, %v4258
      %v4260 = vsel %vm2199, %v2133, 0.0
      %v4261 = vadd.f32 %v4259, %v4260
      %v4262 = vsel %vm2199, %v2134, 0.0
      %v4263 = vadd.f32 %v4261, %v4262
      %v4264 = vrot.slane %v4263, 4
      %v4265 = vadd.f32 %v4263, %v4264
      %v4266 = vrot.slane %v4265, 2
      %v4267 = vadd.f32 %v4265, %v4266
      %v4268 = vrot.slane %v4267, 1
      %v4269 = vadd.f32 %v4267, %v4268
      %v4270 = vsel %vm2199, %v2135, 0.0
      %v4271 = vsel %vm2199, %v2136, 0.0
      %v4272 = vadd.f32 %v4270, %v4271
      %v4273 = vsel %vm2199, %v2137, 0.0
      %v4274 = vadd.f32 %v4272, %v4273
      %v4275 = vsel %vm2199, %v2138, 0.0
      %v4276 = vadd.f32 %v4274, %v4275
      %v4277 = vsel %vm2199, %v2139, 0.0
      %v4278 = vadd.f32 %v4276, %v4277
      %v4279 = vsel %vm2199, %v2140, 0.0
      %v4280 = vadd.f32 %v4278, %v4279
      %v4281 = vsel %vm2199, %v2141, 0.0
      %v4282 = vadd.f32 %v4280, %v4281
      %v4283 = vsel %vm2199, %v2142, 0.0
      %v4284 = vadd.f32 %v4282, %v4283
      %v4285 = vsel %vm2199, %v2143, 0.0
      %v4286 = vadd.f32 %v4284, %v4285
      %v4287 = vsel %vm2199, %v2144, 0.0
      %v4288 = vadd.f32 %v4286, %v4287
      %v4289 = vsel %vm2199, %v2145, 0.0
      %v4290 = vadd.f32 %v4288, %v4289
      %v4291 = vsel %vm2199, %v2146, 0.0
      %v4292 = vadd.f32 %v4290, %v4291
      %v4293 = vsel %vm2199, %v2147, 0.0
      %v4294 = vadd.f32 %v4292, %v4293
      %v4295 = vsel %vm2199, %v2148, 0.0
      %v4296 = vadd.f32 %v4294, %v4295
      %v4297 = vsel %vm2199, %v2149, 0.0
      %v4298 = vadd.f32 %v4296, %v4297
      %v4299 = vsel %vm2199, %v2150, 0.0
      %v4300 = vadd.f32 %v4298, %v4299
      %v4301 = vsel %vm2199, %v2151, 0.0
      %v4302 = vadd.f32 %v4300, %v4301
      %v4303 = vsel %vm2199, %v2152, 0.0
      %v4304 = vadd.f32 %v4302, %v4303
      %v4305 = vsel %vm2199, %v2153, 0.0
      %v4306 = vadd.f32 %v4304, %v4305
      %v4307 = vsel %vm2199, %v2154, 0.0
      %v4308 = vadd.f32 %v4306, %v4307
      %v4309 = vsel %vm2199, %v2155, 0.0
      %v4310 = vadd.f32 %v4308, %v4309
      %v4311 = vsel %vm2199, %v2156, 0.0
      %v4312 = vadd.f32 %v4310, %v4311
      %v4313 = vsel %vm2199, %v2157, 0.0
      %v4314 = vadd.f32 %v4312, %v4313
      %v4315 = vsel %vm2199, %v2158, 0.0
      %v4316 = vadd.f32 %v4314, %v4315
      %v4317 = vsel %vm2199, %v2159, 0.0
      %v4318 = vadd.f32 %v4316, %v4317
      %v4319 = vsel %vm2199, %v2160, 0.0
      %v4320 = vadd.f32 %v4318, %v4319
      %v4321 = vsel %vm2199, %v2161, 0.0
      %v4322 = vadd.f32 %v4320, %v4321
      %v4323 = vsel %vm2199, %v2162, 0.0
      %v4324 = vadd.f32 %v4322, %v4323
      %v4325 = vsel %vm2199, %v2163, 0.0
      %v4326 = vadd.f32 %v4324, %v4325
      %v4327 = vsel %vm2199, %v2164, 0.0
      %v4328 = vadd.f32 %v4326, %v4327
      %v4329 = vsel %vm2199, %v2165, 0.0
      %v4330 = vadd.f32 %v4328, %v4329
      %v4331 = vsel %vm2199, %v2166, 0.0
      %v4332 = vadd.f32 %v4330, %v4331
      %v4333 = vrot.slane %v4332, 4
      %v4334 = vadd.f32 %v4332, %v4333
      %v4335 = vrot.slane %v4334, 2
      %v4336 = vadd.f32 %v4334, %v4335
      %v4337 = vrot.slane %v4336, 1
      %v4338 = vadd.f32 %v4336, %v4337
      %v4339 = vsel %vm2199, %v2167, 0.0
      %v4340 = vsel %vm2199, %v2168, 0.0
      %v4341 = vadd.f32 %v4339, %v4340
      %v4342 = vsel %vm2199, %v2169, 0.0
      %v4343 = vadd.f32 %v4341, %v4342
      %v4344 = vsel %vm2199, %v2170, 0.0
      %v4345 = vadd.f32 %v4343, %v4344
      %v4346 = vsel %vm2199, %v2171, 0.0
      %v4347 = vadd.f32 %v4345, %v4346
      %v4348 = vsel %vm2199, %v2172, 0.0
      %v4349 = vadd.f32 %v4347, %v4348
      %v4350 = vsel %vm2199, %v2173, 0.0
      %v4351 = vadd.f32 %v4349, %v4350
      %v4352 = vsel %vm2199, %v2174, 0.0
      %v4353 = vadd.f32 %v4351, %v4352
      %v4354 = vsel %vm2199, %v2175, 0.0
      %v4355 = vadd.f32 %v4353, %v4354
      %v4356 = vsel %vm2199, %v2176, 0.0
      %v4357 = vadd.f32 %v4355, %v4356
      %v4358 = vsel %vm2199, %v2177, 0.0
      %v4359 = vadd.f32 %v4357, %v4358
      %v4360 = vsel %vm2199, %v2178, 0.0
      %v4361 = vadd.f32 %v4359, %v4360
      %v4362 = vsel %vm2199, %v2179, 0.0
      %v4363 = vadd.f32 %v4361, %v4362
      %v4364 = vsel %vm2199, %v2180, 0.0
      %v4365 = vadd.f32 %v4363, %v4364
      %v4366 = vsel %vm2199, %v2181, 0.0
      %v4367 = vadd.f32 %v4365, %v4366
      %v4368 = vsel %vm2199, %v2182, 0.0
      %v4369 = vadd.f32 %v4367, %v4368
      %v4370 = vsel %vm2199, %v2183, 0.0
      %v4371 = vadd.f32 %v4369, %v4370
      %v4372 = vsel %vm2199, %v2184, 0.0
      %v4373 = vadd.f32 %v4371, %v4372
      %v4374 = vsel %vm2199, %v2185, 0.0
      %v4375 = vadd.f32 %v4373, %v4374
      %v4376 = vsel %vm2199, %v2186, 0.0
      %v4377 = vadd.f32 %v4375, %v4376
      %v4378 = vsel %vm2199, %v2187, 0.0
      %v4379 = vadd.f32 %v4377, %v4378
      %v4380 = vsel %vm2199, %v2188, 0.0
      %v4381 = vadd.f32 %v4379, %v4380
      %v4382 = vsel %vm2199, %v2189, 0.0
      %v4383 = vadd.f32 %v4381, %v4382
      %v4384 = vsel %vm2199, %v2190, 0.0
      %v4385 = vadd.f32 %v4383, %v4384
      %v4386 = vsel %vm2199, %v2191, 0.0
      %v4387 = vadd.f32 %v4385, %v4386
      %v4388 = vsel %vm2199, %v2192, 0.0
      %v4389 = vadd.f32 %v4387, %v4388
      %v4390 = vsel %vm2199, %v2193, 0.0
      %v4391 = vadd.f32 %v4389, %v4390
      %v4392 = vsel %vm2199, %v2194, 0.0
      %v4393 = vadd.f32 %v4391, %v4392
      %v4394 = vsel %vm2199, %v2195, 0.0
      %v4395 = vadd.f32 %v4393, %v4394
      %v4396 = vsel %vm2199, %v2196, 0.0
      %v4397 = vadd.f32 %v4395, %v4396
      %v4398 = vsel %vm2199, %v2197, 0.0
      %v4399 = vadd.f32 %v4397, %v4398
      %v4400 = vsel %vm2199, %v2198, 0.0
      %v4401 = vadd.f32 %v4399, %v4400
      %v4402 = vrot.slane %v4401, 4
      %v4403 = vadd.f32 %v4401, %v4402
      %v4404 = vrot.slane %v4403, 2
      %v4405 = vadd.f32 %v4403, %v4404
      %v4406 = vrot.slane %v4405, 1
      %v4407 = vadd.f32 %v4405, %v4406
      %v4408 = vmul.f32 %v2268, 0.00390625
      %v4409 = vmul.f32 %v2337, 0.00390625
      %v4410 = vmul.f32 %v2406, 0.00390625
      %v4411 = vmul.f32 %v2475, 0.00390625
      %v4412 = vmul.f32 %v2544, 0.00390625
      %v4413 = vmul.f32 %v2613, 0.00390625
      %v4414 = vmul.f32 %v2682, 0.00390625
      %v4415 = vmul.f32 %v2751, 0.00390625
      %v4416 = vmul.f32 %v2820, 0.00390625
      %v4417 = vmul.f32 %v2889, 0.00390625
      %v4418 = vmul.f32 %v2958, 0.00390625
      %v4419 = vmul.f32 %v3027, 0.00390625
      %v4420 = vmul.f32 %v3096, 0.00390625
      %v4421 = vmul.f32 %v3165, 0.00390625
      %v4422 = vmul.f32 %v3234, 0.00390625
      %v4423 = vmul.f32 %v3303, 0.00390625
      %v4424 = vmul.f32 %v3372, 0.00390625
      %v4425 = vmul.f32 %v3441, 0.00390625
      %v4426 = vmul.f32 %v3510, 0.00390625
      %v4427 = vmul.f32 %v3579, 0.00390625
      %v4428 = vmul.f32 %v3648, 0.00390625
      %v4429 = vmul.f32 %v3717, 0.00390625
      %v4430 = vmul.f32 %v3786, 0.00390625
      %v4431 = vmul.f32 %v3855, 0.00390625
      %v4432 = vmul.f32 %v3924, 0.00390625
      %v4433 = vmul.f32 %v3993, 0.00390625
      %v4434 = vmul.f32 %v4062, 0.00390625
      %v4435 = vmul.f32 %v4131, 0.00390625
      %v4436 = vmul.f32 %v4200, 0.00390625
      %v4437 = vmul.f32 %v4269, 0.00390625
      %v4438 = vmul.f32 %v4338, 0.00390625
      %v4439 = vmul.f32 %v4407, 0.00390625
      %v4440 = vpack.c.bf16 %v4408, %v4408
      %v4441 = vpack.c.bf16 %v4409, %v4409
      %v4442 = vpack.c.bf16 %v4410, %v4410
      %v4443 = vpack.c.bf16 %v4411, %v4411
      %v4444 = vpack.c.bf16 %v4412, %v4412
      %v4445 = vpack.c.bf16 %v4413, %v4413
      %v4446 = vpack.c.bf16 %v4414, %v4414
      %v4447 = vpack.c.bf16 %v4415, %v4415
      %v4448 = vpack.c.bf16 %v4416, %v4416
      %v4449 = vpack.c.bf16 %v4417, %v4417
      %v4450 = vpack.c.bf16 %v4418, %v4418
      %v4451 = vpack.c.bf16 %v4419, %v4419
      %v4452 = vpack.c.bf16 %v4420, %v4420
      %v4453 = vpack.c.bf16 %v4421, %v4421
      %v4454 = vpack.c.bf16 %v4422, %v4422
      %v4455 = vpack.c.bf16 %v4423, %v4423
      %v4456 = vpack.c.bf16 %v4424, %v4424
      %v4457 = vpack.c.bf16 %v4425, %v4425
      %v4458 = vpack.c.bf16 %v4426, %v4426
      %v4459 = vpack.c.bf16 %v4427, %v4427
      %v4460 = vpack.c.bf16 %v4428, %v4428
      %v4461 = vpack.c.bf16 %v4429, %v4429
      %v4462 = vpack.c.bf16 %v4430, %v4430
      %v4463 = vpack.c.bf16 %v4431, %v4431
      %v4464 = vpack.c.bf16 %v4432, %v4432
      %v4465 = vpack.c.bf16 %v4433, %v4433
      %v4466 = vpack.c.bf16 %v4434, %v4434
      %v4467 = vpack.c.bf16 %v4435, %v4435
      %v4468 = vpack.c.bf16 %v4436, %v4436
      %v4469 = vpack.c.bf16 %v4437, %v4437
      %v4470 = vpack.c.bf16 %v4438, %v4438
      %v4471 = vpack.c.bf16 %v4439, %v4439
      %v4472 = vld [vmem:[%s1] sm:$0x3]
      %v4505 = vunpack.c.l.b16 %v4440
      %v4506 = vunpack.c.l.b16 %v4441
      %v4507 = vunpack.c.l.b16 %v4442
      %v4508 = vunpack.c.l.b16 %v4443
      %v4509 = vunpack.c.l.b16 %v4444
      %v4510 = vunpack.c.l.b16 %v4445
      %v4511 = vunpack.c.l.b16 %v4446
      %v4512 = vunpack.c.l.b16 %v4447
      %v4513 = vunpack.c.l.b16 %v4448
      %v4514 = vunpack.c.l.b16 %v4449
      %v4515 = vunpack.c.l.b16 %v4450
      %v4516 = vunpack.c.l.b16 %v4451
      %v4517 = vunpack.c.l.b16 %v4452
      %v4518 = vunpack.c.l.b16 %v4453
      %v4519 = vunpack.c.l.b16 %v4454
      %v4520 = vunpack.c.l.b16 %v4455
      %v4521 = vunpack.c.l.b16 %v4456
      %v4522 = vunpack.c.l.b16 %v4457
      %v4523 = vunpack.c.l.b16 %v4458
      %v4524 = vunpack.c.l.b16 %v4459
      %v4525 = vunpack.c.l.b16 %v4460
      %v4526 = vunpack.c.l.b16 %v4461
      %v4527 = vunpack.c.l.b16 %v4462
      %v4528 = vunpack.c.l.b16 %v4463
      %v4529 = vunpack.c.l.b16 %v4464
      %v4530 = vunpack.c.l.b16 %v4465
      %v4531 = vunpack.c.l.b16 %v4466
      %v4532 = vunpack.c.l.b16 %v4467
      %v4533 = vunpack.c.l.b16 %v4468
      %v4534 = vunpack.c.l.b16 %v4469
      %v4535 = vunpack.c.l.b16 %v4470
      %v4536 = vunpack.c.l.b16 %v4471
      %vm4537 = vcmask 1041409
      %v4538 = vsel %vm4537, %v4506, %v4505
      %vm4539 = vcmask 1042434
      %v4540 = vsel %vm4539, %v4507, %v4538
      %vm4541 = vcmask 1043459
      %v4542 = vsel %vm4541, %v4508, %v4540
      %vm4543 = vcmask 1044484
      %v4544 = vsel %vm4543, %v4509, %v4542
      %vm4545 = vcmask 1045509
      %v4546 = vsel %vm4545, %v4510, %v4544
      %vm4547 = vcmask 1046534
      %v4548 = vsel %vm4547, %v4511, %v4546
      %vm4549 = vcmask 1047559
      %v4550 = vsel %vm4549, %v4512, %v4548
      %v4551 = vsel %vm4537, %v4514, %v4513
      %v4552 = vsel %vm4539, %v4515, %v4551
      %v4553 = vsel %vm4541, %v4516, %v4552
      %v4554 = vsel %vm4543, %v4517, %v4553
      %v4555 = vsel %vm4545, %v4518, %v4554
      %v4556 = vsel %vm4547, %v4519, %v4555
      %v4557 = vsel %vm4549, %v4520, %v4556
      %v4558 = vsel %vm4537, %v4522, %v4521
      %v4559 = vsel %vm4539, %v4523, %v4558
      %v4560 = vsel %vm4541, %v4524, %v4559
      %v4561 = vsel %vm4543, %v4525, %v4560
      %v4562 = vsel %vm4545, %v4526, %v4561
      %v4563 = vsel %vm4547, %v4527, %v4562
      %v4564 = vsel %vm4549, %v4528, %v4563
      %v4565 = vsel %vm4537, %v4530, %v4529
      %v4566 = vsel %vm4539, %v4531, %v4565
      %v4567 = vsel %vm4541, %v4532, %v4566
      %v4568 = vsel %vm4543, %v4533, %v4567
      %v4569 = vsel %vm4545, %v4534, %v4568
      %v4570 = vsel %vm4547, %v4535, %v4569
      %v4571 = vsel %vm4549, %v4536, %v4570
      %v4572 = vpack.c.b16 %v4557, %v4550
      %v4573 = vpack.c.b16 %v4571, %v4564
      %v4575 = vsel %vm2199, %v4572, 0
      %v4578 = vsel %vm2199, %v4573, 0
      %vm4580 = vcmask 1041408
      %v4582 = vsel %vm4580, %v4472, 0
      %4584 = vmatprep.subr.bf16.mxu0 0
      %4585 = vmatpush1.bf16.msra.mxu0 %v4582
      %4586 = vmatprep.subr.bf16.mxu0 0
      %4587 = vmatpush1.bf16.msra.mxu0 0
      %4588 = vmatprep.subr.bf16.mxu0 0
      %4589 = vmatpush1.bf16.msra.mxu0 0
      %4590 = vmatprep.subr.bf16.mxu0 0
      %4591 = vmatpush1.bf16.msra.mxu0 0
      %4592 = vmatprep.subr.bf16.mxu0 0
      %4593 = vmatpush1.bf16.msra.mxu0 0
      %4594 = vmatprep.subr.bf16.mxu0 0
      %4595 = vmatpush1.bf16.msra.mxu0 0
      %4596 = vmatprep.subr.bf16.mxu0 0
      %4597 = vmatpush1.bf16.msra.mxu0 0
      %4598 = vmatprep.subr.bf16.mxu0 0
      %4599 = vmatpush1.bf16.msra.mxu0 0
      %4600 = vmatprep.subr.bf16.mxu0 0
      %4601 = vmatpush1.bf16.msra.mxu0 0
      %4602 = vmatprep.subr.bf16.mxu0 0
      %4603 = vmatpush1.bf16.msra.mxu0 0
      %4604 = vmatprep.subr.bf16.mxu0 0
      %4605 = vmatpush1.bf16.msra.mxu0 0
      %4606 = vmatprep.subr.bf16.mxu0 0
      %4607 = vmatpush1.bf16.msra.mxu0 0
      %4608 = vmatprep.subr.bf16.mxu0 0
      %4609 = vmatpush1.bf16.msra.mxu0 0
      %4610 = vmatprep.subr.bf16.mxu0 0
      %4611 = vmatpush1.bf16.msra.mxu0 0
      %4612 = vmatprep.subr.bf16.mxu0 0
      %4613 = vmatpush1.bf16.msra.mxu0 0
      %4614 = vmatprep.subr.bf16.mxu0 0
      %4615 = vmatpush1.bf16.msra.mxu0 0
      %4616 = vmatprep.mubr.bf16.mxu0 0
      %4617 = vmatmul.mubr.bf16.gmra.mrb[0].mxu0 %v4575
      %v4618 = vpop.f32.mrb[0].mxu0
      %v4619 = vadd.f32 0.0, %v4618
      %v4620 = vpop.f32.mrb[0].mxu0
      %v4621 = vpop.f32.mrb[0].mxu0
      %v4622 = vadd.f32 0.0, %v4621
      %v4623 = vpop.f32.mrb[0].mxu0
      %4624 = vmatprep.mubr.bf16.mxu0 0
      %4625 = vmatmul.mubr.bf16.gmra.mrb[0].mxu0 %v4578
      %v4626 = vpop.f32.mrb[0].mxu0
      %v4627 = vadd.f32 0.0, %v4626
      %v4628 = vpop.f32.mrb[0].mxu0
      %v4629 = vpop.f32.mrb[0].mxu0
      %v4630 = vadd.f32 0.0, %v4629
      %v4631 = vpop.f32.mrb[0].mxu0
      %4632 = vdwg.mxu0
      %v4633 = vmax.f32 %v4619, 0.0
      %v4634 = vmax.f32 %v4622, 0.0
      %v4635 = vmax.f32 %v4627, 0.0
      %v4636 = vmax.f32 %v4630, 0.0
      %4637 = vst [vmem:[%s148] sm:$0xff] %v4633
      %4638 = vst [vmem:[%s148 + $0x8] sm:$0xff] %v4634
      %4639 = vst [vmem:[%s148 + $0x10] sm:$0xff] %v4635
      %4640 = vst [vmem:[%s148 + $0x18] sm:$0xff] %v4636
      %s4641 = smul.u32 4, %s13
      %p4642 = scmp.lt.s32.totalorder %s4641, 15
      %s4643 = scalar_select %p4642, %s4641, 15
      %s4644 = smul.addr %s4643, 8
      %s4645 = scalar_lea.vmem %s2, %s4644
      // Predicated region
      $region29: #{direct_clr_forward.2} parent=27 // pred_check
        %p4646 = pneg %p78
      $region30: #{direct_clr_forward.2} parent=27 // pred_check_branch
        %4648 = sbr.rel (%p4646) target = $region32
      $region31: #{direct_clr_forward.2} parent=27 // pred_region
        %s4649 = smul.u32 4, %s13
      $region32: #{direct_clr_forward.2} parent=27 // pred_fallthru
        _
    $region28: #{direct_clr_forward.2} parent=5 // pred_fallthru
      _
    %p4650 = scmp.le.s32.totalorder 2, %s8
    // Predicated region
    $region33: #{direct_clr_forward.2} parent=5 // pred_check
      %p4651 = pneg %p4650
    $region34: #{direct_clr_forward.2} parent=5 // pred_check_branch
      %4653 = sbr.rel (%p4651) target = $region36
    $region35: #{direct_clr_forward.2} parent=5 // pred_region
      %s4654 = ssub.s32 %s8, 2
      // Predicated region
      $region37: #{direct_clr_forward.2} parent=35 // pred_check
        %p4655 = pneg %p84
      $region38: #{direct_clr_forward.2} parent=35 // pred_check_branch
        %4657 = sbr.rel (%p4655) target = $region40
      $region39: #{direct_clr_forward.2} parent=35 // pred_region
        %s4658 = smul.u32 4, %s14
        %p4659 = scmp.lt.s32.totalorder %s4658, 15
        %s4660 = scalar_select %p4659, %s4658, 15
        %s4661 = smul.addr %s4660, 8
        %s4662 = scalar_lea.vmem %s2, %s4661
      $region40: #{direct_clr_forward.2} parent=35 // pred_fallthru
        _
    $region36: #{direct_clr_forward.2} parent=5 // pred_fallthru
      _
  $region6: #{direct_clr_forward.2} parent=0 // loop_footer
    %s12 = sadd.s32 1, %s8
  $region7: #{direct_clr_forward.2} parent=0 // loop_footer_branch
    %7 = sbr.rel target = $region3
  $region8: #{direct_clr_forward.2} parent=0 // loop_exit
    _

</llo_original>
